<compile_context>
chip_gen: v7x
topology: tpu7x:2x2x1
jax: 0.10.0
libtpu: 0.0.40
codegen_flags: <defaults>
</compile_context>

<pallas_src>
import math

import jax
import jax.numpy as jnp
from jax.experimental import pallas as pl
from jax.experimental.pallas import tpu as pltpu

# ----------------------------- scaled-down config -----------------------------
B = 2                 # batch
L = 16                # seq_len (time)
M = 4                 # feat_dim (channels)
WAVE_LEN = 2          # wave_length -> patch size in time
P = L // WAVE_LEN     # patch_num = 8
WM = WAVE_LEN * M     # flattened patch width = 8
DV = 16               # VQ-VAE hidden dim
K_CODE = 64           # codebook size per dataset
K_PAD = 128           # codebook padded to a full 128-lane slab
N_DATASETS = 3
N_EMBD_NUM = [K_CODE] * N_DATASETS
N_EMBED = sum(N_EMBD_NUM) + 1      # +1 mask token (unused in this path)
D_MODEL = 32          # BERT hidden size
N_HEADS = 4
D_HEAD = D_MODEL // N_HEADS
D_FF = 64
N_LAYERS = 2
NUM_CLASSES = 6
DATAID = 2            # 'har-data'

_LN_EPS_BERT = 1e-12
_LN_EPS_HEAD = 1e-5   # nn.LayerNorm default in the classification head

# ----------------------------- const (f32) slab layout: (C_ROWS, 128) ----------
R_BPATCH = 0                          # 1 row,  cols 0:DV
R_ESQ = 1                             # 1 row,  cols 0:K_PAD  (|e|^2, padded codes = 1e30)
R_EMBLN = 2                           # 2 rows, cols 0:D      (gamma, beta)
R_PE = 8                              # P rows, cols 0:D      (pos + type embedding)
R_HEADG = R_PE + P                    # P rows, cols 0:D      (head LN gamma, reshaped (P, D))
R_HEADB = R_HEADG + P                 # P rows, cols 0:D
R_HBIAS = R_HEADB + P                 # 1 row,  cols 0:C
R_LAYER = 40                          # 8 rows per layer:
#   +0 b_qkv (0:3D)   +1 bo (0:D)   +2 ln1_g  +3 ln1_b  +4 ln2_g  +5 ln2_b  +6 b1 (0:D_FF)  +7 b2
R_MSK = R_LAYER + 8 * N_LAYERS        # P rows,   cols 0:P*C  (block-diag selector mask)
R_SELR = R_MSK + P                    # P*C rows, cols 0:C    (block-sum selector)
R_WPATCH = R_SELR + P * NUM_CLASSES   # WM rows,  cols 0:DV   (VQ patch projection)
R_CBT = R_WPATCH + WM                 # DV rows,  cols 0:K_PAD (codebook^T)
C_ROWS = R_CBT + DV                   # 136 rows total (multiple of 8)

# ----------------------------- weight (bf16) slab layout: (W_ROWS, 128) --------
RW_EMB = 0                            # K_PAD rows, cols 0:D  (dataset slice of emb table)
RW_QKV = RW_EMB + K_PAD               # D rows / layer, cols 0:3D (fused [Wq*scale | Wk | Wv])
RW_WO = RW_QKV + D_MODEL * N_LAYERS   # D rows / layer, cols 0:D
RW_W1 = RW_WO + D_MODEL * N_LAYERS    # D rows / layer, cols 0:D_FF
RW_W2 = RW_W1 + D_MODEL * N_LAYERS    # D_FF rows / layer, cols 0:D
RW_WCAT = RW_W2 + D_FF * N_LAYERS     # D rows, cols 0:P*C (head Linear, re-laid out)
W_ROWS = RW_WCAT + D_MODEL            # 480 rows total (multiple of 16, bf16 tile aligned)


# ----------------------------- kernel helpers (traced inside the kernel) ------
def _layernorm(x, gamma, beta, eps):
    mu = jnp.mean(x, axis=-1, keepdims=True)
    var = jnp.mean((x - mu) ** 2, axis=-1, keepdims=True)
    return (x - mu) * jax.lax.rsqrt(var + eps) * gamma + beta


def _gelu(x):
    # TODO(synk): exact erf GELU (PyTorch nn.GELU default) approximated with tanh GELU.
    return jax.nn.gelu(x, approximate=True)


def _dot(a, b):
    # bf16 MXU operands, f32 accumulation; elementwise math stays f32.
    return jnp.dot(a.astype(jnp.bfloat16), b.astype(jnp.bfloat16),
                   preferred_element_type=jnp.float32)


def _bdot(eq, a, b):
    # batched (per-head) contraction on the MXU, bf16 operands, f32 accumulation.
    return jnp.einsum(eq, a.astype(jnp.bfloat16), b.astype(jnp.bfloat16),
                      preferred_element_type=jnp.float32)


# ----------------------------- single fused kernel (one batch element / block) --
def _bert4ts_kernel(patches_ref, c_ref, w_ref, out_ref):
    d, dff, dh, h = D_MODEL, D_FF, D_HEAD, N_HEADS

    # ---- VQ-VAE tokenizer: patch projection + nearest-codebook one-hot ------
    patches = patches_ref[...]                                               # (P, WM) f32
    w_patch = c_ref[R_WPATCH:R_WPATCH + WM, 0:DV]                            # (WM, DV)
    z = jnp.dot(patches, w_patch, preferred_element_type=jnp.float32) \
        + c_ref[R_BPATCH:R_BPATCH + 1, 0:DV]                                 # (P, DV)
    cbT = c_ref[R_CBT:R_CBT + DV, :]                                         # (DV, K_PAD)
    # squared distance up to the per-row |z|^2 constant (argmin-invariant)
    dist = c_ref[R_ESQ:R_ESQ + 1, :] - 2.0 * jnp.dot(
        z, cbT, preferred_element_type=jnp.float32)                          # (P, K_PAD)
    min_d = jnp.min(dist, axis=-1, keepdims=True)
    lane = jax.lax.broadcasted_iota(jnp.int32, dist.shape, 1)
    code = jnp.min(jnp.where(dist <= min_d, lane, K_PAD), axis=-1, keepdims=True)
    onehot = (lane == code).astype(jnp.bfloat16)                             # (P, K_PAD)

    # ---- embedding lookup (one-hot matmul) + BERT embeddings ---------------
    emb = w_ref[RW_EMB:RW_EMB + K_PAD, 0:d]                                  # bf16 (K_PAD, D)
    tok = jnp.dot(onehot, emb, preferred_element_type=jnp.float32)           # (P, D) f32
    pe = c_ref[R_PE:R_PE + P, 0:d]                                           # (P, D)
    x = _layernorm(tok + pe,
                   c_ref[R_EMBLN:R_EMBLN + 1, 0:d],
                   c_ref[R_EMBLN + 1:R_EMBLN + 2, 0:d], _LN_EPS_BERT)        # (P, D)

    # ---- BERT encoder: one batch element per block => no cross-batch masking
    for l in range(N_LAYERS):
        r = R_LAYER + 8 * l
        wqkv = w_ref[RW_QKV + d * l:RW_QKV + d * (l + 1), 0:3 * d]           # bf16 (D, 3D)
        qkv = _dot(x, wqkv) + c_ref[r:r + 1, 0:3 * d]                        # (P, 3D) f32

        # split heads from the fused QKV output (static lane slices)
        q = jnp.stack([qkv[:, hi * dh:(hi + 1) * dh] for hi in range(h)])            # (H, P, dh)
        k = jnp.stack([qkv[:, d + hi * dh:d + (hi + 1) * dh] for hi in range(h)])    # (H, P, dh)
        v = jnp.stack([qkv[:, 2 * d + hi * dh:2 * d + (hi + 1) * dh] for hi in range(h)])

        s = _bdot('hnd,hmd->hnm', q, k)                                      # (H, P, P)
        s = s - jnp.max(s, axis=-1, keepdims=True)
        e = jnp.exp(s)
        p_attn = e * pl.reciprocal(jnp.sum(e, axis=-1, keepdims=True), approx=True)

        ctx = _bdot('hnm,hmd->hnd', p_attn, v)                               # (H, P, dh)
        ctx_cat = jnp.concatenate([ctx[hi] for hi in range(h)], axis=-1)     # (P, D) lane-dense

        wo = w_ref[RW_WO + d * l:RW_WO + d * (l + 1), 0:d]                   # bf16 (D, D)
        attn = _dot(ctx_cat, wo) + c_ref[r + 1:r + 2, 0:d]                   # (P, D)

        x = _layernorm(x + attn,
                       c_ref[r + 2:r + 3, 0:d], c_ref[r + 3:r + 4, 0:d], _LN_EPS_BERT)

        w1 = w_ref[RW_W1 + d * l:RW_W1 + d * (l + 1), 0:dff]                 # bf16 (D, D_FF)
        w2 = w_ref[RW_W2 + dff * l:RW_W2 + dff * (l + 1), 0:d]               # bf16 (D_FF, D)
        hmid = _gelu(_dot(x, w1) + c_ref[r + 6:r + 7, 0:dff])
        ffn = _dot(hmid, w2) + c_ref[r + 7:r + 8, 0:d]
        x = _layernorm(x + ffn,
                       c_ref[r + 4:r + 5, 0:d], c_ref[r + 5:r + 6, 0:d], _LN_EPS_BERT)

    # ---- classification head: GELU -> LayerNorm over flattened (P*D) -> Linear
    g = _gelu(x)                                                             # (P, D)
    inv_pd = 1.0 / float(P * D_MODEL)
    mu = jnp.sum(jnp.sum(g, axis=-1, keepdims=True), axis=0, keepdims=True) * inv_pd   # (1, 1)
    diff = g - mu
    var = jnp.sum(jnp.sum(diff * diff, axis=-1, keepdims=True),
                  axis=0, keepdims=True) * inv_pd                            # centered variance
    xn = diff * jax.lax.rsqrt(var + _LN_EPS_HEAD) \
        * c_ref[R_HEADG:R_HEADG + P, 0:d] + c_ref[R_HEADB:R_HEADB + P, 0:d]  # (P, D)

    # flattened Linear computed in (P, D) layout:
    #   z_all[p, p'*C+c] = xn[p,:] @ W[p'*D:(p'+1)*D, c]; keep block p'==p and sum over p.
    wcat = w_ref[RW_WCAT:RW_WCAT + d, 0:P * NUM_CLASSES]                     # bf16 (D, P*C)
    z_all = _dot(xn, wcat)                                                   # (P, P*C)
    msk = c_ref[R_MSK:R_MSK + P, 0:P * NUM_CLASSES]                          # (P, P*C)
    selr = c_ref[R_SELR:R_SELR + P * NUM_CLASSES, 0:NUM_CLASSES]             # (P*C, C)
    per_row = jnp.dot(z_all * msk, selr, preferred_element_type=jnp.float32) # (P, C)
    logits = jnp.sum(per_row, axis=0, keepdims=True) \
        + c_ref[R_HBIAS:R_HBIAS + 1, 0:NUM_CLASSES]                          # (1, C)
    out_ref[...] = jnp.broadcast_to(logits, (P, NUM_CLASSES))


def _fused_call(patches, const_slab, weight_slab, batch):
    return pl.pallas_call(
        _bert4ts_kernel,
        out_shape=jax.ShapeDtypeStruct((batch, P, NUM_CLASSES), jnp.float32),
        grid=(batch,),
        in_specs=[
            pl.BlockSpec((P, WM), lambda b: (b, 0)),              # patches: one batch elem / block
            pl.BlockSpec((C_ROWS, 128), lambda b: (0, 0)),        # const slab: fetched once
            pl.BlockSpec((W_ROWS, 128), lambda b: (0, 0)),        # weight slab: fetched once
        ],
        out_specs=pl.BlockSpec((None, P, NUM_CLASSES), lambda b: (b, 0, 0)),
        compiler_params=pltpu.CompilerParams(
            dimension_semantics=("parallel",),                    # shards batch across TCs (v7x)
            vmem_limit_bytes=32 * 1024 * 1024,                    # safe on v5e/v6e/v7x; usage ~0.3 MiB
        ),
    )(patches, const_slab, weight_slab)


# ----------------------------- parameters ---------------------------------------
def init_params(key):
    keys = iter(jax.random.split(key, 64))

    def nrm(shape, scale=0.02):
        return scale * jax.random.normal(next(keys), shape, jnp.float32)

    params = {
        # VQ-VAE tokenizer (simplified: linear patch projection + codebook)
        # TODO(synk): full VQVAE conv/residual block stack replaced by a linear patch encoder + VQ argmin.
        "w_patch": nrm((WM, DV), 0.1),
        "b_patch": jnp.zeros((1, DV), jnp.float32),
        "codebooks": nrm((N_DATASETS, K_CODE, DV), 0.1),
        # embedding table + BERT embedding extras
        "emb_table": nrm((N_EMBED, D_MODEL)),
        "pos_emb": nrm((P, D_MODEL)),
        "type_emb": nrm((1, D_MODEL)),
        "emb_ln_g": jnp.ones((1, D_MODEL), jnp.float32),
        "emb_ln_b": jnp.zeros((1, D_MODEL), jnp.float32),
        # head
        "head_ln_g": jnp.ones((1, P * D_MODEL), jnp.float32),
        "head_ln_b": jnp.zeros((1, P * D_MODEL), jnp.float32),
        "head_w": nrm((P * D_MODEL, NUM_CLASSES)),
        "head_b": jnp.zeros((1, NUM_CLASSES), jnp.float32),
    }
    layers = []
    for _ in range(N_LAYERS):
        layers.append(dict(
            wq=nrm((D_MODEL, D_MODEL)), bq=jnp.zeros((1, D_MODEL), jnp.float32),
            wk=nrm((D_MODEL, D_MODEL)), bk=jnp.zeros((1, D_MODEL), jnp.float32),
            wv=nrm((D_MODEL, D_MODEL)), bv=jnp.zeros((1, D_MODEL), jnp.float32),
            wo=nrm((D_MODEL, D_MODEL)), bo=jnp.zeros((1, D_MODEL), jnp.float32),
            ln1_g=jnp.ones((1, D_MODEL), jnp.float32), ln1_b=jnp.zeros((1, D_MODEL), jnp.float32),
            w1=nrm((D_MODEL, D_FF)), b1=jnp.zeros((1, D_FF), jnp.float32),
            w2=nrm((D_FF, D_MODEL)), b2=jnp.zeros((1, D_MODEL), jnp.float32),
            ln2_g=jnp.ones((1, D_MODEL), jnp.float32), ln2_b=jnp.zeros((1, D_MODEL), jnp.float32),
        ))
    params["layers"] = layers
    return params


def prepare_fused(params, dataid):
    """One-time packing of all parameters into two (rows, 128) slabs (f32 consts, bf16 weights)."""
    d, dh = D_MODEL, D_HEAD
    scale = 1.0 / math.sqrt(dh)

    # --- VQ / embedding prep for the chosen dataset (Python-level selection) ---
    offset = sum(N_EMBD_NUM[:dataid])
    cb = params['codebooks'][dataid]                                   # (K, DV)
    cb_pad = jnp.zeros((K_PAD, DV), jnp.float32).at[:K_CODE].set(cb)
    e_sq = jnp.sum(cb_pad * cb_pad, axis=-1)
    e_sq = e_sq.at[K_CODE:].set(1e30)                                  # padded codes never win
    emb_rows = params['emb_table'][offset:offset + K_CODE]             # dataset slice of the table
    emb_pad = jnp.zeros((K_PAD, d), jnp.float32).at[:K_CODE].set(emb_rows)

    # --- f32 const slab ---
    cs = jnp.zeros((C_ROWS, 128), jnp.float32)

    def put(slab, row, arr, dtype=jnp.float32):
        arr = jnp.asarray(arr, dtype)
        return slab.at[row:row + arr.shape[0], 0:arr.shape[1]].set(arr)

    cs = put(cs, R_BPATCH, params['b_patch'])
    cs = put(cs, R_ESQ, e_sq[None, :])
    cs = put(cs, R_EMBLN, params['emb_ln_g'])
    cs = put(cs, R_EMBLN + 1, params['emb_ln_b'])
    cs = put(cs, R_PE, params['pos_emb'] + params['type_emb'])                  # (P, D), not tiled
    cs = put(cs, R_HEADG, params['head_ln_g'].reshape(P, d))
    cs = put(cs, R_HEADB, params['head_ln_b'].reshape(P, d))
    cs = put(cs, R_HBIAS, params['head_b'])
    for l, lp in enumerate(params['layers']):
        r = R_LAYER + 8 * l
        cs = put(cs, r + 0, jnp.concatenate([lp['bq'] * scale, lp['bk'], lp['bv']], axis=1))
        cs = put(cs, r + 1, lp['bo'])
        cs = put(cs, r + 2, lp['ln1_g']); cs = put(cs, r + 3, lp['ln1_b'])
        cs = put(cs, r + 4, lp['ln2_g']); cs = put(cs, r + 5, lp['ln2_b'])
        cs = put(cs, r + 6, lp['b1']);    cs = put(cs, r + 7, lp['b2'])
    col_p = jnp.arange(P * NUM_CLASSES) // NUM_CLASSES
    msk = (col_p[None, :] == jnp.arange(P)[:, None]).astype(jnp.float32)        # (P, P*C)
    sel_r = jnp.tile(jnp.eye(NUM_CLASSES, dtype=jnp.float32), (P, 1))           # (P*C, C)
    cs = put(cs, R_MSK, msk)
    cs = put(cs, R_SELR, sel_r)
    cs = put(cs, R_WPATCH, params['w_patch'])
    cs = put(cs, R_CBT, jnp.transpose(cb_pad))                                  # (DV, K_PAD)

    # --- bf16 weight slab (MXU operands only) ---
    ws = jnp.zeros((W_ROWS, 128), jnp.bfloat16)
    ws = put(ws, RW_EMB, emb_pad, jnp.bfloat16)
    for l, lp in enumerate(params['layers']):
        wqkv = jnp.concatenate([lp['wq'] * scale, lp['wk'], lp['wv']], axis=1)  # (D, 3D) fused QKV
        ws = put(ws, RW_QKV + d * l, wqkv, jnp.bfloat16)
        ws = put(ws, RW_WO + d * l, lp['wo'], jnp.bfloat16)
        ws = put(ws, RW_W1 + d * l, lp['w1'], jnp.bfloat16)
        ws = put(ws, RW_W2 + D_FF * l, lp['w2'], jnp.bfloat16)
    wcat = jnp.transpose(params['head_w'].reshape(P, d, NUM_CLASSES),
                         (1, 0, 2)).reshape(d, P * NUM_CLASSES)                 # (D, P*C)
    ws = put(ws, RW_WCAT, wcat, jnp.bfloat16)

    return dict(const_slab=cs, weight_slab=ws)


# ----------------------------- full forward (non-pretrain path) -----------------
def bert4ts_forward(x_enc, prep):
    b, l, m = x_enc.shape
    p = l // WAVE_LEN
    patches = x_enc.reshape(b * p, WAVE_LEN * m)                 # (B*P, WAVE_LEN*M)
    out = _fused_call(patches, prep['const_slab'], prep['weight_slab'], b)   # (B, P, C)
    return out[:, 0, :]                                          # logits per batch element


# TODO(synk): pretrain=True masked-LM branch (random masking + MLM loss) not implemented.

if __name__ == "__main__":
    key = jax.random.PRNGKey(0)
    kp, kx = jax.random.split(key)
    params = init_params(kp)
    prep = prepare_fused(params, DATAID)
    x_enc = jax.random.normal(kx, (B, L, M), jnp.float32)

    forward = jax.jit(bert4ts_forward)
    logits = forward(x_enc, prep)
    jax.block_until_ready(logits)
    assert logits.shape == (B, NUM_CLASSES), logits.shape
    assert bool(jnp.all(jnp.isfinite(logits)))
    print("KERNEL_OK")
</pallas_src>

<mosaic_0001>
module attributes {stable_mosaic.version = 11 : i64} {
  func.func @_bert4ts_kernel(%arg0: i32, %arg1: memref<8x8xf32, #tpu.memory_space<vmem>>, %arg2: memref<136x128xf32, #tpu.memory_space<vmem>>, %arg3: memref<480x128xbf16, #tpu.memory_space<vmem>>, %arg4: memref<1x8x6xf32, #tpu.memory_space<vmem>>) attributes {dimension_semantics = [#tpu.dimension_semantics<parallel>], iteration_bounds = array<i64: 2>, scalar_prefetch = 0 : i64, scratch_operands = 0 : i64, tpu.core_type = #tpu.core_type<tc>, window_params = [{transform_indices = @transform_0, window_bounds = array<i64: 8, 8>}, {pipeline_mode = #tpu.pipeline_mode<synchronous>, transform_indices = @transform_1, window_bounds = array<i64: 136, 128>}, {pipeline_mode = #tpu.pipeline_mode<synchronous>, transform_indices = @transform_2, window_bounds = array<i64: 480, 128>}, {transform_indices = @transform_3, window_bounds = array<i64: 1, 8, 6>}]} {
    %c0 = arith.constant 0 : index
    %c0_0 = arith.constant 0 : index
    %0 = vector.load %arg1[%c0, %c0_0] : memref<8x8xf32, #tpu.memory_space<vmem>>, vector<8x8xf32>
    %c112 = arith.constant 112 : index
    %c0_1 = arith.constant 0 : index
    %1 = vector.load %arg2[%c112, %c0_1] : memref<136x128xf32, #tpu.memory_space<vmem>>, vector<8x16xf32>
    %cst = arith.constant dense<0.000000e+00> : vector<8x16xf32>
    %2 = tpu.matmul %0, %1, %cst {dimension_numbers = #tpu.dot_dimension_numbers<[1], [0], [0], [1], [0, 0, 1, 1], [], []>} : vector<8x8xf32>, vector<8x16xf32>, vector<8x16xf32> -> vector<8x16xf32>
    %c0_2 = arith.constant 0 : index
    %c0_3 = arith.constant 0 : index
    %3 = vector.load %arg2[%c0_2, %c0_3] : memref<136x128xf32, #tpu.memory_space<vmem>>, vector<1x16xf32>
    %4 = vector.broadcast %3 : vector<1x16xf32> to vector<8x16xf32>
    %5 = arith.addf %2, %4 : vector<8x16xf32>
    %c120 = arith.constant 120 : index
    %c0_4 = arith.constant 0 : index
    %6 = vector.load %arg2[%c120, %c0_4] : memref<136x128xf32, #tpu.memory_space<vmem>>, vector<16x128xf32>
    %c1 = arith.constant 1 : index
    %c0_5 = arith.constant 0 : index
    %7 = vector.load %arg2[%c1, %c0_5] : memref<136x128xf32, #tpu.memory_space<vmem>>, vector<1x128xf32>
    %cst_6 = arith.constant dense<0.000000e+00> : vector<8x128xf32>
    %8 = tpu.matmul %5, %6, %cst_6 {dimension_numbers = #tpu.dot_dimension_numbers<[1], [0], [0], [1], [0, 0, 1, 1], [], []>} : vector<8x16xf32>, vector<16x128xf32>, vector<8x128xf32> -> vector<8x128xf32>
    %cst_7 = arith.constant 2.000000e+00 : f32
    %9 = vector.broadcast %cst_7 : f32 to vector<8x128xf32>
    %10 = arith.mulf %9, %8 : vector<8x128xf32>
    %11 = vector.broadcast %7 : vector<1x128xf32> to vector<8x128xf32>
    %12 = arith.subf %11, %10 : vector<8x128xf32>
    %cst_8 = arith.constant dense<0x7F800000> : vector<8xf32>
    %13 = vector.multi_reduction <minimumf>, %12, %cst_8 [1] : vector<8x128xf32> to vector<8xf32>
    %14 = vector.shape_cast %13 : vector<8xf32> to vector<8x1xf32>
    %15 = tpu.iota {dimensions = array<i32: 1>} : vector<8x128xi32>
    %16 = vector.broadcast %14 : vector<8x1xf32> to vector<8x128xf32>
    %17 = arith.cmpf ole, %12, %16 : vector<8x128xf32>
    %c128_i32 = arith.constant 128 : i32
    %18 = vector.broadcast %c128_i32 : i32 to vector<8x128xi32>
    %19 = arith.select %17, %15, %18 : vector<8x128xi1>, vector<8x128xi32>
    %cst_9 = arith.constant dense<2147483647> : vector<8xi32>
    %20 = vector.multi_reduction <minsi>, %19, %cst_9 [1] : vector<8x128xi32> to vector<8xi32>
    %21 = vector.shape_cast %20 : vector<8xi32> to vector<8x1xi32>
    %22 = vector.broadcast %21 : vector<8x1xi32> to vector<8x128xi32>
    %23 = arith.cmpi eq, %15, %22 : vector<8x128xi32>
    %24 = arith.extui %23 : vector<8x128xi1> to vector<8x128xi32>
    %25 = arith.sitofp %24 : vector<8x128xi32> to vector<8x128xf32>
    %26 = arith.truncf %25 : vector<8x128xf32> to vector<8x128xbf16>
    %c0_10 = arith.constant 0 : index
    %c0_11 = arith.constant 0 : index
    %27 = vector.load %arg3[%c0_10, %c0_11] : memref<480x128xbf16, #tpu.memory_space<vmem>>, vector<128x32xbf16>
    %cst_12 = arith.constant dense<0.000000e+00> : vector<8x32xf32>
    %28 = tpu.matmul %26, %27, %cst_12 {dimension_numbers = #tpu.dot_dimension_numbers<[1], [0], [0], [1], [0, 0, 1, 1], [], []>} : vector<8x128xbf16>, vector<128x32xbf16>, vector<8x32xf32> -> vector<8x32xf32>
    %c8 = arith.constant 8 : index
    %c0_13 = arith.constant 0 : index
    %29 = vector.load %arg2[%c8, %c0_13] : memref<136x128xf32, #tpu.memory_space<vmem>>, vector<8x32xf32>
    %30 = arith.addf %28, %29 : vector<8x32xf32>
    %c2 = arith.constant 2 : index
    %c0_14 = arith.constant 0 : index
    %31 = vector.load %arg2[%c2, %c0_14] : memref<136x128xf32, #tpu.memory_space<vmem>>, vector<1x32xf32>
    %c3 = arith.constant 3 : index
    %c0_15 = arith.constant 0 : index
    %32 = vector.load %arg2[%c3, %c0_15] : memref<136x128xf32, #tpu.memory_space<vmem>>, vector<1x32xf32>
    %cst_16 = arith.constant dense<0.000000e+00> : vector<8xf32>
    %33 = vector.multi_reduction <add>, %30, %cst_16 [1] : vector<8x32xf32> to vector<8xf32>
    %34 = vector.shape_cast %33 : vector<8xf32> to vector<8x1xf32>
    %cst_17 = arith.constant 3.200000e+01 : f32
    %35 = vector.broadcast %cst_17 : f32 to vector<8x1xf32>
    %36 = arith.divf %34, %35 : vector<8x1xf32>
    %37 = vector.broadcast %36 : vector<8x1xf32> to vector<8x32xf32>
    %38 = arith.subf %30, %37 : vector<8x32xf32>
    %39 = arith.mulf %38, %38 : vector<8x32xf32>
    %cst_18 = arith.constant dense<0.000000e+00> : vector<8xf32>
    %40 = vector.multi_reduction <add>, %39, %cst_18 [1] : vector<8x32xf32> to vector<8xf32>
    %41 = vector.shape_cast %40 : vector<8xf32> to vector<8x1xf32>
    %cst_19 = arith.constant 3.200000e+01 : f32
    %42 = vector.broadcast %cst_19 : f32 to vector<8x1xf32>
    %43 = arith.divf %41, %42 : vector<8x1xf32>
    %44 = vector.broadcast %36 : vector<8x1xf32> to vector<8x32xf32>
    %45 = arith.subf %30, %44 : vector<8x32xf32>
    %cst_20 = arith.constant 9.99999996E-13 : f32
    %46 = vector.broadcast %cst_20 : f32 to vector<8x1xf32>
    %47 = arith.addf %43, %46 : vector<8x1xf32>
    %48 = math.rsqrt %47 : vector<8x1xf32>
    %49 = vector.broadcast %48 : vector<8x1xf32> to vector<8x32xf32>
    %50 = arith.mulf %45, %49 : vector<8x32xf32>
    %51 = vector.broadcast %31 : vector<1x32xf32> to vector<8x32xf32>
    %52 = arith.mulf %50, %51 : vector<8x32xf32>
    %53 = vector.broadcast %32 : vector<1x32xf32> to vector<8x32xf32>
    %54 = arith.addf %52, %53 : vector<8x32xf32>
    %c128 = arith.constant 128 : index
    %c0_21 = arith.constant 0 : index
    %55 = vector.load %arg3[%c128, %c0_21] : memref<480x128xbf16, #tpu.memory_space<vmem>>, vector<32x96xbf16>
    %56 = arith.truncf %54 : vector<8x32xf32> to vector<8x32xbf16>
    %cst_22 = arith.constant dense<0.000000e+00> : vector<8x96xf32>
    %57 = tpu.matmul %56, %55, %cst_22 {dimension_numbers = #tpu.dot_dimension_numbers<[1], [0], [0], [1], [0, 0, 1, 1], [], []>} : vector<8x32xbf16>, vector<32x96xbf16>, vector<8x96xf32> -> vector<8x96xf32>
    %c40 = arith.constant 40 : index
    %c0_23 = arith.constant 0 : index
    %58 = vector.load %arg2[%c40, %c0_23] : memref<136x128xf32, #tpu.memory_space<vmem>>, vector<1x96xf32>
    %59 = vector.broadcast %58 : vector<1x96xf32> to vector<8x96xf32>
    %60 = arith.addf %57, %59 : vector<8x96xf32>
    %61 = vector.extract_strided_slice %60 {offsets = [0, 0], sizes = [8, 8], strides = [1, 1]} : vector<8x96xf32> to vector<8x8xf32>
    %62 = vector.extract_strided_slice %60 {offsets = [0, 8], sizes = [8, 8], strides = [1, 1]} : vector<8x96xf32> to vector<8x8xf32>
    %63 = vector.extract_strided_slice %60 {offsets = [0, 16], sizes = [8, 8], strides = [1, 1]} : vector<8x96xf32> to vector<8x8xf32>
    %64 = vector.extract_strided_slice %60 {offsets = [0, 24], sizes = [8, 8], strides = [1, 1]} : vector<8x96xf32> to vector<8x8xf32>
    %65 = vector.shape_cast %61 : vector<8x8xf32> to vector<1x8x8xf32>
    %66 = vector.shape_cast %62 : vector<8x8xf32> to vector<1x8x8xf32>
    %67 = vector.shape_cast %63 : vector<8x8xf32> to vector<1x8x8xf32>
    %68 = vector.shape_cast %64 : vector<8x8xf32> to vector<1x8x8xf32>
    %69 = tpu.concatenate %65, %66, %67, %68 in 0 : vector<1x8x8xf32>, vector<1x8x8xf32>, vector<1x8x8xf32>, vector<1x8x8xf32> -> vector<4x8x8xf32>
    %70 = vector.extract_strided_slice %60 {offsets = [0, 32], sizes = [8, 8], strides = [1, 1]} : vector<8x96xf32> to vector<8x8xf32>
    %71 = vector.extract_strided_slice %60 {offsets = [0, 40], sizes = [8, 8], strides = [1, 1]} : vector<8x96xf32> to vector<8x8xf32>
    %72 = vector.extract_strided_slice %60 {offsets = [0, 48], sizes = [8, 8], strides = [1, 1]} : vector<8x96xf32> to vector<8x8xf32>
    %73 = vector.extract_strided_slice %60 {offsets = [0, 56], sizes = [8, 8], strides = [1, 1]} : vector<8x96xf32> to vector<8x8xf32>
    %74 = vector.shape_cast %70 : vector<8x8xf32> to vector<1x8x8xf32>
    %75 = vector.shape_cast %71 : vector<8x8xf32> to vector<1x8x8xf32>
    %76 = vector.shape_cast %72 : vector<8x8xf32> to vector<1x8x8xf32>
    %77 = vector.shape_cast %73 : vector<8x8xf32> to vector<1x8x8xf32>
    %78 = tpu.concatenate %74, %75, %76, %77 in 0 : vector<1x8x8xf32>, vector<1x8x8xf32>, vector<1x8x8xf32>, vector<1x8x8xf32> -> vector<4x8x8xf32>
    %79 = vector.extract_strided_slice %60 {offsets = [0, 64], sizes = [8, 8], strides = [1, 1]} : vector<8x96xf32> to vector<8x8xf32>
    %80 = vector.extract_strided_slice %60 {offsets = [0, 72], sizes = [8, 8], strides = [1, 1]} : vector<8x96xf32> to vector<8x8xf32>
    %81 = vector.extract_strided_slice %60 {offsets = [0, 80], sizes = [8, 8], strides = [1, 1]} : vector<8x96xf32> to vector<8x8xf32>
    %82 = vector.extract_strided_slice %60 {offsets = [0, 88], sizes = [8, 8], strides = [1, 1]} : vector<8x96xf32> to vector<8x8xf32>
    %83 = vector.shape_cast %79 : vector<8x8xf32> to vector<1x8x8xf32>
    %84 = vector.shape_cast %80 : vector<8x8xf32> to vector<1x8x8xf32>
    %85 = vector.shape_cast %81 : vector<8x8xf32> to vector<1x8x8xf32>
    %86 = vector.shape_cast %82 : vector<8x8xf32> to vector<1x8x8xf32>
    %87 = tpu.concatenate %83, %84, %85, %86 in 0 : vector<1x8x8xf32>, vector<1x8x8xf32>, vector<1x8x8xf32>, vector<1x8x8xf32> -> vector<4x8x8xf32>
    %88 = arith.truncf %69 : vector<4x8x8xf32> to vector<4x8x8xbf16>
    %89 = arith.truncf %78 : vector<4x8x8xf32> to vector<4x8x8xbf16>
    "tpu.trace_start"() <{level = 10 : i32, message = "hnd,hmd->hnm"}> : () -> ()
    %cst_24 = arith.constant dense<0.000000e+00> : vector<4x8x8xf32>
    %90 = tpu.matmul %88, %89, %cst_24 {dimension_numbers = #tpu.dot_dimension_numbers<[2], [2], [1], [1], [0, 0, 0, 1, 1, 1], [0], [0]>} : vector<4x8x8xbf16>, vector<4x8x8xbf16>, vector<4x8x8xf32> -> vector<4x8x8xf32>
    "tpu.trace_stop"() : () -> ()
    %cst_25 = arith.constant dense<0xFF800000> : vector<4x8xf32>
    %91 = vector.multi_reduction <maximumf>, %90, %cst_25 [2] : vector<4x8x8xf32> to vector<4x8xf32>
    %92 = vector.shape_cast %91 : vector<4x8xf32> to vector<4x8x1xf32>
    %93 = vector.broadcast %92 : vector<4x8x1xf32> to vector<4x8x8xf32>
    %94 = arith.subf %90, %93 : vector<4x8x8xf32>
    %95 = math.exp %94 : vector<4x8x8xf32>
    %cst_26 = arith.constant dense<0.000000e+00> : vector<4x8xf32>
    %96 = vector.multi_reduction <add>, %95, %cst_26 [2] : vector<4x8x8xf32> to vector<4x8xf32>
    %97 = vector.shape_cast %96 : vector<4x8xf32> to vector<4x8x1xf32>
    %98 = tpu.reciprocal %97 {approx = true} : vector<4x8x1xf32> -> vector<4x8x1xf32>
    %99 = vector.broadcast %98 : vector<4x8x1xf32> to vector<4x8x8xf32>
    %100 = arith.mulf %95, %99 : vector<4x8x8xf32>
    %101 = arith.truncf %100 : vector<4x8x8xf32> to vector<4x8x8xbf16>
    %102 = arith.truncf %87 : vector<4x8x8xf32> to vector<4x8x8xbf16>
    "tpu.trace_start"() <{level = 10 : i32, message = "hnm,hmd->hnd"}> : () -> ()
    %cst_27 = arith.constant dense<0.000000e+00> : vector<4x8x8xf32>
    %103 = tpu.matmul %101, %102, %cst_27 {dimension_numbers = #tpu.dot_dimension_numbers<[2], [1], [1], [2], [0, 0, 0, 1, 1, 2], [0], [0]>} : vector<4x8x8xbf16>, vector<4x8x8xbf16>, vector<4x8x8xf32> -> vector<4x8x8xf32>
    "tpu.trace_stop"() : () -> ()
    %104 = vector.extract_strided_slice %103 {offsets = [0, 0, 0], sizes = [1, 8, 8], strides = [1, 1, 1]} : vector<4x8x8xf32> to vector<1x8x8xf32>
    %105 = vector.shape_cast %104 : vector<1x8x8xf32> to vector<8x8xf32>
    %106 = vector.extract_strided_slice %103 {offsets = [1, 0, 0], sizes = [1, 8, 8], strides = [1, 1, 1]} : vector<4x8x8xf32> to vector<1x8x8xf32>
    %107 = vector.shape_cast %106 : vector<1x8x8xf32> to vector<8x8xf32>
    %108 = vector.extract_strided_slice %103 {offsets = [2, 0, 0], sizes = [1, 8, 8], strides = [1, 1, 1]} : vector<4x8x8xf32> to vector<1x8x8xf32>
    %109 = vector.shape_cast %108 : vector<1x8x8xf32> to vector<8x8xf32>
    %110 = vector.extract_strided_slice %103 {offsets = [3, 0, 0], sizes = [1, 8, 8], strides = [1, 1, 1]} : vector<4x8x8xf32> to vector<1x8x8xf32>
    %111 = vector.shape_cast %110 : vector<1x8x8xf32> to vector<8x8xf32>
    %112 = tpu.concatenate %105, %107, %109, %111 in 1 : vector<8x8xf32>, vector<8x8xf32>, vector<8x8xf32>, vector<8x8xf32> -> vector<8x32xf32>
    %c192 = arith.constant 192 : index
    %c0_28 = arith.constant 0 : index
    %113 = vector.load %arg3[%c192, %c0_28] : memref<480x128xbf16, #tpu.memory_space<vmem>>, vector<32x32xbf16>
    %114 = arith.truncf %112 : vector<8x32xf32> to vector<8x32xbf16>
    %cst_29 = arith.constant dense<0.000000e+00> : vector<8x32xf32>
    %115 = tpu.matmul %114, %113, %cst_29 {dimension_numbers = #tpu.dot_dimension_numbers<[1], [0], [0], [1], [0, 0, 1, 1], [], []>} : vector<8x32xbf16>, vector<32x32xbf16>, vector<8x32xf32> -> vector<8x32xf32>
    %c41 = arith.constant 41 : index
    %c0_30 = arith.constant 0 : index
    %116 = vector.load %arg2[%c41, %c0_30] : memref<136x128xf32, #tpu.memory_space<vmem>>, vector<1x32xf32>
    %117 = vector.broadcast %116 : vector<1x32xf32> to vector<8x32xf32>
    %118 = arith.addf %115, %117 : vector<8x32xf32>
    %119 = arith.addf %54, %118 : vector<8x32xf32>
    %c42 = arith.constant 42 : index
    %c0_31 = arith.constant 0 : index
    %120 = vector.load %arg2[%c42, %c0_31] : memref<136x128xf32, #tpu.memory_space<vmem>>, vector<1x32xf32>
    %c43 = arith.constant 43 : index
    %c0_32 = arith.constant 0 : index
    %121 = vector.load %arg2[%c43, %c0_32] : memref<136x128xf32, #tpu.memory_space<vmem>>, vector<1x32xf32>
    %cst_33 = arith.constant dense<0.000000e+00> : vector<8xf32>
    %122 = vector.multi_reduction <add>, %119, %cst_33 [1] : vector<8x32xf32> to vector<8xf32>
    %123 = vector.shape_cast %122 : vector<8xf32> to vector<8x1xf32>
    %cst_34 = arith.constant 3.200000e+01 : f32
    %124 = vector.broadcast %cst_34 : f32 to vector<8x1xf32>
    %125 = arith.divf %123, %124 : vector<8x1xf32>
    %126 = vector.broadcast %125 : vector<8x1xf32> to vector<8x32xf32>
    %127 = arith.subf %119, %126 : vector<8x32xf32>
    %128 = arith.mulf %127, %127 : vector<8x32xf32>
    %cst_35 = arith.constant dense<0.000000e+00> : vector<8xf32>
    %129 = vector.multi_reduction <add>, %128, %cst_35 [1] : vector<8x32xf32> to vector<8xf32>
    %130 = vector.shape_cast %129 : vector<8xf32> to vector<8x1xf32>
    %cst_36 = arith.constant 3.200000e+01 : f32
    %131 = vector.broadcast %cst_36 : f32 to vector<8x1xf32>
    %132 = arith.divf %130, %131 : vector<8x1xf32>
    %133 = vector.broadcast %125 : vector<8x1xf32> to vector<8x32xf32>
    %134 = arith.subf %119, %133 : vector<8x32xf32>
    %cst_37 = arith.constant 9.99999996E-13 : f32
    %135 = vector.broadcast %cst_37 : f32 to vector<8x1xf32>
    %136 = arith.addf %132, %135 : vector<8x1xf32>
    %137 = math.rsqrt %136 : vector<8x1xf32>
    %138 = vector.broadcast %137 : vector<8x1xf32> to vector<8x32xf32>
    %139 = arith.mulf %134, %138 : vector<8x32xf32>
    %140 = vector.broadcast %120 : vector<1x32xf32> to vector<8x32xf32>
    %141 = arith.mulf %139, %140 : vector<8x32xf32>
    %142 = vector.broadcast %121 : vector<1x32xf32> to vector<8x32xf32>
    %143 = arith.addf %141, %142 : vector<8x32xf32>
    %c256 = arith.constant 256 : index
    %c0_38 = arith.constant 0 : index
    %144 = vector.load %arg3[%c256, %c0_38] : memref<480x128xbf16, #tpu.memory_space<vmem>>, vector<32x64xbf16>
    %c320 = arith.constant 320 : index
    %c0_39 = arith.constant 0 : index
    %145 = vector.load %arg3[%c320, %c0_39] : memref<480x128xbf16, #tpu.memory_space<vmem>>, vector<64x32xbf16>
    %146 = arith.truncf %143 : vector<8x32xf32> to vector<8x32xbf16>
    %cst_40 = arith.constant dense<0.000000e+00> : vector<8x64xf32>
    %147 = tpu.matmul %146, %144, %cst_40 {dimension_numbers = #tpu.dot_dimension_numbers<[1], [0], [0], [1], [0, 0, 1, 1], [], []>} : vector<8x32xbf16>, vector<32x64xbf16>, vector<8x64xf32> -> vector<8x64xf32>
    %c46 = arith.constant 46 : index
    %c0_41 = arith.constant 0 : index
    %148 = vector.load %arg2[%c46, %c0_41] : memref<136x128xf32, #tpu.memory_space<vmem>>, vector<1x64xf32>
    %149 = vector.broadcast %148 : vector<1x64xf32> to vector<8x64xf32>
    %150 = arith.addf %147, %149 : vector<8x64xf32>
    %151 = arith.mulf %150, %150 : vector<8x64xf32>
    %152 = arith.mulf %150, %151 : vector<8x64xf32>
    %cst_42 = arith.constant 4.471500e-02 : f32
    %153 = vector.broadcast %cst_42 : f32 to vector<8x64xf32>
    %154 = arith.mulf %153, %152 : vector<8x64xf32>
    %155 = arith.addf %150, %154 : vector<8x64xf32>
    %cst_43 = arith.constant 0.797884583 : f32
    %156 = vector.broadcast %cst_43 : f32 to vector<8x64xf32>
    %157 = arith.mulf %156, %155 : vector<8x64xf32>
    %158 = math.tanh %157 : vector<8x64xf32>
    %cst_44 = arith.constant 1.000000e+00 : f32
    %159 = vector.broadcast %cst_44 : f32 to vector<8x64xf32>
    %160 = arith.addf %159, %158 : vector<8x64xf32>
    %cst_45 = arith.constant 5.000000e-01 : f32
    %161 = vector.broadcast %cst_45 : f32 to vector<8x64xf32>
    %162 = arith.mulf %161, %160 : vector<8x64xf32>
    %163 = arith.mulf %150, %162 : vector<8x64xf32>
    %164 = arith.truncf %163 : vector<8x64xf32> to vector<8x64xbf16>
    %cst_46 = arith.constant dense<0.000000e+00> : vector<8x32xf32>
    %165 = tpu.matmul %164, %145, %cst_46 {dimension_numbers = #tpu.dot_dimension_numbers<[1], [0], [0], [1], [0, 0, 1, 1], [], []>} : vector<8x64xbf16>, vector<64x32xbf16>, vector<8x32xf32> -> vector<8x32xf32>
    %c47 = arith.constant 47 : index
    %c0_47 = arith.constant 0 : index
    %166 = vector.load %arg2[%c47, %c0_47] : memref<136x128xf32, #tpu.memory_space<vmem>>, vector<1x32xf32>
    %167 = vector.broadcast %166 : vector<1x32xf32> to vector<8x32xf32>
    %168 = arith.addf %165, %167 : vector<8x32xf32>
    %169 = arith.addf %143, %168 : vector<8x32xf32>
    %c44 = arith.constant 44 : index
    %c0_48 = arith.constant 0 : index
    %170 = vector.load %arg2[%c44, %c0_48] : memref<136x128xf32, #tpu.memory_space<vmem>>, vector<1x32xf32>
    %c45 = arith.constant 45 : index
    %c0_49 = arith.constant 0 : index
    %171 = vector.load %arg2[%c45, %c0_49] : memref<136x128xf32, #tpu.memory_space<vmem>>, vector<1x32xf32>
    %cst_50 = arith.constant dense<0.000000e+00> : vector<8xf32>
    %172 = vector.multi_reduction <add>, %169, %cst_50 [1] : vector<8x32xf32> to vector<8xf32>
    %173 = vector.shape_cast %172 : vector<8xf32> to vector<8x1xf32>
    %cst_51 = arith.constant 3.200000e+01 : f32
    %174 = vector.broadcast %cst_51 : f32 to vector<8x1xf32>
    %175 = arith.divf %173, %174 : vector<8x1xf32>
    %176 = vector.broadcast %175 : vector<8x1xf32> to vector<8x32xf32>
    %177 = arith.subf %169, %176 : vector<8x32xf32>
    %178 = arith.mulf %177, %177 : vector<8x32xf32>
    %cst_52 = arith.constant dense<0.000000e+00> : vector<8xf32>
    %179 = vector.multi_reduction <add>, %178, %cst_52 [1] : vector<8x32xf32> to vector<8xf32>
    %180 = vector.shape_cast %179 : vector<8xf32> to vector<8x1xf32>
    %cst_53 = arith.constant 3.200000e+01 : f32
    %181 = vector.broadcast %cst_53 : f32 to vector<8x1xf32>
    %182 = arith.divf %180, %181 : vector<8x1xf32>
    %183 = vector.broadcast %175 : vector<8x1xf32> to vector<8x32xf32>
    %184 = arith.subf %169, %183 : vector<8x32xf32>
    %cst_54 = arith.constant 9.99999996E-13 : f32
    %185 = vector.broadcast %cst_54 : f32 to vector<8x1xf32>
    %186 = arith.addf %182, %185 : vector<8x1xf32>
    %187 = math.rsqrt %186 : vector<8x1xf32>
    %188 = vector.broadcast %187 : vector<8x1xf32> to vector<8x32xf32>
    %189 = arith.mulf %184, %188 : vector<8x32xf32>
    %190 = vector.broadcast %170 : vector<1x32xf32> to vector<8x32xf32>
    %191 = arith.mulf %189, %190 : vector<8x32xf32>
    %192 = vector.broadcast %171 : vector<1x32xf32> to vector<8x32xf32>
    %193 = arith.addf %191, %192 : vector<8x32xf32>
    %c160 = arith.constant 160 : index
    %c0_55 = arith.constant 0 : index
    %194 = vector.load %arg3[%c160, %c0_55] : memref<480x128xbf16, #tpu.memory_space<vmem>>, vector<32x96xbf16>
    %195 = arith.truncf %193 : vector<8x32xf32> to vector<8x32xbf16>
    %cst_56 = arith.constant dense<0.000000e+00> : vector<8x96xf32>
    %196 = tpu.matmul %195, %194, %cst_56 {dimension_numbers = #tpu.dot_dimension_numbers<[1], [0], [0], [1], [0, 0, 1, 1], [], []>} : vector<8x32xbf16>, vector<32x96xbf16>, vector<8x96xf32> -> vector<8x96xf32>
    %c48 = arith.constant 48 : index
    %c0_57 = arith.constant 0 : index
    %197 = vector.load %arg2[%c48, %c0_57] : memref<136x128xf32, #tpu.memory_space<vmem>>, vector<1x96xf32>
    %198 = vector.broadcast %197 : vector<1x96xf32> to vector<8x96xf32>
    %199 = arith.addf %196, %198 : vector<8x96xf32>
    %200 = vector.extract_strided_slice %199 {offsets = [0, 0], sizes = [8, 8], strides = [1, 1]} : vector<8x96xf32> to vector<8x8xf32>
    %201 = vector.extract_strided_slice %199 {offsets = [0, 8], sizes = [8, 8], strides = [1, 1]} : vector<8x96xf32> to vector<8x8xf32>
    %202 = vector.extract_strided_slice %199 {offsets = [0, 16], sizes = [8, 8], strides = [1, 1]} : vector<8x96xf32> to vector<8x8xf32>
    %203 = vector.extract_strided_slice %199 {offsets = [0, 24], sizes = [8, 8], strides = [1, 1]} : vector<8x96xf32> to vector<8x8xf32>
    %204 = vector.shape_cast %200 : vector<8x8xf32> to vector<1x8x8xf32>
    %205 = vector.shape_cast %201 : vector<8x8xf32> to vector<1x8x8xf32>
    %206 = vector.shape_cast %202 : vector<8x8xf32> to vector<1x8x8xf32>
    %207 = vector.shape_cast %203 : vector<8x8xf32> to vector<1x8x8xf32>
    %208 = tpu.concatenate %204, %205, %206, %207 in 0 : vector<1x8x8xf32>, vector<1x8x8xf32>, vector<1x8x8xf32>, vector<1x8x8xf32> -> vector<4x8x8xf32>
    %209 = vector.extract_strided_slice %199 {offsets = [0, 32], sizes = [8, 8], strides = [1, 1]} : vector<8x96xf32> to vector<8x8xf32>
    %210 = vector.extract_strided_slice %199 {offsets = [0, 40], sizes = [8, 8], strides = [1, 1]} : vector<8x96xf32> to vector<8x8xf32>
    %211 = vector.extract_strided_slice %199 {offsets = [0, 48], sizes = [8, 8], strides = [1, 1]} : vector<8x96xf32> to vector<8x8xf32>
    %212 = vector.extract_strided_slice %199 {offsets = [0, 56], sizes = [8, 8], strides = [1, 1]} : vector<8x96xf32> to vector<8x8xf32>
    %213 = vector.shape_cast %209 : vector<8x8xf32> to vector<1x8x8xf32>
    %214 = vector.shape_cast %210 : vector<8x8xf32> to vector<1x8x8xf32>
    %215 = vector.shape_cast %211 : vector<8x8xf32> to vector<1x8x8xf32>
    %216 = vector.shape_cast %212 : vector<8x8xf32> to vector<1x8x8xf32>
    %217 = tpu.concatenate %213, %214, %215, %216 in 0 : vector<1x8x8xf32>, vector<1x8x8xf32>, vector<1x8x8xf32>, vector<1x8x8xf32> -> vector<4x8x8xf32>
    %218 = vector.extract_strided_slice %199 {offsets = [0, 64], sizes = [8, 8], strides = [1, 1]} : vector<8x96xf32> to vector<8x8xf32>
    %219 = vector.extract_strided_slice %199 {offsets = [0, 72], sizes = [8, 8], strides = [1, 1]} : vector<8x96xf32> to vector<8x8xf32>
    %220 = vector.extract_strided_slice %199 {offsets = [0, 80], sizes = [8, 8], strides = [1, 1]} : vector<8x96xf32> to vector<8x8xf32>
    %221 = vector.extract_strided_slice %199 {offsets = [0, 88], sizes = [8, 8], strides = [1, 1]} : vector<8x96xf32> to vector<8x8xf32>
    %222 = vector.shape_cast %218 : vector<8x8xf32> to vector<1x8x8xf32>
    %223 = vector.shape_cast %219 : vector<8x8xf32> to vector<1x8x8xf32>
    %224 = vector.shape_cast %220 : vector<8x8xf32> to vector<1x8x8xf32>
    %225 = vector.shape_cast %221 : vector<8x8xf32> to vector<1x8x8xf32>
    %226 = tpu.concatenate %222, %223, %224, %225 in 0 : vector<1x8x8xf32>, vector<1x8x8xf32>, vector<1x8x8xf32>, vector<1x8x8xf32> -> vector<4x8x8xf32>
    %227 = arith.truncf %208 : vector<4x8x8xf32> to vector<4x8x8xbf16>
    %228 = arith.truncf %217 : vector<4x8x8xf32> to vector<4x8x8xbf16>
    "tpu.trace_start"() <{level = 10 : i32, message = "hnd,hmd->hnm"}> : () -> ()
    %cst_58 = arith.constant dense<0.000000e+00> : vector<4x8x8xf32>
    %229 = tpu.matmul %227, %228, %cst_58 {dimension_numbers = #tpu.dot_dimension_numbers<[2], [2], [1], [1], [0, 0, 0, 1, 1, 1], [0], [0]>} : vector<4x8x8xbf16>, vector<4x8x8xbf16>, vector<4x8x8xf32> -> vector<4x8x8xf32>
    "tpu.trace_stop"() : () -> ()
    %cst_59 = arith.constant dense<0xFF800000> : vector<4x8xf32>
    %230 = vector.multi_reduction <maximumf>, %229, %cst_59 [2] : vector<4x8x8xf32> to vector<4x8xf32>
    %231 = vector.shape_cast %230 : vector<4x8xf32> to vector<4x8x1xf32>
    %232 = vector.broadcast %231 : vector<4x8x1xf32> to vector<4x8x8xf32>
    %233 = arith.subf %229, %232 : vector<4x8x8xf32>
    %234 = math.exp %233 : vector<4x8x8xf32>
    %cst_60 = arith.constant dense<0.000000e+00> : vector<4x8xf32>
    %235 = vector.multi_reduction <add>, %234, %cst_60 [2] : vector<4x8x8xf32> to vector<4x8xf32>
    %236 = vector.shape_cast %235 : vector<4x8xf32> to vector<4x8x1xf32>
    %237 = tpu.reciprocal %236 {approx = true} : vector<4x8x1xf32> -> vector<4x8x1xf32>
    %238 = vector.broadcast %237 : vector<4x8x1xf32> to vector<4x8x8xf32>
    %239 = arith.mulf %234, %238 : vector<4x8x8xf32>
    %240 = arith.truncf %239 : vector<4x8x8xf32> to vector<4x8x8xbf16>
    %241 = arith.truncf %226 : vector<4x8x8xf32> to vector<4x8x8xbf16>
    "tpu.trace_start"() <{level = 10 : i32, message = "hnm,hmd->hnd"}> : () -> ()
    %cst_61 = arith.constant dense<0.000000e+00> : vector<4x8x8xf32>
    %242 = tpu.matmul %240, %241, %cst_61 {dimension_numbers = #tpu.dot_dimension_numbers<[2], [1], [1], [2], [0, 0, 0, 1, 1, 2], [0], [0]>} : vector<4x8x8xbf16>, vector<4x8x8xbf16>, vector<4x8x8xf32> -> vector<4x8x8xf32>
    "tpu.trace_stop"() : () -> ()
    %243 = vector.extract_strided_slice %242 {offsets = [0, 0, 0], sizes = [1, 8, 8], strides = [1, 1, 1]} : vector<4x8x8xf32> to vector<1x8x8xf32>
    %244 = vector.shape_cast %243 : vector<1x8x8xf32> to vector<8x8xf32>
    %245 = vector.extract_strided_slice %242 {offsets = [1, 0, 0], sizes = [1, 8, 8], strides = [1, 1, 1]} : vector<4x8x8xf32> to vector<1x8x8xf32>
    %246 = vector.shape_cast %245 : vector<1x8x8xf32> to vector<8x8xf32>
    %247 = vector.extract_strided_slice %242 {offsets = [2, 0, 0], sizes = [1, 8, 8], strides = [1, 1, 1]} : vector<4x8x8xf32> to vector<1x8x8xf32>
    %248 = vector.shape_cast %247 : vector<1x8x8xf32> to vector<8x8xf32>
    %249 = vector.extract_strided_slice %242 {offsets = [3, 0, 0], sizes = [1, 8, 8], strides = [1, 1, 1]} : vector<4x8x8xf32> to vector<1x8x8xf32>
    %250 = vector.shape_cast %249 : vector<1x8x8xf32> to vector<8x8xf32>
    %251 = tpu.concatenate %244, %246, %248, %250 in 1 : vector<8x8xf32>, vector<8x8xf32>, vector<8x8xf32>, vector<8x8xf32> -> vector<8x32xf32>
    %c224 = arith.constant 224 : index
    %c0_62 = arith.constant 0 : index
    %252 = vector.load %arg3[%c224, %c0_62] : memref<480x128xbf16, #tpu.memory_space<vmem>>, vector<32x32xbf16>
    %253 = arith.truncf %251 : vector<8x32xf32> to vector<8x32xbf16>
    %cst_63 = arith.constant dense<0.000000e+00> : vector<8x32xf32>
    %254 = tpu.matmul %253, %252, %cst_63 {dimension_numbers = #tpu.dot_dimension_numbers<[1], [0], [0], [1], [0, 0, 1, 1], [], []>} : vector<8x32xbf16>, vector<32x32xbf16>, vector<8x32xf32> -> vector<8x32xf32>
    %c49 = arith.constant 49 : index
    %c0_64 = arith.constant 0 : index
    %255 = vector.load %arg2[%c49, %c0_64] : memref<136x128xf32, #tpu.memory_space<vmem>>, vector<1x32xf32>
    %256 = vector.broadcast %255 : vector<1x32xf32> to vector<8x32xf32>
    %257 = arith.addf %254, %256 : vector<8x32xf32>
    %258 = arith.addf %193, %257 : vector<8x32xf32>
    %c50 = arith.constant 50 : index
    %c0_65 = arith.constant 0 : index
    %259 = vector.load %arg2[%c50, %c0_65] : memref<136x128xf32, #tpu.memory_space<vmem>>, vector<1x32xf32>
    %c51 = arith.constant 51 : index
    %c0_66 = arith.constant 0 : index
    %260 = vector.load %arg2[%c51, %c0_66] : memref<136x128xf32, #tpu.memory_space<vmem>>, vector<1x32xf32>
    %cst_67 = arith.constant dense<0.000000e+00> : vector<8xf32>
    %261 = vector.multi_reduction <add>, %258, %cst_67 [1] : vector<8x32xf32> to vector<8xf32>
    %262 = vector.shape_cast %261 : vector<8xf32> to vector<8x1xf32>
    %cst_68 = arith.constant 3.200000e+01 : f32
    %263 = vector.broadcast %cst_68 : f32 to vector<8x1xf32>
    %264 = arith.divf %262, %263 : vector<8x1xf32>
    %265 = vector.broadcast %264 : vector<8x1xf32> to vector<8x32xf32>
    %266 = arith.subf %258, %265 : vector<8x32xf32>
    %267 = arith.mulf %266, %266 : vector<8x32xf32>
    %cst_69 = arith.constant dense<0.000000e+00> : vector<8xf32>
    %268 = vector.multi_reduction <add>, %267, %cst_69 [1] : vector<8x32xf32> to vector<8xf32>
    %269 = vector.shape_cast %268 : vector<8xf32> to vector<8x1xf32>
    %cst_70 = arith.constant 3.200000e+01 : f32
    %270 = vector.broadcast %cst_70 : f32 to vector<8x1xf32>
    %271 = arith.divf %269, %270 : vector<8x1xf32>
    %272 = vector.broadcast %264 : vector<8x1xf32> to vector<8x32xf32>
    %273 = arith.subf %258, %272 : vector<8x32xf32>
    %cst_71 = arith.constant 9.99999996E-13 : f32
    %274 = vector.broadcast %cst_71 : f32 to vector<8x1xf32>
    %275 = arith.addf %271, %274 : vector<8x1xf32>
    %276 = math.rsqrt %275 : vector<8x1xf32>
    %277 = vector.broadcast %276 : vector<8x1xf32> to vector<8x32xf32>
    %278 = arith.mulf %273, %277 : vector<8x32xf32>
    %279 = vector.broadcast %259 : vector<1x32xf32> to vector<8x32xf32>
    %280 = arith.mulf %278, %279 : vector<8x32xf32>
    %281 = vector.broadcast %260 : vector<1x32xf32> to vector<8x32xf32>
    %282 = arith.addf %280, %281 : vector<8x32xf32>
    %c288 = arith.constant 288 : index
    %c0_72 = arith.constant 0 : index
    %283 = vector.load %arg3[%c288, %c0_72] : memref<480x128xbf16, #tpu.memory_space<vmem>>, vector<32x64xbf16>
    %c384 = arith.constant 384 : index
    %c0_73 = arith.constant 0 : index
    %284 = vector.load %arg3[%c384, %c0_73] : memref<480x128xbf16, #tpu.memory_space<vmem>>, vector<64x32xbf16>
    %285 = arith.truncf %282 : vector<8x32xf32> to vector<8x32xbf16>
    %cst_74 = arith.constant dense<0.000000e+00> : vector<8x64xf32>
    %286 = tpu.matmul %285, %283, %cst_74 {dimension_numbers = #tpu.dot_dimension_numbers<[1], [0], [0], [1], [0, 0, 1, 1], [], []>} : vector<8x32xbf16>, vector<32x64xbf16>, vector<8x64xf32> -> vector<8x64xf32>
    %c54 = arith.constant 54 : index
    %c0_75 = arith.constant 0 : index
    %287 = vector.load %arg2[%c54, %c0_75] : memref<136x128xf32, #tpu.memory_space<vmem>>, vector<1x64xf32>
    %288 = vector.broadcast %287 : vector<1x64xf32> to vector<8x64xf32>
    %289 = arith.addf %286, %288 : vector<8x64xf32>
    %290 = arith.mulf %289, %289 : vector<8x64xf32>
    %291 = arith.mulf %289, %290 : vector<8x64xf32>
    %cst_76 = arith.constant 4.471500e-02 : f32
    %292 = vector.broadcast %cst_76 : f32 to vector<8x64xf32>
    %293 = arith.mulf %292, %291 : vector<8x64xf32>
    %294 = arith.addf %289, %293 : vector<8x64xf32>
    %cst_77 = arith.constant 0.797884583 : f32
    %295 = vector.broadcast %cst_77 : f32 to vector<8x64xf32>
    %296 = arith.mulf %295, %294 : vector<8x64xf32>
    %297 = math.tanh %296 : vector<8x64xf32>
    %cst_78 = arith.constant 1.000000e+00 : f32
    %298 = vector.broadcast %cst_78 : f32 to vector<8x64xf32>
    %299 = arith.addf %298, %297 : vector<8x64xf32>
    %cst_79 = arith.constant 5.000000e-01 : f32
    %300 = vector.broadcast %cst_79 : f32 to vector<8x64xf32>
    %301 = arith.mulf %300, %299 : vector<8x64xf32>
    %302 = arith.mulf %289, %301 : vector<8x64xf32>
    %303 = arith.truncf %302 : vector<8x64xf32> to vector<8x64xbf16>
    %cst_80 = arith.constant dense<0.000000e+00> : vector<8x32xf32>
    %304 = tpu.matmul %303, %284, %cst_80 {dimension_numbers = #tpu.dot_dimension_numbers<[1], [0], [0], [1], [0, 0, 1, 1], [], []>} : vector<8x64xbf16>, vector<64x32xbf16>, vector<8x32xf32> -> vector<8x32xf32>
    %c55 = arith.constant 55 : index
    %c0_81 = arith.constant 0 : index
    %305 = vector.load %arg2[%c55, %c0_81] : memref<136x128xf32, #tpu.memory_space<vmem>>, vector<1x32xf32>
    %306 = vector.broadcast %305 : vector<1x32xf32> to vector<8x32xf32>
    %307 = arith.addf %304, %306 : vector<8x32xf32>
    %308 = arith.addf %282, %307 : vector<8x32xf32>
    %c52 = arith.constant 52 : index
    %c0_82 = arith.constant 0 : index
    %309 = vector.load %arg2[%c52, %c0_82] : memref<136x128xf32, #tpu.memory_space<vmem>>, vector<1x32xf32>
    %c53 = arith.constant 53 : index
    %c0_83 = arith.constant 0 : index
    %310 = vector.load %arg2[%c53, %c0_83] : memref<136x128xf32, #tpu.memory_space<vmem>>, vector<1x32xf32>
    %cst_84 = arith.constant dense<0.000000e+00> : vector<8xf32>
    %311 = vector.multi_reduction <add>, %308, %cst_84 [1] : vector<8x32xf32> to vector<8xf32>
    %312 = vector.shape_cast %311 : vector<8xf32> to vector<8x1xf32>
    %cst_85 = arith.constant 3.200000e+01 : f32
    %313 = vector.broadcast %cst_85 : f32 to vector<8x1xf32>
    %314 = arith.divf %312, %313 : vector<8x1xf32>
    %315 = vector.broadcast %314 : vector<8x1xf32> to vector<8x32xf32>
    %316 = arith.subf %308, %315 : vector<8x32xf32>
    %317 = arith.mulf %316, %316 : vector<8x32xf32>
    %cst_86 = arith.constant dense<0.000000e+00> : vector<8xf32>
    %318 = vector.multi_reduction <add>, %317, %cst_86 [1] : vector<8x32xf32> to vector<8xf32>
    %319 = vector.shape_cast %318 : vector<8xf32> to vector<8x1xf32>
    %cst_87 = arith.constant 3.200000e+01 : f32
    %320 = vector.broadcast %cst_87 : f32 to vector<8x1xf32>
    %321 = arith.divf %319, %320 : vector<8x1xf32>
    %322 = vector.broadcast %314 : vector<8x1xf32> to vector<8x32xf32>
    %323 = arith.subf %308, %322 : vector<8x32xf32>
    %cst_88 = arith.constant 9.99999996E-13 : f32
    %324 = vector.broadcast %cst_88 : f32 to vector<8x1xf32>
    %325 = arith.addf %321, %324 : vector<8x1xf32>
    %326 = math.rsqrt %325 : vector<8x1xf32>
    %327 = vector.broadcast %326 : vector<8x1xf32> to vector<8x32xf32>
    %328 = arith.mulf %323, %327 : vector<8x32xf32>
    %329 = vector.broadcast %309 : vector<1x32xf32> to vector<8x32xf32>
    %330 = arith.mulf %328, %329 : vector<8x32xf32>
    %331 = vector.broadcast %310 : vector<1x32xf32> to vector<8x32xf32>
    %332 = arith.addf %330, %331 : vector<8x32xf32>
    %333 = arith.mulf %332, %332 : vector<8x32xf32>
    %334 = arith.mulf %332, %333 : vector<8x32xf32>
    %cst_89 = arith.constant 4.471500e-02 : f32
    %335 = vector.broadcast %cst_89 : f32 to vector<8x32xf32>
    %336 = arith.mulf %335, %334 : vector<8x32xf32>
    %337 = arith.addf %332, %336 : vector<8x32xf32>
    %cst_90 = arith.constant 0.797884583 : f32
    %338 = vector.broadcast %cst_90 : f32 to vector<8x32xf32>
    %339 = arith.mulf %338, %337 : vector<8x32xf32>
    %340 = math.tanh %339 : vector<8x32xf32>
    %cst_91 = arith.constant 1.000000e+00 : f32
    %341 = vector.broadcast %cst_91 : f32 to vector<8x32xf32>
    %342 = arith.addf %341, %340 : vector<8x32xf32>
    %cst_92 = arith.constant 5.000000e-01 : f32
    %343 = vector.broadcast %cst_92 : f32 to vector<8x32xf32>
    %344 = arith.mulf %343, %342 : vector<8x32xf32>
    %345 = arith.mulf %332, %344 : vector<8x32xf32>
    %cst_93 = arith.constant dense<0.000000e+00> : vector<8xf32>
    %346 = vector.multi_reduction <add>, %345, %cst_93 [1] : vector<8x32xf32> to vector<8xf32>
    %347 = vector.shape_cast %346 : vector<8xf32> to vector<8x1xf32>
    %cst_94 = arith.constant dense<0.000000e+00> : vector<1xf32>
    %348 = vector.multi_reduction <add>, %347, %cst_94 [0] : vector<8x1xf32> to vector<1xf32>
    %349 = vector.shape_cast %348 : vector<1xf32> to vector<1x1xf32>
    %cst_95 = arith.constant 3.906250e-03 : f32
    %350 = vector.broadcast %cst_95 : f32 to vector<1x1xf32>
    %351 = arith.mulf %349, %350 : vector<1x1xf32>
    %352 = vector.broadcast %351 : vector<1x1xf32> to vector<8x32xf32>
    %353 = arith.subf %345, %352 : vector<8x32xf32>
    %354 = arith.mulf %353, %353 : vector<8x32xf32>
    %cst_96 = arith.constant dense<0.000000e+00> : vector<8xf32>
    %355 = vector.multi_reduction <add>, %354, %cst_96 [1] : vector<8x32xf32> to vector<8xf32>
    %356 = vector.shape_cast %355 : vector<8xf32> to vector<8x1xf32>
    %cst_97 = arith.constant dense<0.000000e+00> : vector<1xf32>
    %357 = vector.multi_reduction <add>, %356, %cst_97 [0] : vector<8x1xf32> to vector<1xf32>
    %358 = vector.shape_cast %357 : vector<1xf32> to vector<1x1xf32>
    %cst_98 = arith.constant 3.906250e-03 : f32
    %359 = vector.broadcast %cst_98 : f32 to vector<1x1xf32>
    %360 = arith.mulf %358, %359 : vector<1x1xf32>
    %cst_99 = arith.constant 9.99999974E-6 : f32
    %361 = vector.broadcast %cst_99 : f32 to vector<1x1xf32>
    %362 = arith.addf %360, %361 : vector<1x1xf32>
    %363 = math.rsqrt %362 : vector<1x1xf32>
    %364 = vector.broadcast %363 : vector<1x1xf32> to vector<8x32xf32>
    %365 = arith.mulf %353, %364 : vector<8x32xf32>
    %c16 = arith.constant 16 : index
    %c0_100 = arith.constant 0 : index
    %366 = vector.load %arg2[%c16, %c0_100] : memref<136x128xf32, #tpu.memory_space<vmem>>, vector<8x32xf32>
    %367 = arith.mulf %365, %366 : vector<8x32xf32>
    %c24 = arith.constant 24 : index
    %c0_101 = arith.constant 0 : index
    %368 = vector.load %arg2[%c24, %c0_101] : memref<136x128xf32, #tpu.memory_space<vmem>>, vector<8x32xf32>
    %369 = arith.addf %367, %368 : vector<8x32xf32>
    %c448 = arith.constant 448 : index
    %c0_102 = arith.constant 0 : index
    %370 = vector.load %arg3[%c448, %c0_102] : memref<480x128xbf16, #tpu.memory_space<vmem>>, vector<32x48xbf16>
    %371 = arith.truncf %369 : vector<8x32xf32> to vector<8x32xbf16>
    %cst_103 = arith.constant dense<0.000000e+00> : vector<8x48xf32>
    %372 = tpu.matmul %371, %370, %cst_103 {dimension_numbers = #tpu.dot_dimension_numbers<[1], [0], [0], [1], [0, 0, 1, 1], [], []>} : vector<8x32xbf16>, vector<32x48xbf16>, vector<8x48xf32> -> vector<8x48xf32>
    %c56 = arith.constant 56 : index
    %c0_104 = arith.constant 0 : index
    %373 = vector.load %arg2[%c56, %c0_104] : memref<136x128xf32, #tpu.memory_space<vmem>>, vector<8x48xf32>
    %c64 = arith.constant 64 : index
    %c0_105 = arith.constant 0 : index
    %374 = vector.load %arg2[%c64, %c0_105] : memref<136x128xf32, #tpu.memory_space<vmem>>, vector<48x6xf32>
    %375 = arith.mulf %372, %373 : vector<8x48xf32>
    %cst_106 = arith.constant dense<0.000000e+00> : vector<8x6xf32>
    %376 = tpu.matmul %375, %374, %cst_106 {dimension_numbers = #tpu.dot_dimension_numbers<[1], [0], [0], [1], [0, 0, 1, 1], [], []>} : vector<8x48xf32>, vector<48x6xf32>, vector<8x6xf32> -> vector<8x6xf32>
    %cst_107 = arith.constant dense<0.000000e+00> : vector<6xf32>
    %377 = vector.multi_reduction <add>, %376, %cst_107 [0] : vector<8x6xf32> to vector<6xf32>
    %378 = vector.shape_cast %377 : vector<6xf32> to vector<1x6xf32>
    %c32 = arith.constant 32 : index
    %c0_108 = arith.constant 0 : index
    %379 = vector.load %arg2[%c32, %c0_108] : memref<136x128xf32, #tpu.memory_space<vmem>>, vector<1x6xf32>
    %380 = arith.addf %378, %379 : vector<1x6xf32>
    %381 = vector.shape_cast %380 : vector<1x6xf32> to vector<1x6xf32>
    %382 = vector.broadcast %381 : vector<1x6xf32> to vector<8x6xf32>
    %c0_109 = arith.constant 0 : index
    %c0_110 = arith.constant 0 : index
    %c0_111 = arith.constant 0 : index
    %383 = vector.load %arg4[%c0_109, %c0_110, %c0_111] : memref<1x8x6xf32, #tpu.memory_space<vmem>>, vector<1x8x6xf32>
    %384 = vector.shape_cast %383 : vector<1x8x6xf32> to vector<8x6xf32>
    %385 = vector.shape_cast %382 : vector<8x6xf32> to vector<1x8x6xf32>
    tpu.vector_store %arg4[%c0_109, %c0_110, %c0_111], %385 {strides = array<i32>} : memref<1x8x6xf32, #tpu.memory_space<vmem>>, vector<1x8x6xf32>,
    return
  }
  func.func @transform_0(%arg0: i32) -> (i32, i32) {
    %c0_i32 = arith.constant 0 : i32
    %c0_i32_0 = arith.constant 0 : i32
    return %arg0, %c0_i32 : i32, i32
  }
  func.func @transform_1(%arg0: i32) -> (i32, i32) {
    %c0_i32 = arith.constant 0 : i32
    %c0_i32_0 = arith.constant 0 : i32
    %c0_i32_1 = arith.constant 0 : i32
    return %c0_i32, %c0_i32_0 : i32, i32
  }
  func.func @transform_2(%arg0: i32) -> (i32, i32) {
    %c0_i32 = arith.constant 0 : i32
    %c0_i32_0 = arith.constant 0 : i32
    %c0_i32_1 = arith.constant 0 : i32
    return %c0_i32, %c0_i32_0 : i32, i32
  }
  func.func @transform_3(%arg0: i32) -> (i32, i32, i32) {
    %c0_i32 = arith.constant 0 : i32
    %c0_i32_0 = arith.constant 0 : i32
    %c0_i32_1 = arith.constant 0 : i32
    return %arg0, %c0_i32, %c0_i32_0 : i32, i32, i32
  }
}

</mosaic_0001>

<llo_original>
// kernel: bert4ts_forward.1
$region0: #{bert4ts_forward.1}
  #allocation0 [shape = 'u32[]', space=smem, size = 0x4, offset = 0x4, fixed_abs, tag = 'smem constant byte address 0x4 - core index']
  #allocation1 [shape = 'u32[144,128]{1,0:T(1,128)}', space=vmem, size = 0x12000, scoped, tag = 'internal scratch']
  %s0 = inlined_call_operand.vmem [shape: f32[16,8], index: 0, kind: input, shape index: {}]
  %s1 = inlined_call_operand.hbm [shape: f32[136,128], index: 1, kind: input, shape index: {}]
  %s2 = inlined_call_operand.hbm [shape: bf16[480,128], index: 2, kind: input, shape index: {}]
  %s3 = inlined_call_operand.vmem [shape: f32[2,8,6], index: 3, kind: output, shape index: {}]
  %s4 = sld [smem:[#allocation0]]
  $region53: #{bert4ts_forward.1} parent=0
    _
  %s6 = ssub.s32 1, %s4
  %s7 = scalar_select 0, %s6, %s4
  $region1: #{bert4ts_forward.1} parent=0
    #allocation2 [shape = 'u8[69632]{0}', space=vmem, size = 0x11000, scoped, tag = 'input window, operand 1, single buffered']
    #allocation3 [shape = 's32[2]{0}', space=sflag, size = 0x8, scoped, tag = 'scoped memory for bert4ts_forward.1']
    #allocation4 [shape = 'u8[122880]{0}', space=vmem, size = 0x1e000, scoped, tag = 'input window, operand 2, single buffered']
    #allocation5 [shape = 's32[1]{0}', space=sflag, size = 0x4, scoped, tag = 'scoped memory for bert4ts_forward.1']
    %8 = vsyncpa [#allocation3], 0
    %9 = vsyncpa [#allocation5], 0
    loop: start=0, step=1, limit=4
    $region2: #{bert4ts_forward.1} parent=1 // loop_pre_header
      _
    $region3: #{bert4ts_forward.1} parent=1 // loop_header
      %s11 = sphi 0, %s15
      %p12 = scmp.ge.s32.totalorder %s11, 4
      %s21 = sphi 0, %s23
      %s24 = sphi 0, %s21
      %s25 = sphi 0, %s24
      %s41 = sphi 0, %s25
      %s45 = sphi 0, %s45
      %s47 = sphi 0, %s45
      %s48 = sphi 0, %s47
      %s62 = sphi 0, %s48
      %s66 = sphi 0, %s66
      %s68 = sphi 0, %s66
      %s69 = sphi 0, %s68
      %s83 = sphi 0, %s69
      %s89 = sphi 0, %s91
      %s92 = sphi 0, %s89
      %s93 = sphi 0, %s92
      %s109 = sphi 0, %s93
    $region4: #{bert4ts_forward.1} parent=1 // loop_header_branch
      %14 = sbr.rel (%p12) target = $region8
    $region5: #{bert4ts_forward.1} parent=1 // loop_body
      %s16 = ssub.s32 %s11, 1
      %s17 = ssub.s32 %s11, 2
      %s18 = sadd.s32 %s11, 1
      %s19 = ssub.s32 %s11, %s18
      %p20 = scmp.eq.s32.totalorder %s19, 0
      %s22 = sadd.s32 %s21, 1
      %s23 = scalar_select %p20, %s21, %s22
      %p26 = pneg %p20
      %p27 = scmp.eq.s32.totalorder %s11, 1
      %p28 = por %p26, %p27
      %p29 = scmp.ne.s32.totalorder %s21, %s24
      %p30 = scmp.eq.s32.totalorder %s11, 0
      %p31 = por %p29, %p30
      %p32 = scmp.ne.s32.totalorder %s21, %s24
      %p33 = scmp.eq.s32.totalorder %s16, 1
      %p34 = por %p32, %p33
      %p35 = scmp.ne.s32.totalorder %s24, %s25
      %p36 = scmp.eq.s32.totalorder %s16, 0
      %p37 = por %p35, %p36
      %p38 = scmp.ne.s32.totalorder %s24, %s25
      %p39 = scmp.eq.s32.totalorder %s17, 1
      %p40 = por %p38, %p39
      %p42 = scmp.ne.s32.totalorder %s25, %s41
      %p43 = scmp.eq.s32.totalorder %s17, 0
      %p44 = por %p42, %p43
      %s46 = sadd.s32 %s45, 1
      %p49 = scmp.eq.s32.totalorder %s11, 1
      %p50 = scmp.ne.s32.totalorder %s45, %s47
      %p51 = scmp.eq.s32.totalorder %s11, 0
      %p52 = por %p50, %p51
      %p53 = scmp.ne.s32.totalorder %s45, %s47
      %p54 = scmp.eq.s32.totalorder %s16, 1
      %p55 = por %p53, %p54
      %p56 = scmp.ne.s32.totalorder %s47, %s48
      %p57 = scmp.eq.s32.totalorder %s16, 0
      %p58 = por %p56, %p57
      %p59 = scmp.ne.s32.totalorder %s47, %s48
      %p60 = scmp.eq.s32.totalorder %s17, 1
      %p61 = por %p59, %p60
      %p63 = scmp.ne.s32.totalorder %s48, %s62
      %p64 = scmp.eq.s32.totalorder %s17, 0
      %p65 = por %p63, %p64
      %s67 = sadd.s32 %s66, 1
      %p70 = scmp.eq.s32.totalorder %s11, 1
      %p71 = scmp.ne.s32.totalorder %s66, %s68
      %p72 = scmp.eq.s32.totalorder %s11, 0
      %p73 = por %p71, %p72
      %p74 = scmp.ne.s32.totalorder %s66, %s68
      %p75 = scmp.eq.s32.totalorder %s16, 1
      %p76 = por %p74, %p75
      %p77 = scmp.ne.s32.totalorder %s68, %s69
      %p78 = scmp.eq.s32.totalorder %s16, 0
      %p79 = por %p77, %p78
      %p80 = scmp.ne.s32.totalorder %s68, %s69
      %p81 = scmp.eq.s32.totalorder %s17, 1
      %p82 = por %p80, %p81
      %p84 = scmp.ne.s32.totalorder %s69, %s83
      %p85 = scmp.eq.s32.totalorder %s17, 0
      %p86 = por %p84, %p85
      %s87 = ssub.s32 %s11, %s18
      %p88 = scmp.eq.s32.totalorder %s87, 0
      %s90 = sadd.s32 %s89, 1
      %s91 = scalar_select %p88, %s89, %s90
      %p94 = pneg %p88
      %p95 = scmp.eq.s32.totalorder %s11, 1
      %p96 = por %p94, %p95
      %p97 = scmp.ne.s32.totalorder %s89, %s92
      %p98 = scmp.eq.s32.totalorder %s11, 0
      %p99 = por %p97, %p98
      %p100 = scmp.ne.s32.totalorder %s89, %s92
      %p101 = scmp.eq.s32.totalorder %s16, 1
      %p102 = por %p100, %p101
      %p103 = scmp.ne.s32.totalorder %s92, %s93
      %p104 = scmp.eq.s32.totalorder %s16, 0
      %p105 = por %p103, %p104
      %p106 = scmp.ne.s32.totalorder %s92, %s93
      %p107 = scmp.eq.s32.totalorder %s17, 1
      %p108 = por %p106, %p107
      %p110 = scmp.ne.s32.totalorder %s93, %s109
      %p111 = scmp.eq.s32.totalorder %s17, 0
      %p112 = por %p110, %p111
      %p113 = scmp.le.s32.totalorder 1, %s11
      %p114 = scmp.lt.s32.totalorder %s11, 3
      %p115 = pnand %p113, %p114
      %p116 = pneg %p115
      // Predicated region
      $region9: #{bert4ts_forward.1} parent=5 // pred_check
        _
      $region10: #{bert4ts_forward.1} parent=5 // pred_check_branch
        %118 = sbr.rel (%p115) target = $region12
      $region11: #{bert4ts_forward.1} parent=5 // pred_region
        %s119 = ssub.s32 %s11, 1
        // Predicated region
        $region13: #{bert4ts_forward.1} parent=11 // pred_check
          %p120 = pneg %p58
        $region14: #{bert4ts_forward.1} parent=11 // pred_check_branch
          %122 = sbr.rel (%p120) target = $region16
        $region15: #{bert4ts_forward.1} parent=11 // pred_region
          %s124 = ssub.s32 2176, 2176
          %125 = vsyncadd [#allocation3], %s124
          %s126 = sshll.u32 [#allocation2], 4
          %s127 = int_to_ptr.vmem [resolvable:$true] %s126
          %132 = dma.hbm_to_vmem [thread:$0]  %s1, 2176, %s127, [#allocation3], 128, 128, 8
        $region16: #{bert4ts_forward.1} parent=11 // pred_fallthru
          _
        // Predicated region
        $region17: #{bert4ts_forward.1} parent=11 // pred_check
          %p133 = pneg %p79
        $region18: #{bert4ts_forward.1} parent=11 // pred_check_branch
          %135 = sbr.rel (%p133) target = $region20
        $region19: #{bert4ts_forward.1} parent=11 // pred_region
          %s137 = ssub.s32 3840, 3840
          %138 = vsyncadd [#allocation5], %s137
          %s139 = sshll.u32 [#allocation4], 4
          %s140 = int_to_ptr.vmem [resolvable:$true] %s139
          %145 = dma.hbm_to_vmem [thread:$0]  %s2, 3840, %s140, [#allocation5], 64, 64, 4
        $region20: #{bert4ts_forward.1} parent=11 // pred_fallthru
          _
      $region12: #{bert4ts_forward.1} parent=5 // pred_fallthru
        _
      %p146 = scmp.lt.s32.totalorder %s11, 2
      // Predicated region
      $region21: #{bert4ts_forward.1} parent=5 // pred_check
        %p147 = pneg %p146
      $region22: #{bert4ts_forward.1} parent=5 // pred_check_branch
        %149 = sbr.rel (%p147) target = $region24
      $region23: #{bert4ts_forward.1} parent=5 // pred_region
        // Predicated region
        $region25: #{bert4ts_forward.1} parent=23 // pred_check
          %p150 = pneg %p31
        $region26: #{bert4ts_forward.1} parent=23 // pred_check_branch
          %152 = sbr.rel (%p150) target = $region28
        $region27: #{bert4ts_forward.1} parent=23 // pred_region
          %p153 = scmp.lt.s32.totalorder %s11, 1
          %s154 = scalar_select %p153, %s11, 1
          %s155 = smul.addr %s154, 8
          %s156 = scalar_lea.vmem %s0, %s155
        $region28: #{bert4ts_forward.1} parent=23 // pred_fallthru
          _
      $region24: #{bert4ts_forward.1} parent=5 // pred_fallthru
        _
      %p157 = scmp.le.s32.totalorder 1, %s11
      %p158 = scmp.lt.s32.totalorder %s11, 3
      %p159 = pnand %p157, %p158
      %p160 = pneg %p159
      // Predicated region
      $region29: #{bert4ts_forward.1} parent=5 // pred_check
        _
      $region30: #{bert4ts_forward.1} parent=5 // pred_check_branch
        %162 = sbr.rel (%p159) target = $region32
      $region31: #{bert4ts_forward.1} parent=5 // pred_region
        %s163 = ssub.s32 %s11, 1
        // Predicated region
        $region33: #{bert4ts_forward.1} parent=31 // pred_check
          %p164 = pneg %p58
        $region34: #{bert4ts_forward.1} parent=31 // pred_check_branch
          %166 = sbr.rel (%p164) target = $region36
        $region35: #{bert4ts_forward.1} parent=31 // pred_region
          %167 = dma.done [#allocation3], 2176
        $region36: #{bert4ts_forward.1} parent=31 // pred_fallthru
          _
        // Predicated region
        $region37: #{bert4ts_forward.1} parent=31 // pred_check
          %p168 = pneg %p79
        $region38: #{bert4ts_forward.1} parent=31 // pred_check_branch
          %170 = sbr.rel (%p168) target = $region40
        $region39: #{bert4ts_forward.1} parent=31 // pred_region
          %171 = dma.done [#allocation5], 3840
        $region40: #{bert4ts_forward.1} parent=31 // pred_fallthru
          _
        %p172 = scmp.lt.s32.totalorder %s16, 1
        %s173 = scalar_select %p172, %s16, 1
        %s174 = smul.addr %s173, 8
        %s175 = scalar_lea.vmem %s0, %s174
        %p176 = pneg %p37
        %p177 = pneg %p34
        %p178 = pneg %p58
        %p179 = pneg %p55
        %p180 = pneg %p79
        %p181 = pneg %p76
        %p182 = pneg %p105
        %p183 = pneg %p102
        %p184 = scmp.lt.s32.totalorder %s16, 1
        %s185 = scalar_select %p184, %s16, 1
        %s186 = smul.addr %s185, 8
        %s187 = scalar_lea.vmem %s3, %s186
        %p188 = scmp.lt.s32.totalorder %s16, 1
        %s189 = scalar_select %p188, %s16, 1
        %s190 = smul.addr %s189, 8
        %s191 = scalar_lea.vmem %s0, %s190
        %p192 = scmp.lt.s32.totalorder %s16, 1
        %s193 = scalar_select %p192, %s16, 1
        %s194 = smul.addr %s193, 8
        %s195 = scalar_lea.vmem %s3, %s194
        %v197 = vld [vmem:[%s191] sm:$0xff]
        %v198 = vld [vmem:[#allocation2 + $0x70] sm:$0xff]
        %v199 = vld [vmem:[#allocation2] sm:$0x1]
        %v200 = vlaneseq
        %v201 = vshrl.u32 %v200, 7
        %v202 = vsub.s32 0, %v201
        %v203 = vrot.slane %v199, %v202
        %vm204 = vcmask 64512
        %v206 = vsel %vm204, %v197, 0
        %208 = vmatprep.subr.mxu0 0.0
        %209 = vmatpush1.msra.mxu0 %v198
        %210 = vmatprep.subr.mxu0 0.0
        %211 = vmatpush1.msra.mxu0 0.0
        %212 = vmatprep.subr.mxu0 0.0
        %213 = vmatpush1.msra.mxu0 0.0
        %214 = vmatprep.subr.mxu0 0.0
        %215 = vmatpush1.msra.mxu0 0.0
        %216 = vmatprep.subr.mxu0 0.0
        %217 = vmatpush1.msra.mxu0 0.0
        %218 = vmatprep.subr.mxu0 0.0
        %219 = vmatpush1.msra.mxu0 0.0
        %220 = vmatprep.subr.mxu0 0.0
        %221 = vmatpush1.msra.mxu0 0.0
        %222 = vmatprep.subr.mxu0 0.0
        %223 = vmatpush1.msra.mxu0 0.0
        %224 = vmatprep.subr.mxu0 0.0
        %225 = vmatpush1.msra.mxu0 0.0
        %226 = vmatprep.subr.mxu0 0.0
        %227 = vmatpush1.msra.mxu0 0.0
        %228 = vmatprep.subr.mxu0 0.0
        %229 = vmatpush1.msra.mxu0 0.0
        %230 = vmatprep.subr.mxu0 0.0
        %231 = vmatpush1.msra.mxu0 0.0
        %232 = vmatprep.subr.mxu0 0.0
        %233 = vmatpush1.msra.mxu0 0.0
        %234 = vmatprep.subr.mxu0 0.0
        %235 = vmatpush1.msra.mxu0 0.0
        %236 = vmatprep.subr.mxu0 0.0
        %237 = vmatpush1.msra.mxu0 0.0
        %238 = vmatprep.subr.mxu0 0.0
        %239 = vmatpush1.msra.mxu0 0.0
        %240 = vmatprep.subr.mxu0 0.0
        %241 = vmatpush1.msra.mxu0 0.0
        %242 = vmatprep.subr.mxu0 0.0
        %243 = vmatpush1.msra.mxu0 0.0
        %244 = vmatprep.subr.mxu0 0.0
        %245 = vmatpush1.msra.mxu0 0.0
        %246 = vmatprep.subr.mxu0 0.0
        %247 = vmatpush1.msra.mxu0 0.0
        %248 = vmatprep.subr.mxu0 0.0
        %249 = vmatpush1.msra.mxu0 0.0
        %250 = vmatprep.subr.mxu0 0.0
        %251 = vmatpush1.msra.mxu0 0.0
        %252 = vmatprep.subr.mxu0 0.0
        %253 = vmatpush1.msra.mxu0 0.0
        %254 = vmatprep.subr.mxu0 0.0
        %255 = vmatpush1.msra.mxu0 0.0
        %256 = vmatprep.subr.mxu0 0.0
        %257 = vmatpush1.msra.mxu0 0.0
        %258 = vmatprep.subr.mxu0 0.0
        %259 = vmatpush1.msra.mxu0 0.0
        %260 = vmatprep.subr.mxu0 0.0
        %261 = vmatpush1.msra.mxu0 0.0
        %262 = vmatprep.subr.mxu0 0.0
        %263 = vmatpush1.msra.mxu0 0.0
        %264 = vmatprep.subr.mxu0 0.0
        %265 = vmatpush1.msra.mxu0 0.0
        %266 = vmatprep.subr.mxu0 0.0
        %267 = vmatpush1.msra.mxu0 0.0
        %268 = vmatprep.subr.mxu0 0.0
        %269 = vmatpush1.msra.mxu0 0.0
        %270 = vmatprep.subr.mxu0 0.0
        %271 = vmatpush1.msra.mxu0 0.0
        %272 = vmatprep.mubr.f32.mxu0 0.0
        %273 = vmatmul.mubr.f32.gmra.mrb[0].mxu0 %v206
        %v274 = vpop.f32.mrb[0].mxu0
        %v275 = vadd.f32 %v203, %v274
        %v276 = vpop.f32.mrb[0].mxu0
        %277 = vdwg.mxu0
        %v278 = vld [vmem:[#allocation2 + $0x78] sm:$0xff]
        %v279 = vld [vmem:[#allocation2 + $0x80] sm:$0xff]
        %v280 = vld [vmem:[#allocation2 + $0x1] sm:$0x1]
        %vm281 = vcmask 130048
        %v283 = vsel %vm281, %v275, 0
        %285 = vmatprep.subr.mxu0 0.0
        %286 = vmatpush1.msra.mxu0 %v278
        %287 = vmatprep.subr.mxu0 0.0
        %288 = vmatpush1.msra.mxu0 %v279
        %289 = vmatprep.subr.mxu0 0.0
        %290 = vmatpush1.msra.mxu0 0.0
        %291 = vmatprep.subr.mxu0 0.0
        %292 = vmatpush1.msra.mxu0 0.0
        %293 = vmatprep.subr.mxu0 0.0
        %294 = vmatpush1.msra.mxu0 0.0
        %295 = vmatprep.subr.mxu0 0.0
        %296 = vmatpush1.msra.mxu0 0.0
        %297 = vmatprep.subr.mxu0 0.0
        %298 = vmatpush1.msra.mxu0 0.0
        %299 = vmatprep.subr.mxu0 0.0
        %300 = vmatpush1.msra.mxu0 0.0
        %301 = vmatprep.subr.mxu0 0.0
        %302 = vmatpush1.msra.mxu0 0.0
        %303 = vmatprep.subr.mxu0 0.0
        %304 = vmatpush1.msra.mxu0 0.0
        %305 = vmatprep.subr.mxu0 0.0
        %306 = vmatpush1.msra.mxu0 0.0
        %307 = vmatprep.subr.mxu0 0.0
        %308 = vmatpush1.msra.mxu0 0.0
        %309 = vmatprep.subr.mxu0 0.0
        %310 = vmatpush1.msra.mxu0 0.0
        %311 = vmatprep.subr.mxu0 0.0
        %312 = vmatpush1.msra.mxu0 0.0
        %313 = vmatprep.subr.mxu0 0.0
        %314 = vmatpush1.msra.mxu0 0.0
        %315 = vmatprep.subr.mxu0 0.0
        %316 = vmatpush1.msra.mxu0 0.0
        %317 = vmatprep.subr.mxu0 0.0
        %318 = vmatpush1.msra.mxu0 0.0
        %319 = vmatprep.subr.mxu0 0.0
        %320 = vmatpush1.msra.mxu0 0.0
        %321 = vmatprep.subr.mxu0 0.0
        %322 = vmatpush1.msra.mxu0 0.0
        %323 = vmatprep.subr.mxu0 0.0
        %324 = vmatpush1.msra.mxu0 0.0
        %325 = vmatprep.subr.mxu0 0.0
        %326 = vmatpush1.msra.mxu0 0.0
        %327 = vmatprep.subr.mxu0 0.0
        %328 = vmatpush1.msra.mxu0 0.0
        %329 = vmatprep.subr.mxu0 0.0
        %330 = vmatpush1.msra.mxu0 0.0
        %331 = vmatprep.subr.mxu0 0.0
        %332 = vmatpush1.msra.mxu0 0.0
        %333 = vmatprep.subr.mxu0 0.0
        %334 = vmatpush1.msra.mxu0 0.0
        %335 = vmatprep.subr.mxu0 0.0
        %336 = vmatpush1.msra.mxu0 0.0
        %337 = vmatprep.subr.mxu0 0.0
        %338 = vmatpush1.msra.mxu0 0.0
        %339 = vmatprep.subr.mxu0 0.0
        %340 = vmatpush1.msra.mxu0 0.0
        %341 = vmatprep.subr.mxu0 0.0
        %342 = vmatpush1.msra.mxu0 0.0
        %343 = vmatprep.subr.mxu0 0.0
        %344 = vmatpush1.msra.mxu0 0.0
        %345 = vmatprep.subr.mxu0 0.0
        %346 = vmatpush1.msra.mxu0 0.0
        %347 = vmatprep.subr.mxu0 0.0
        %348 = vmatpush1.msra.mxu0 0.0
        %349 = vmatprep.mubr.f32.mxu0 0.0
        %350 = vmatmul.mubr.f32.gmra.mrb[0].mxu0 %v283
        %v351 = vpop.f32.mrb[0].mxu0
        %v352 = vadd.f32 0.0, %v351
        %v353 = vpop.f32.mrb[0].mxu0
        %354 = vdwg.mxu0
        %v355 = vmul.f32 %v352, 2.0
        %v356 = vlaneseq
        %v357 = vshrl.u32 %v356, 7
        %v358 = vsub.s32 0, %v357
        %v359 = vrot.slane %v280, %v358
        %v360 = vsub.f32 %v359, %v355
        %361 = vmin.xlane.f32.xlu0 %v360
        %v362 = vpop.xlane.xlu0 %361
        %v363 = vlaneseq
        %v364 = vand.u32 %v363, 127
        %vm365 = vcmp.le.f32.partialorder %v360, %v362
        %v366 = vsel %vm365, %v364, 128
        %v367 = vand.u32 %v366, 65535
        %v368 = vshra.s32 %v366, 16
        %v369 = vcvt.s32.f32 %v367
        %v370 = vcvt.s32.f32 %v368
        %371 = vmin.xlane.f32.xlu0 %v370
        %v372 = vpop.xlane.xlu0 %371
        %vm373 = vcmp.eq.f32.partialorder %v370, %v372
        %v374 = vsel %vm373, %v369, inf
        %375 = vmin.xlane.f32.xlu0 %v374
        %v376 = vpop.xlane.xlu0 %375
        %v377 = vcvt.f32.s32 %v376
        %v378 = vcvt.f32.s32 %v372
        %v379 = vshll.u32 %v378, 16
        %v380 = vadd.s32 %v379, %v377
        %vm381 = vcmp.eq.s32.totalorder %v364, %v380
        %v382 = vsel %vm381, 1, 0
        %v383 = vcvt.s32.f32 %v382
        %v384 = vpack.c.bf16 %v383, %v383
        %v385 = vld [vmem:[#allocation4] sm:$0xf]
        %v386 = vld [vmem:[#allocation4 + $0x4] sm:$0xf]
        %v387 = vld [vmem:[#allocation4 + $0x8] sm:$0xf]
        %v388 = vld [vmem:[#allocation4 + $0xc] sm:$0xf]
        %v389 = vld [vmem:[#allocation4 + $0x10] sm:$0xf]
        %v390 = vld [vmem:[#allocation4 + $0x14] sm:$0xf]
        %v391 = vld [vmem:[#allocation4 + $0x18] sm:$0xf]
        %v392 = vld [vmem:[#allocation4 + $0x1c] sm:$0xf]
        %v393 = vld [vmem:[#allocation4 + $0x20] sm:$0xf]
        %v394 = vld [vmem:[#allocation4 + $0x24] sm:$0xf]
        %v395 = vld [vmem:[#allocation4 + $0x28] sm:$0xf]
        %v396 = vld [vmem:[#allocation4 + $0x2c] sm:$0xf]
        %v397 = vld [vmem:[#allocation4 + $0x30] sm:$0xf]
        %v398 = vld [vmem:[#allocation4 + $0x34] sm:$0xf]
        %v399 = vld [vmem:[#allocation4 + $0x38] sm:$0xf]
        %v400 = vld [vmem:[#allocation4 + $0x3c] sm:$0xf]
        %v401 = vld [vmem:[#allocation2 + $0x8] sm:$0xff]
        %v418 = vunpack.c.l.b16 %v385
        %v419 = vunpack.c.l.b16 %v386
        %v420 = vunpack.c.l.b16 %v387
        %v421 = vunpack.c.l.b16 %v388
        %v422 = vunpack.c.l.b16 %v389
        %v423 = vunpack.c.l.b16 %v390
        %v424 = vunpack.c.l.b16 %v391
        %v425 = vunpack.c.l.b16 %v392
        %v426 = vunpack.c.l.b16 %v393
        %v427 = vunpack.c.l.b16 %v394
        %v428 = vunpack.c.l.b16 %v395
        %v429 = vunpack.c.l.b16 %v396
        %v430 = vunpack.c.l.b16 %v397
        %v431 = vunpack.c.l.b16 %v398
        %v432 = vunpack.c.l.b16 %v399
        %v433 = vunpack.c.l.b16 %v400
        %v434 = vpack.c.b16 %v419, %v418
        %v435 = vpack.c.b16 %v421, %v420
        %v436 = vpack.c.b16 %v423, %v422
        %v437 = vpack.c.b16 %v425, %v424
        %v438 = vpack.c.b16 %v427, %v426
        %v439 = vpack.c.b16 %v429, %v428
        %v440 = vpack.c.b16 %v431, %v430
        %v441 = vpack.c.b16 %v433, %v432
        %450 = vmatprep.subr.bf16.mxu0 0
        %451 = vmatpush1.bf16.msra.mxu0 %v434
        %452 = vmatprep.subr.bf16.mxu0 0
        %453 = vmatpush1.bf16.msra.mxu0 %v435
        %454 = vmatprep.subr.bf16.mxu0 0
        %455 = vmatpush1.bf16.msra.mxu0 %v436
        %456 = vmatprep.subr.bf16.mxu0 0
        %457 = vmatpush1.bf16.msra.mxu0 %v437
        %458 = vmatprep.subr.bf16.mxu0 0
        %459 = vmatpush1.bf16.msra.mxu0 %v438
        %460 = vmatprep.subr.bf16.mxu0 0
        %461 = vmatpush1.bf16.msra.mxu0 %v439
        %462 = vmatprep.subr.bf16.mxu0 0
        %463 = vmatpush1.bf16.msra.mxu0 %v440
        %464 = vmatprep.subr.bf16.mxu0 0
        %465 = vmatpush1.bf16.msra.mxu0 %v441
        %466 = vmatprep.subr.bf16.mxu0 0
        %467 = vmatpush1.bf16.msra.mxu0 0
        %468 = vmatprep.subr.bf16.mxu0 0
        %469 = vmatpush1.bf16.msra.mxu0 0
        %470 = vmatprep.subr.bf16.mxu0 0
        %471 = vmatpush1.bf16.msra.mxu0 0
        %472 = vmatprep.subr.bf16.mxu0 0
        %473 = vmatpush1.bf16.msra.mxu0 0
        %474 = vmatprep.subr.bf16.mxu0 0
        %475 = vmatpush1.bf16.msra.mxu0 0
        %476 = vmatprep.subr.bf16.mxu0 0
        %477 = vmatpush1.bf16.msra.mxu0 0
        %478 = vmatprep.subr.bf16.mxu0 0
        %479 = vmatpush1.bf16.msra.mxu0 0
        %480 = vmatprep.subr.bf16.mxu0 0
        %481 = vmatpush1.bf16.msra.mxu0 0
        %482 = vmatprep.mubr.bf16.mxu0 0
        %483 = vmatmul.mubr.bf16.gmra.mrb[0].mxu0 %v384
        %v484 = vpop.f32.mrb[0].mxu0
        %v485 = vadd.f32 %v401, %v484
        %v486 = vpop.f32.mrb[0].mxu0
        %v487 = vpop.f32.mrb[0].mxu0
        %v488 = vpop.f32.mrb[0].mxu0
        %489 = vdwg.mxu0
        %v490 = vld [vmem:[#allocation2 + $0x2] sm:$0x1]
        %v491 = vld [vmem:[#allocation2 + $0x3] sm:$0x1]
        %vm492 = vcmask 261120
        %v493 = vsel %vm492, %v485, 0.0
        %494 = vadd.xlane.f32.xlu0 %v493
        %v495 = vpop.xlane.xlu0 %494
        %v496 = vrcp.pop 32.0
        %v497 = vmul.f32 %v495, %v496
        %v498 = vsub.f32 %v485, %v497
        %v499 = vmul.f32 %v498, %v498
        %v500 = vsel %vm492, %v499, 0.0
        %501 = vadd.xlane.f32.xlu0 %v500
        %v502 = vpop.xlane.xlu0 %501
        %v503 = vmul.f32 %v502, %v496
        %v504 = vadd.f32 %v503, 1e-12
        %v505 = vrsqrt.pop %v504
        %v506 = vmul.f32 %v498, %v505
        %v507 = vlaneseq
        %v508 = vshrl.u32 %v507, 7
        %v509 = vsub.s32 0, %v508
        %v510 = vrot.slane %v490, %v509
        %v511 = vmul.f32 %v506, %v510
        %v512 = vlaneseq
        %v513 = vshrl.u32 %v512, 7
        %v514 = vsub.s32 0, %v513
        %v515 = vrot.slane %v491, %v514
        %v516 = vadd.f32 %v511, %v515
        %v517 = vld [vmem:[#allocation4 + $0x40] sm:$0xf]
        %v518 = vld [vmem:[#allocation4 + $0x44] sm:$0xf]
        %v519 = vld [vmem:[#allocation4 + $0x48] sm:$0xf]
        %v520 = vld [vmem:[#allocation4 + $0x4c] sm:$0xf]
        %v521 = vpack.c.bf16 %v516, %v516
        %v522 = vld [vmem:[#allocation2 + $0x28] sm:$0x1]
        %v523 = vlaneseq
        %v524 = vshrl.u32 %v523, 7
        %v525 = vsub.s32 0, %v524
        %v526 = vrot.slane %v522, %v525
        %v531 = vunpack.c.l.b16 %v517
        %v532 = vunpack.c.l.b16 %v518
        %v533 = vunpack.c.l.b16 %v519
        %v534 = vunpack.c.l.b16 %v520
        %v535 = vpack.c.b16 %v532, %v531
        %v536 = vpack.c.b16 %v534, %v533
        %v540 = vsel %vm492, %v521, 0
        %542 = vmatprep.subr.bf16.mxu0 0
        %543 = vmatpush1.bf16.msra.mxu0 %v535
        %544 = vmatprep.subr.bf16.mxu0 0
        %545 = vmatpush1.bf16.msra.mxu0 %v536
        %546 = vmatprep.subr.bf16.mxu0 0
        %547 = vmatpush1.bf16.msra.mxu0 0
        %548 = vmatprep.subr.bf16.mxu0 0
        %549 = vmatpush1.bf16.msra.mxu0 0
        %550 = vmatprep.subr.bf16.mxu0 0
        %551 = vmatpush1.bf16.msra.mxu0 0
        %552 = vmatprep.subr.bf16.mxu0 0
        %553 = vmatpush1.bf16.msra.mxu0 0
        %554 = vmatprep.subr.bf16.mxu0 0
        %555 = vmatpush1.bf16.msra.mxu0 0
        %556 = vmatprep.subr.bf16.mxu0 0
        %557 = vmatpush1.bf16.msra.mxu0 0
        %558 = vmatprep.subr.bf16.mxu0 0
        %559 = vmatpush1.bf16.msra.mxu0 0
        %560 = vmatprep.subr.bf16.mxu0 0
        %561 = vmatpush1.bf16.msra.mxu0 0
        %562 = vmatprep.subr.bf16.mxu0 0
        %563 = vmatpush1.bf16.msra.mxu0 0
        %564 = vmatprep.subr.bf16.mxu0 0
        %565 = vmatpush1.bf16.msra.mxu0 0
        %566 = vmatprep.subr.bf16.mxu0 0
        %567 = vmatpush1.bf16.msra.mxu0 0
        %568 = vmatprep.subr.bf16.mxu0 0
        %569 = vmatpush1.bf16.msra.mxu0 0
        %570 = vmatprep.subr.bf16.mxu0 0
        %571 = vmatpush1.bf16.msra.mxu0 0
        %572 = vmatprep.subr.bf16.mxu0 0
        %573 = vmatpush1.bf16.msra.mxu0 0
        %574 = vmatprep.mubr.bf16.mxu0 0
        %575 = vmatmul.mubr.bf16.gmra.mrb[0].mxu0 %v540
        %v576 = vpop.f32.mrb[0].mxu0
        %v577 = vadd.f32 %v526, %v576
        %v578 = vpop.f32.mrb[0].mxu0
        %v579 = vpop.f32.mrb[0].mxu0
        %v580 = vpop.f32.mrb[0].mxu0
        %581 = vdwg.mxu0
        %583 = vrot.lane.b32.xlu0 %v577, 120
        %v584 = vpop.permute.xlu0 %583
        %586 = vrot.lane.b32.xlu0 %v577, 112
        %v587 = vpop.permute.xlu0 %586
        %589 = vrot.lane.b32.xlu0 %v577, 104
        %v590 = vpop.permute.xlu0 %589
        %v592 = vpack.c.bf16 %v577, %v577
        %v593 = vpack.c.bf16 %v584, %v584
        %v594 = vpack.c.bf16 %v587, %v587
        %v595 = vpack.c.bf16 %v590, %v590
        %597 = vrot.lane.b32.xlu0 %v592, 96
        %v598 = vpop.permute.xlu0 %597
        %v600 = vsel %vm204, %v592, 0
        %v603 = vsel %vm204, %v598, 0
        %605 = vmatprep.subr.bf16.mxu0 0
        %606 = vmatpush1.bf16.xpose.msra.mxu0 %v603
        %607 = vmatprep.subr.bf16.mxu0 0
        %608 = vmatpush1.bf16.xpose.msra.mxu0 0
        %609 = vmatprep.subr.bf16.mxu0 0
        %610 = vmatpush1.bf16.xpose.msra.mxu0 0
        %611 = vmatprep.subr.bf16.mxu0 0
        %612 = vmatpush1.bf16.xpose.msra.mxu0 0
        %613 = vmatprep.subr.bf16.mxu0 0
        %614 = vmatpush1.bf16.xpose.msra.mxu0 0
        %615 = vmatprep.subr.bf16.mxu0 0
        %616 = vmatpush1.bf16.xpose.msra.mxu0 0
        %617 = vmatprep.subr.bf16.mxu0 0
        %618 = vmatpush1.bf16.xpose.msra.mxu0 0
        %619 = vmatprep.subr.bf16.mxu0 0
        %620 = vmatpush1.bf16.xpose.msra.mxu0 0
        %621 = vmatprep.subr.bf16.mxu0 0
        %622 = vmatpush1.bf16.xpose.msra.mxu0 0
        %623 = vmatprep.subr.bf16.mxu0 0
        %624 = vmatpush1.bf16.xpose.msra.mxu0 0
        %625 = vmatprep.subr.bf16.mxu0 0
        %626 = vmatpush1.bf16.xpose.msra.mxu0 0
        %627 = vmatprep.subr.bf16.mxu0 0
        %628 = vmatpush1.bf16.xpose.msra.mxu0 0
        %629 = vmatprep.subr.bf16.mxu0 0
        %630 = vmatpush1.bf16.xpose.msra.mxu0 0
        %631 = vmatprep.subr.bf16.mxu0 0
        %632 = vmatpush1.bf16.xpose.msra.mxu0 0
        %633 = vmatprep.subr.bf16.mxu0 0
        %634 = vmatpush1.bf16.xpose.msra.mxu0 0
        %635 = vmatprep.subr.bf16.mxu0 0
        %636 = vmatpush1.bf16.xpose.msra.mxu0 0
        %637 = vmatprep.mubr.bf16.mxu0 0
        %638 = vmatmul.mubr.bf16.gmra.mrb[0].mxu0 %v600
        %v639 = vpop.f32.mrb[0].mxu0
        %v640 = vadd.f32 0.0, %v639
        %v641 = vpop.f32.mrb[0].mxu0
        %v642 = vpop.f32.mrb[0].mxu0
        %v643 = vpop.f32.mrb[0].mxu0
        %644 = vdwg.mxu0
        %646 = vrot.lane.b32.xlu0 %v593, 96
        %v647 = vpop.permute.xlu0 %646
        %v649 = vsel %vm204, %v593, 0
        %v652 = vsel %vm204, %v647, 0
        %654 = vmatprep.subr.bf16.mxu0 0
        %655 = vmatpush1.bf16.xpose.msra.mxu0 %v652
        %656 = vmatprep.subr.bf16.mxu0 0
        %657 = vmatpush1.bf16.xpose.msra.mxu0 0
        %658 = vmatprep.subr.bf16.mxu0 0
        %659 = vmatpush1.bf16.xpose.msra.mxu0 0
        %660 = vmatprep.subr.bf16.mxu0 0
        %661 = vmatpush1.bf16.xpose.msra.mxu0 0
        %662 = vmatprep.subr.bf16.mxu0 0
        %663 = vmatpush1.bf16.xpose.msra.mxu0 0
        %664 = vmatprep.subr.bf16.mxu0 0
        %665 = vmatpush1.bf16.xpose.msra.mxu0 0
        %666 = vmatprep.subr.bf16.mxu0 0
        %667 = vmatpush1.bf16.xpose.msra.mxu0 0
        %668 = vmatprep.subr.bf16.mxu0 0
        %669 = vmatpush1.bf16.xpose.msra.mxu0 0
        %670 = vmatprep.subr.bf16.mxu0 0
        %671 = vmatpush1.bf16.xpose.msra.mxu0 0
        %672 = vmatprep.subr.bf16.mxu0 0
        %673 = vmatpush1.bf16.xpose.msra.mxu0 0
        %674 = vmatprep.subr.bf16.mxu0 0
        %675 = vmatpush1.bf16.xpose.msra.mxu0 0
        %676 = vmatprep.subr.bf16.mxu0 0
        %677 = vmatpush1.bf16.xpose.msra.mxu0 0
        %678 = vmatprep.subr.bf16.mxu0 0
        %679 = vmatpush1.bf16.xpose.msra.mxu0 0
        %680 = vmatprep.subr.bf16.mxu0 0
        %681 = vmatpush1.bf16.xpose.msra.mxu0 0
        %682 = vmatprep.subr.bf16.mxu0 0
        %683 = vmatpush1.bf16.xpose.msra.mxu0 0
        %684 = vmatprep.subr.bf16.mxu0 0
        %685 = vmatpush1.bf16.xpose.msra.mxu0 0
        %686 = vmatprep.mubr.bf16.mxu0 0
        %687 = vmatmul.mubr.bf16.gmra.mrb[0].mxu0 %v649
        %v688 = vpop.f32.mrb[0].mxu0
        %v689 = vadd.f32 0.0, %v688
        %v690 = vpop.f32.mrb[0].mxu0
        %v691 = vpop.f32.mrb[0].mxu0
        %v692 = vpop.f32.mrb[0].mxu0
        %693 = vdwg.mxu0
        %695 = vrot.lane.b32.xlu0 %v594, 96
        %v696 = vpop.permute.xlu0 %695
        %v698 = vsel %vm204, %v594, 0
        %v701 = vsel %vm204, %v696, 0
        %703 = vmatprep.subr.bf16.mxu0 0
        %704 = vmatpush1.bf16.xpose.msra.mxu0 %v701
        %705 = vmatprep.subr.bf16.mxu0 0
        %706 = vmatpush1.bf16.xpose.msra.mxu0 0
        %707 = vmatprep.subr.bf16.mxu0 0
        %708 = vmatpush1.bf16.xpose.msra.mxu0 0
        %709 = vmatprep.subr.bf16.mxu0 0
        %710 = vmatpush1.bf16.xpose.msra.mxu0 0
        %711 = vmatprep.subr.bf16.mxu0 0
        %712 = vmatpush1.bf16.xpose.msra.mxu0 0
        %713 = vmatprep.subr.bf16.mxu0 0
        %714 = vmatpush1.bf16.xpose.msra.mxu0 0
        %715 = vmatprep.subr.bf16.mxu0 0
        %716 = vmatpush1.bf16.xpose.msra.mxu0 0
        %717 = vmatprep.subr.bf16.mxu0 0
        %718 = vmatpush1.bf16.xpose.msra.mxu0 0
        %719 = vmatprep.subr.bf16.mxu0 0
        %720 = vmatpush1.bf16.xpose.msra.mxu0 0
        %721 = vmatprep.subr.bf16.mxu0 0
        %722 = vmatpush1.bf16.xpose.msra.mxu0 0
        %723 = vmatprep.subr.bf16.mxu0 0
        %724 = vmatpush1.bf16.xpose.msra.mxu0 0
        %725 = vmatprep.subr.bf16.mxu0 0
        %726 = vmatpush1.bf16.xpose.msra.mxu0 0
        %727 = vmatprep.subr.bf16.mxu0 0
        %728 = vmatpush1.bf16.xpose.msra.mxu0 0
        %729 = vmatprep.subr.bf16.mxu0 0
        %730 = vmatpush1.bf16.xpose.msra.mxu0 0
        %731 = vmatprep.subr.bf16.mxu0 0
        %732 = vmatpush1.bf16.xpose.msra.mxu0 0
        %733 = vmatprep.subr.bf16.mxu0 0
        %734 = vmatpush1.bf16.xpose.msra.mxu0 0
        %735 = vmatprep.mubr.bf16.mxu0 0
        %736 = vmatmul.mubr.bf16.gmra.mrb[0].mxu0 %v698
        %v737 = vpop.f32.mrb[0].mxu0
        %v738 = vadd.f32 0.0, %v737
        %v739 = vpop.f32.mrb[0].mxu0
        %v740 = vpop.f32.mrb[0].mxu0
        %v741 = vpop.f32.mrb[0].mxu0
        %742 = vdwg.mxu0
        %744 = vrot.lane.b32.xlu0 %v595, 96
        %v745 = vpop.permute.xlu0 %744
        %v747 = vsel %vm204, %v595, 0
        %v750 = vsel %vm204, %v745, 0
        %752 = vmatprep.subr.bf16.mxu0 0
        %753 = vmatpush1.bf16.xpose.msra.mxu0 %v750
        %754 = vmatprep.subr.bf16.mxu0 0
        %755 = vmatpush1.bf16.xpose.msra.mxu0 0
        %756 = vmatprep.subr.bf16.mxu0 0
        %757 = vmatpush1.bf16.xpose.msra.mxu0 0
        %758 = vmatprep.subr.bf16.mxu0 0
        %759 = vmatpush1.bf16.xpose.msra.mxu0 0
        %760 = vmatprep.subr.bf16.mxu0 0
        %761 = vmatpush1.bf16.xpose.msra.mxu0 0
        %762 = vmatprep.subr.bf16.mxu0 0
        %763 = vmatpush1.bf16.xpose.msra.mxu0 0
        %764 = vmatprep.subr.bf16.mxu0 0
        %765 = vmatpush1.bf16.xpose.msra.mxu0 0
        %766 = vmatprep.subr.bf16.mxu0 0
        %767 = vmatpush1.bf16.xpose.msra.mxu0 0
        %768 = vmatprep.subr.bf16.mxu0 0
        %769 = vmatpush1.bf16.xpose.msra.mxu0 0
        %770 = vmatprep.subr.bf16.mxu0 0
        %771 = vmatpush1.bf16.xpose.msra.mxu0 0
        %772 = vmatprep.subr.bf16.mxu0 0
        %773 = vmatpush1.bf16.xpose.msra.mxu0 0
        %774 = vmatprep.subr.bf16.mxu0 0
        %775 = vmatpush1.bf16.xpose.msra.mxu0 0
        %776 = vmatprep.subr.bf16.mxu0 0
        %777 = vmatpush1.bf16.xpose.msra.mxu0 0
        %778 = vmatprep.subr.bf16.mxu0 0
        %779 = vmatpush1.bf16.xpose.msra.mxu0 0
        %780 = vmatprep.subr.bf16.mxu0 0
        %781 = vmatpush1.bf16.xpose.msra.mxu0 0
        %782 = vmatprep.subr.bf16.mxu0 0
        %783 = vmatpush1.bf16.xpose.msra.mxu0 0
        %784 = vmatprep.mubr.bf16.mxu0 0
        %785 = vmatmul.mubr.bf16.gmra.mrb[0].mxu0 %v747
        %v786 = vpop.f32.mrb[0].mxu0
        %v787 = vadd.f32 0.0, %v786
        %v788 = vpop.f32.mrb[0].mxu0
        %v789 = vpop.f32.mrb[0].mxu0
        %v790 = vpop.f32.mrb[0].mxu0
        %791 = vdwg.mxu0
        %v792 = vsel %vm204, %v640, -inf
        %793 = vmax.xlane.f32.xlu0 %v792
        %v794 = vpop.xlane.xlu0 %793
        %v795 = vsel %vm204, %v689, -inf
        %796 = vmax.xlane.f32.xlu0 %v795
        %v797 = vpop.xlane.xlu0 %796
        %v798 = vsel %vm204, %v738, -inf
        %799 = vmax.xlane.f32.xlu0 %v798
        %v800 = vpop.xlane.xlu0 %799
        %v801 = vsel %vm204, %v787, -inf
        %802 = vmax.xlane.f32.xlu0 %v801
        %v803 = vpop.xlane.xlu0 %802
        %v804 = vsub.f32 %v640, %v794
        %v805 = vsub.f32 %v689, %v797
        %v806 = vsub.f32 %v738, %v800
        %v807 = vsub.f32 %v787, %v803
        %v808 = vmul.f32 %v804, 1.442695
        %v809 = vpow.pop %v808
        %v810 = vmul.f32 %v805, 1.442695
        %v811 = vpow.pop %v810
        %v812 = vmul.f32 %v806, 1.442695
        %v813 = vpow.pop %v812
        %v814 = vmul.f32 %v807, 1.442695
        %v815 = vpow.pop %v814
        %v816 = vsel %vm204, %v809, 0.0
        %817 = vadd.xlane.f32.xlu0 %v816
        %v818 = vpop.xlane.xlu0 %817
        %v819 = vsel %vm204, %v811, 0.0
        %820 = vadd.xlane.f32.xlu0 %v819
        %v821 = vpop.xlane.xlu0 %820
        %v822 = vsel %vm204, %v813, 0.0
        %823 = vadd.xlane.f32.xlu0 %v822
        %v824 = vpop.xlane.xlu0 %823
        %v825 = vsel %vm204, %v815, 0.0
        %826 = vadd.xlane.f32.xlu0 %v825
        %v827 = vpop.xlane.xlu0 %826
        %v828 = vrcp.pop %v818
        %v829 = vrcp.pop %v821
        %v830 = vrcp.pop %v824
        %v831 = vrcp.pop %v827
        %v832 = vmul.f32 %v809, %v828
        %v833 = vmul.f32 %v811, %v829
        %v834 = vmul.f32 %v813, %v830
        %v835 = vmul.f32 %v815, %v831
        %v836 = vpack.c.bf16 %v832, %v832
        %v837 = vpack.c.bf16 %v833, %v833
        %v838 = vpack.c.bf16 %v834, %v834
        %v839 = vpack.c.bf16 %v835, %v835
        %840 = vrot.lane.b32.xlu0 %v592, 64
        %v841 = vpop.permute.xlu0 %840
        %v843 = vsel %vm204, %v836, 0
        %vm845 = vcmask 1043456
        %v847 = vsel %vm845, %v841, 0
        %849 = vmatprep.subr.bf16.mxu0 0
        %850 = vmatpush1.bf16.msra.mxu0 %v847
        %851 = vmatprep.subr.bf16.mxu0 0
        %852 = vmatpush1.bf16.msra.mxu0 0
        %853 = vmatprep.subr.bf16.mxu0 0
        %854 = vmatpush1.bf16.msra.mxu0 0
        %855 = vmatprep.subr.bf16.mxu0 0
        %856 = vmatpush1.bf16.msra.mxu0 0
        %857 = vmatprep.subr.bf16.mxu0 0
        %858 = vmatpush1.bf16.msra.mxu0 0
        %859 = vmatprep.subr.bf16.mxu0 0
        %860 = vmatpush1.bf16.msra.mxu0 0
        %861 = vmatprep.subr.bf16.mxu0 0
        %862 = vmatpush1.bf16.msra.mxu0 0
        %863 = vmatprep.subr.bf16.mxu0 0
        %864 = vmatpush1.bf16.msra.mxu0 0
        %865 = vmatprep.subr.bf16.mxu0 0
        %866 = vmatpush1.bf16.msra.mxu0 0
        %867 = vmatprep.subr.bf16.mxu0 0
        %868 = vmatpush1.bf16.msra.mxu0 0
        %869 = vmatprep.subr.bf16.mxu0 0
        %870 = vmatpush1.bf16.msra.mxu0 0
        %871 = vmatprep.subr.bf16.mxu0 0
        %872 = vmatpush1.bf16.msra.mxu0 0
        %873 = vmatprep.subr.bf16.mxu0 0
        %874 = vmatpush1.bf16.msra.mxu0 0
        %875 = vmatprep.subr.bf16.mxu0 0
        %876 = vmatpush1.bf16.msra.mxu0 0
        %877 = vmatprep.subr.bf16.mxu0 0
        %878 = vmatpush1.bf16.msra.mxu0 0
        %879 = vmatprep.subr.bf16.mxu0 0
        %880 = vmatpush1.bf16.msra.mxu0 0
        %881 = vmatprep.mubr.bf16.mxu0 0
        %882 = vmatmul.mubr.bf16.gmra.mrb[0].mxu0 %v843
        %v883 = vpop.f32.mrb[0].mxu0
        %v884 = vadd.f32 0.0, %v883
        %v885 = vpop.f32.mrb[0].mxu0
        %v886 = vpop.f32.mrb[0].mxu0
        %v887 = vpop.f32.mrb[0].mxu0
        %888 = vdwg.mxu0
        %889 = vrot.lane.b32.xlu0 %v593, 64
        %v890 = vpop.permute.xlu0 %889
        %v892 = vsel %vm204, %v837, 0
        %v895 = vsel %vm845, %v890, 0
        %897 = vmatprep.subr.bf16.mxu0 0
        %898 = vmatpush1.bf16.msra.mxu0 %v895
        %899 = vmatprep.subr.bf16.mxu0 0
        %900 = vmatpush1.bf16.msra.mxu0 0
        %901 = vmatprep.subr.bf16.mxu0 0
        %902 = vmatpush1.bf16.msra.mxu0 0
        %903 = vmatprep.subr.bf16.mxu0 0
        %904 = vmatpush1.bf16.msra.mxu0 0
        %905 = vmatprep.subr.bf16.mxu0 0
        %906 = vmatpush1.bf16.msra.mxu0 0
        %907 = vmatprep.subr.bf16.mxu0 0
        %908 = vmatpush1.bf16.msra.mxu0 0
        %909 = vmatprep.subr.bf16.mxu0 0
        %910 = vmatpush1.bf16.msra.mxu0 0
        %911 = vmatprep.subr.bf16.mxu0 0
        %912 = vmatpush1.bf16.msra.mxu0 0
        %913 = vmatprep.subr.bf16.mxu0 0
        %914 = vmatpush1.bf16.msra.mxu0 0
        %915 = vmatprep.subr.bf16.mxu0 0
        %916 = vmatpush1.bf16.msra.mxu0 0
        %917 = vmatprep.subr.bf16.mxu0 0
        %918 = vmatpush1.bf16.msra.mxu0 0
        %919 = vmatprep.subr.bf16.mxu0 0
        %920 = vmatpush1.bf16.msra.mxu0 0
        %921 = vmatprep.subr.bf16.mxu0 0
        %922 = vmatpush1.bf16.msra.mxu0 0
        %923 = vmatprep.subr.bf16.mxu0 0
        %924 = vmatpush1.bf16.msra.mxu0 0
        %925 = vmatprep.subr.bf16.mxu0 0
        %926 = vmatpush1.bf16.msra.mxu0 0
        %927 = vmatprep.subr.bf16.mxu0 0
        %928 = vmatpush1.bf16.msra.mxu0 0
        %929 = vmatprep.mubr.bf16.mxu0 0
        %930 = vmatmul.mubr.bf16.gmra.mrb[0].mxu0 %v892
        %v931 = vpop.f32.mrb[0].mxu0
        %v932 = vadd.f32 0.0, %v931
        %v933 = vpop.f32.mrb[0].mxu0
        %v934 = vpop.f32.mrb[0].mxu0
        %v935 = vpop.f32.mrb[0].mxu0
        %936 = vdwg.mxu0
        %937 = vrot.lane.b32.xlu0 %v594, 64
        %v938 = vpop.permute.xlu0 %937
        %v940 = vsel %vm204, %v838, 0
        %v943 = vsel %vm845, %v938, 0
        %945 = vmatprep.subr.bf16.mxu0 0
        %946 = vmatpush1.bf16.msra.mxu0 %v943
        %947 = vmatprep.subr.bf16.mxu0 0
        %948 = vmatpush1.bf16.msra.mxu0 0
        %949 = vmatprep.subr.bf16.mxu0 0
        %950 = vmatpush1.bf16.msra.mxu0 0
        %951 = vmatprep.subr.bf16.mxu0 0
        %952 = vmatpush1.bf16.msra.mxu0 0
        %953 = vmatprep.subr.bf16.mxu0 0
        %954 = vmatpush1.bf16.msra.mxu0 0
        %955 = vmatprep.subr.bf16.mxu0 0
        %956 = vmatpush1.bf16.msra.mxu0 0
        %957 = vmatprep.subr.bf16.mxu0 0
        %958 = vmatpush1.bf16.msra.mxu0 0
        %959 = vmatprep.subr.bf16.mxu0 0
        %960 = vmatpush1.bf16.msra.mxu0 0
        %961 = vmatprep.subr.bf16.mxu0 0
        %962 = vmatpush1.bf16.msra.mxu0 0
        %963 = vmatprep.subr.bf16.mxu0 0
        %964 = vmatpush1.bf16.msra.mxu0 0
        %965 = vmatprep.subr.bf16.mxu0 0
        %966 = vmatpush1.bf16.msra.mxu0 0
        %967 = vmatprep.subr.bf16.mxu0 0
        %968 = vmatpush1.bf16.msra.mxu0 0
        %969 = vmatprep.subr.bf16.mxu0 0
        %970 = vmatpush1.bf16.msra.mxu0 0
        %971 = vmatprep.subr.bf16.mxu0 0
        %972 = vmatpush1.bf16.msra.mxu0 0
        %973 = vmatprep.subr.bf16.mxu0 0
        %974 = vmatpush1.bf16.msra.mxu0 0
        %975 = vmatprep.subr.bf16.mxu0 0
        %976 = vmatpush1.bf16.msra.mxu0 0
        %977 = vmatprep.mubr.bf16.mxu0 0
        %978 = vmatmul.mubr.bf16.gmra.mrb[0].mxu0 %v940
        %v979 = vpop.f32.mrb[0].mxu0
        %v980 = vadd.f32 0.0, %v979
        %v981 = vpop.f32.mrb[0].mxu0
        %v982 = vpop.f32.mrb[0].mxu0
        %v983 = vpop.f32.mrb[0].mxu0
        %984 = vdwg.mxu0
        %985 = vrot.lane.b32.xlu0 %v595, 64
        %v986 = vpop.permute.xlu0 %985
        %v988 = vsel %vm204, %v839, 0
        %v991 = vsel %vm845, %v986, 0
        %993 = vmatprep.subr.bf16.mxu0 0
        %994 = vmatpush1.bf16.msra.mxu0 %v991
        %995 = vmatprep.subr.bf16.mxu0 0
        %996 = vmatpush1.bf16.msra.mxu0 0
        %997 = vmatprep.subr.bf16.mxu0 0
        %998 = vmatpush1.bf16.msra.mxu0 0
        %999 = vmatprep.subr.bf16.mxu0 0
        %1000 = vmatpush1.bf16.msra.mxu0 0
        %1001 = vmatprep.subr.bf16.mxu0 0
        %1002 = vmatpush1.bf16.msra.mxu0 0
        %1003 = vmatprep.subr.bf16.mxu0 0
        %1004 = vmatpush1.bf16.msra.mxu0 0
        %1005 = vmatprep.subr.bf16.mxu0 0
        %1006 = vmatpush1.bf16.msra.mxu0 0
        %1007 = vmatprep.subr.bf16.mxu0 0
        %1008 = vmatpush1.bf16.msra.mxu0 0
        %1009 = vmatprep.subr.bf16.mxu0 0
        %1010 = vmatpush1.bf16.msra.mxu0 0
        %1011 = vmatprep.subr.bf16.mxu0 0
        %1012 = vmatpush1.bf16.msra.mxu0 0
        %1013 = vmatprep.subr.bf16.mxu0 0
        %1014 = vmatpush1.bf16.msra.mxu0 0
        %1015 = vmatprep.subr.bf16.mxu0 0
        %1016 = vmatpush1.bf16.msra.mxu0 0
        %1017 = vmatprep.subr.bf16.mxu0 0
        %1018 = vmatpush1.bf16.msra.mxu0 0
        %1019 = vmatprep.subr.bf16.mxu0 0
        %1020 = vmatpush1.bf16.msra.mxu0 0
        %1021 = vmatprep.subr.bf16.mxu0 0
        %1022 = vmatpush1.bf16.msra.mxu0 0
        %1023 = vmatprep.subr.bf16.mxu0 0
        %1024 = vmatpush1.bf16.msra.mxu0 0
        %1025 = vmatprep.mubr.bf16.mxu0 0
        %1026 = vmatmul.mubr.bf16.gmra.mrb[0].mxu0 %v988
        %v1027 = vpop.f32.mrb[0].mxu0
        %v1028 = vadd.f32 0.0, %v1027
        %v1029 = vpop.f32.mrb[0].mxu0
        %v1030 = vpop.f32.mrb[0].mxu0
        %v1031 = vpop.f32.mrb[0].mxu0
        %1032 = vdwg.mxu0
        %1034 = vrot.lane.b32.xlu0 %v932, 8
        %v1035 = vpop.permute.xlu0 %1034
        %1038 = vrot.lane.b32.xlu0 %v980, 16
        %v1039 = vpop.permute.xlu0 %1038
        %1042 = vrot.lane.b32.xlu0 %v1028, 24
        %v1043 = vpop.permute.xlu0 %1042
        %v1045 = vsel %vm204, %v884, %v1035
        %v1046 = vsel %vm281, %v1045, %v1039
        %vm1047 = vcmask 195584
        %v1048 = vsel %vm1047, %v1046, %v1043
        %v1049 = vld [vmem:[#allocation4 + $0x60] sm:$0xf]
        %v1050 = vld [vmem:[#allocation4 + $0x64] sm:$0xf]
        %v1051 = vld [vmem:[#allocation4 + $0x68] sm:$0xf]
        %v1052 = vld [vmem:[#allocation4 + $0x6c] sm:$0xf]
        %v1053 = vpack.c.bf16 %v1048, %v1048
        %v1054 = vld [vmem:[#allocation2 + $0x29] sm:$0x1]
        %v1055 = vlaneseq
        %v1056 = vshrl.u32 %v1055, 7
        %v1057 = vsub.s32 0, %v1056
        %v1058 = vrot.slane %v1054, %v1057
        %v1063 = vunpack.c.l.b16 %v1049
        %v1064 = vunpack.c.l.b16 %v1050
        %v1065 = vunpack.c.l.b16 %v1051
        %v1066 = vunpack.c.l.b16 %v1052
        %v1067 = vpack.c.b16 %v1064, %v1063
        %v1068 = vpack.c.b16 %v1066, %v1065
        %v1072 = vsel %vm492, %v1053, 0
        %1074 = vmatprep.subr.bf16.mxu0 0
        %1075 = vmatpush1.bf16.msra.mxu0 %v1067
        %1076 = vmatprep.subr.bf16.mxu0 0
        %1077 = vmatpush1.bf16.msra.mxu0 %v1068
        %1078 = vmatprep.subr.bf16.mxu0 0
        %1079 = vmatpush1.bf16.msra.mxu0 0
        %1080 = vmatprep.subr.bf16.mxu0 0
        %1081 = vmatpush1.bf16.msra.mxu0 0
        %1082 = vmatprep.subr.bf16.mxu0 0
        %1083 = vmatpush1.bf16.msra.mxu0 0
        %1084 = vmatprep.subr.bf16.mxu0 0
        %1085 = vmatpush1.bf16.msra.mxu0 0
        %1086 = vmatprep.subr.bf16.mxu0 0
        %1087 = vmatpush1.bf16.msra.mxu0 0
        %1088 = vmatprep.subr.bf16.mxu0 0
        %1089 = vmatpush1.bf16.msra.mxu0 0
        %1090 = vmatprep.subr.bf16.mxu0 0
        %1091 = vmatpush1.bf16.msra.mxu0 0
        %1092 = vmatprep.subr.bf16.mxu0 0
        %1093 = vmatpush1.bf16.msra.mxu0 0
        %1094 = vmatprep.subr.bf16.mxu0 0
        %1095 = vmatpush1.bf16.msra.mxu0 0
        %1096 = vmatprep.subr.bf16.mxu0 0
        %1097 = vmatpush1.bf16.msra.mxu0 0
        %1098 = vmatprep.subr.bf16.mxu0 0
        %1099 = vmatpush1.bf16.msra.mxu0 0
        %1100 = vmatprep.subr.bf16.mxu0 0
        %1101 = vmatpush1.bf16.msra.mxu0 0
        %1102 = vmatprep.subr.bf16.mxu0 0
        %1103 = vmatpush1.bf16.msra.mxu0 0
        %1104 = vmatprep.subr.bf16.mxu0 0
        %1105 = vmatpush1.bf16.msra.mxu0 0
        %1106 = vmatprep.mubr.bf16.mxu0 0
        %1107 = vmatmul.mubr.bf16.gmra.mrb[0].mxu0 %v1072
        %v1108 = vpop.f32.mrb[0].mxu0
        %v1109 = vadd.f32 %v1058, %v1108
        %v1110 = vpop.f32.mrb[0].mxu0
        %v1111 = vpop.f32.mrb[0].mxu0
        %v1112 = vpop.f32.mrb[0].mxu0
        %1113 = vdwg.mxu0
        %v1114 = vadd.f32 %v516, %v1109
        %v1115 = vld [vmem:[#allocation2 + $0x2a] sm:$0x1]
        %v1116 = vld [vmem:[#allocation2 + $0x2b] sm:$0x1]
        %v1117 = vsel %vm492, %v1114, 0.0
        %1118 = vadd.xlane.f32.xlu0 %v1117
        %v1119 = vpop.xlane.xlu0 %1118
        %v1120 = vmul.f32 %v1119, %v496
        %v1121 = vsub.f32 %v1114, %v1120
        %v1122 = vmul.f32 %v1121, %v1121
        %v1123 = vsel %vm492, %v1122, 0.0
        %1124 = vadd.xlane.f32.xlu0 %v1123
        %v1125 = vpop.xlane.xlu0 %1124
        %v1126 = vmul.f32 %v1125, %v496
        %v1127 = vadd.f32 %v1126, 1e-12
        %v1128 = vrsqrt.pop %v1127
        %v1129 = vmul.f32 %v1121, %v1128
        %v1130 = vlaneseq
        %v1131 = vshrl.u32 %v1130, 7
        %v1132 = vsub.s32 0, %v1131
        %v1133 = vrot.slane %v1115, %v1132
        %v1134 = vmul.f32 %v1129, %v1133
        %v1135 = vlaneseq
        %v1136 = vshrl.u32 %v1135, 7
        %v1137 = vsub.s32 0, %v1136
        %v1138 = vrot.slane %v1116, %v1137
        %v1139 = vadd.f32 %v1134, %v1138
        %v1140 = vld [vmem:[#allocation4 + $0x80] sm:$0xf]
        %v1141 = vld [vmem:[#allocation4 + $0x84] sm:$0xf]
        %v1142 = vld [vmem:[#allocation4 + $0x88] sm:$0xf]
        %v1143 = vld [vmem:[#allocation4 + $0x8c] sm:$0xf]
        %v1144 = vld [vmem:[#allocation4 + $0xa0] sm:$0xf]
        %v1145 = vld [vmem:[#allocation4 + $0xa4] sm:$0xf]
        %v1146 = vld [vmem:[#allocation4 + $0xa8] sm:$0xf]
        %v1147 = vld [vmem:[#allocation4 + $0xac] sm:$0xf]
        %v1148 = vld [vmem:[#allocation4 + $0xb0] sm:$0xf]
        %v1149 = vld [vmem:[#allocation4 + $0xb4] sm:$0xf]
        %v1150 = vld [vmem:[#allocation4 + $0xb8] sm:$0xf]
        %v1151 = vld [vmem:[#allocation4 + $0xbc] sm:$0xf]
        %v1152 = vpack.c.bf16 %v1139, %v1139
        %v1153 = vld [vmem:[#allocation2 + $0x2e] sm:$0x1]
        %v1154 = vlaneseq
        %v1155 = vshrl.u32 %v1154, 7
        %v1156 = vsub.s32 0, %v1155
        %v1157 = vrot.slane %v1153, %v1156
        %v1162 = vunpack.c.l.b16 %v1140
        %v1163 = vunpack.c.l.b16 %v1141
        %v1164 = vunpack.c.l.b16 %v1142
        %v1165 = vunpack.c.l.b16 %v1143
        %v1166 = vpack.c.b16 %v1163, %v1162
        %v1167 = vpack.c.b16 %v1165, %v1164
        %v1171 = vsel %vm492, %v1152, 0
        %1173 = vmatprep.subr.bf16.mxu0 0
        %1174 = vmatpush1.bf16.msra.mxu0 %v1166
        %1175 = vmatprep.subr.bf16.mxu0 0
        %1176 = vmatpush1.bf16.msra.mxu0 %v1167
        %1177 = vmatprep.subr.bf16.mxu0 0
        %1178 = vmatpush1.bf16.msra.mxu0 0
        %1179 = vmatprep.subr.bf16.mxu0 0
        %1180 = vmatpush1.bf16.msra.mxu0 0
        %1181 = vmatprep.subr.bf16.mxu0 0
        %1182 = vmatpush1.bf16.msra.mxu0 0
        %1183 = vmatprep.subr.bf16.mxu0 0
        %1184 = vmatpush1.bf16.msra.mxu0 0
        %1185 = vmatprep.subr.bf16.mxu0 0
        %1186 = vmatpush1.bf16.msra.mxu0 0
        %1187 = vmatprep.subr.bf16.mxu0 0
        %1188 = vmatpush1.bf16.msra.mxu0 0
        %1189 = vmatprep.subr.bf16.mxu0 0
        %1190 = vmatpush1.bf16.msra.mxu0 0
        %1191 = vmatprep.subr.bf16.mxu0 0
        %1192 = vmatpush1.bf16.msra.mxu0 0
        %1193 = vmatprep.subr.bf16.mxu0 0
        %1194 = vmatpush1.bf16.msra.mxu0 0
        %1195 = vmatprep.subr.bf16.mxu0 0
        %1196 = vmatpush1.bf16.msra.mxu0 0
        %1197 = vmatprep.subr.bf16.mxu0 0
        %1198 = vmatpush1.bf16.msra.mxu0 0
        %1199 = vmatprep.subr.bf16.mxu0 0
        %1200 = vmatpush1.bf16.msra.mxu0 0
        %1201 = vmatprep.subr.bf16.mxu0 0
        %1202 = vmatpush1.bf16.msra.mxu0 0
        %1203 = vmatprep.subr.bf16.mxu0 0
        %1204 = vmatpush1.bf16.msra.mxu0 0
        %1205 = vmatprep.mubr.bf16.mxu0 0
        %1206 = vmatmul.mubr.bf16.gmra.mrb[0].mxu0 %v1171
        %v1207 = vpop.f32.mrb[0].mxu0
        %v1208 = vadd.f32 %v1157, %v1207
        %v1209 = vpop.f32.mrb[0].mxu0
        %v1210 = vpop.f32.mrb[0].mxu0
        %v1211 = vpop.f32.mrb[0].mxu0
        %1212 = vdwg.mxu0
        %v1213 = vmul.f32 %v1208, %v1208
        %v1214 = vmul.f32 %v1208, %v1213
        %v1215 = vmul.f32 %v1214, 0.044715
        %v1216 = vadd.f32 %v1208, %v1215
        %v1217 = vmul.f32 %v1216, 0.7978846
        %v1218 = vtanh.pop %v1217
        %v1219 = vadd.f32 %v1218, 1.0
        %v1220 = vmul.f32 %v1219, 0.5
        %v1221 = vmul.f32 %v1208, %v1220
        %v1222 = vpack.c.bf16 %v1221, %v1221
        %v1223 = vld [vmem:[#allocation2 + $0x2f] sm:$0x1]
        %v1224 = vlaneseq
        %v1225 = vshrl.u32 %v1224, 7
        %v1226 = vsub.s32 0, %v1225
        %v1227 = vrot.slane %v1223, %v1226
        %v1236 = vunpack.c.l.b16 %v1144
        %v1237 = vunpack.c.l.b16 %v1145
        %v1238 = vunpack.c.l.b16 %v1146
        %v1239 = vunpack.c.l.b16 %v1147
        %v1240 = vunpack.c.l.b16 %v1148
        %v1241 = vunpack.c.l.b16 %v1149
        %v1242 = vunpack.c.l.b16 %v1150
        %v1243 = vunpack.c.l.b16 %v1151
        %v1244 = vpack.c.b16 %v1237, %v1236
        %v1245 = vpack.c.b16 %v1239, %v1238
        %v1246 = vpack.c.b16 %v1241, %v1240
        %v1247 = vpack.c.b16 %v1243, %v1242
        %vm1252 = vcmask 523264
        %v1254 = vsel %vm1252, %v1222, 0
        %1256 = vmatprep.subr.bf16.mxu0 0
        %1257 = vmatpush1.bf16.msra.mxu0 %v1244
        %1258 = vmatprep.subr.bf16.mxu0 0
        %1259 = vmatpush1.bf16.msra.mxu0 %v1245
        %1260 = vmatprep.subr.bf16.mxu0 0
        %1261 = vmatpush1.bf16.msra.mxu0 %v1246
        %1262 = vmatprep.subr.bf16.mxu0 0
        %1263 = vmatpush1.bf16.msra.mxu0 %v1247
        %1264 = vmatprep.subr.bf16.mxu0 0
        %1265 = vmatpush1.bf16.msra.mxu0 0
        %1266 = vmatprep.subr.bf16.mxu0 0
        %1267 = vmatpush1.bf16.msra.mxu0 0
        %1268 = vmatprep.subr.bf16.mxu0 0
        %1269 = vmatpush1.bf16.msra.mxu0 0
        %1270 = vmatprep.subr.bf16.mxu0 0
        %1271 = vmatpush1.bf16.msra.mxu0 0
        %1272 = vmatprep.subr.bf16.mxu0 0
        %1273 = vmatpush1.bf16.msra.mxu0 0
        %1274 = vmatprep.subr.bf16.mxu0 0
        %1275 = vmatpush1.bf16.msra.mxu0 0
        %1276 = vmatprep.subr.bf16.mxu0 0
        %1277 = vmatpush1.bf16.msra.mxu0 0
        %1278 = vmatprep.subr.bf16.mxu0 0
        %1279 = vmatpush1.bf16.msra.mxu0 0
        %1280 = vmatprep.subr.bf16.mxu0 0
        %1281 = vmatpush1.bf16.msra.mxu0 0
        %1282 = vmatprep.subr.bf16.mxu0 0
        %1283 = vmatpush1.bf16.msra.mxu0 0
        %1284 = vmatprep.subr.bf16.mxu0 0
        %1285 = vmatpush1.bf16.msra.mxu0 0
        %1286 = vmatprep.subr.bf16.mxu0 0
        %1287 = vmatpush1.bf16.msra.mxu0 0
        %1288 = vmatprep.mubr.bf16.mxu0 0
        %1289 = vmatmul.mubr.bf16.gmra.mrb[0].mxu0 %v1254
        %v1290 = vpop.f32.mrb[0].mxu0
        %v1291 = vadd.f32 %v1227, %v1290
        %v1292 = vpop.f32.mrb[0].mxu0
        %v1293 = vpop.f32.mrb[0].mxu0
        %v1294 = vpop.f32.mrb[0].mxu0
        %1295 = vdwg.mxu0
        %v1296 = vadd.f32 %v1139, %v1291
        %v1297 = vld [vmem:[#allocation2 + $0x2c] sm:$0x1]
        %v1298 = vld [vmem:[#allocation2 + $0x2d] sm:$0x1]
        %v1299 = vsel %vm492, %v1296, 0.0
        %1300 = vadd.xlane.f32.xlu0 %v1299
        %v1301 = vpop.xlane.xlu0 %1300
        %v1302 = vmul.f32 %v1301, %v496
        %v1303 = vsub.f32 %v1296, %v1302
        %v1304 = vmul.f32 %v1303, %v1303
        %v1305 = vsel %vm492, %v1304, 0.0
        %1306 = vadd.xlane.f32.xlu0 %v1305
        %v1307 = vpop.xlane.xlu0 %1306
        %v1308 = vmul.f32 %v1307, %v496
        %v1309 = vadd.f32 %v1308, 1e-12
        %v1310 = vrsqrt.pop %v1309
        %v1311 = vmul.f32 %v1303, %v1310
        %v1312 = vlaneseq
        %v1313 = vshrl.u32 %v1312, 7
        %v1314 = vsub.s32 0, %v1313
        %v1315 = vrot.slane %v1297, %v1314
        %v1316 = vmul.f32 %v1311, %v1315
        %v1317 = vlaneseq
        %v1318 = vshrl.u32 %v1317, 7
        %v1319 = vsub.s32 0, %v1318
        %v1320 = vrot.slane %v1298, %v1319
        %v1321 = vadd.f32 %v1316, %v1320
        %v1322 = vld [vmem:[#allocation4 + $0x50] sm:$0xf]
        %v1323 = vld [vmem:[#allocation4 + $0x54] sm:$0xf]
        %v1324 = vld [vmem:[#allocation4 + $0x58] sm:$0xf]
        %v1325 = vld [vmem:[#allocation4 + $0x5c] sm:$0xf]
        %v1326 = vpack.c.bf16 %v1321, %v1321
        %v1327 = vld [vmem:[#allocation2 + $0x30] sm:$0x1]
        %v1328 = vlaneseq
        %v1329 = vshrl.u32 %v1328, 7
        %v1330 = vsub.s32 0, %v1329
        %v1331 = vrot.slane %v1327, %v1330
        %v1336 = vunpack.c.l.b16 %v1322
        %v1337 = vunpack.c.l.b16 %v1323
        %v1338 = vunpack.c.l.b16 %v1324
        %v1339 = vunpack.c.l.b16 %v1325
        %v1340 = vpack.c.b16 %v1337, %v1336
        %v1341 = vpack.c.b16 %v1339, %v1338
        %v1345 = vsel %vm492, %v1326, 0
        %1347 = vmatprep.subr.bf16.mxu0 0
        %1348 = vmatpush1.bf16.msra.mxu0 %v1340
        %1349 = vmatprep.subr.bf16.mxu0 0
        %1350 = vmatpush1.bf16.msra.mxu0 %v1341
        %1351 = vmatprep.subr.bf16.mxu0 0
        %1352 = vmatpush1.bf16.msra.mxu0 0
        %1353 = vmatprep.subr.bf16.mxu0 0
        %1354 = vmatpush1.bf16.msra.mxu0 0
        %1355 = vmatprep.subr.bf16.mxu0 0
        %1356 = vmatpush1.bf16.msra.mxu0 0
        %1357 = vmatprep.subr.bf16.mxu0 0
        %1358 = vmatpush1.bf16.msra.mxu0 0
        %1359 = vmatprep.subr.bf16.mxu0 0
        %1360 = vmatpush1.bf16.msra.mxu0 0
        %1361 = vmatprep.subr.bf16.mxu0 0
        %1362 = vmatpush1.bf16.msra.mxu0 0
        %1363 = vmatprep.subr.bf16.mxu0 0
        %1364 = vmatpush1.bf16.msra.mxu0 0
        %1365 = vmatprep.subr.bf16.mxu0 0
        %1366 = vmatpush1.bf16.msra.mxu0 0
        %1367 = vmatprep.subr.bf16.mxu0 0
        %1368 = vmatpush1.bf16.msra.mxu0 0
        %1369 = vmatprep.subr.bf16.mxu0 0
        %1370 = vmatpush1.bf16.msra.mxu0 0
        %1371 = vmatprep.subr.bf16.mxu0 0
        %1372 = vmatpush1.bf16.msra.mxu0 0
        %1373 = vmatprep.subr.bf16.mxu0 0
        %1374 = vmatpush1.bf16.msra.mxu0 0
        %1375 = vmatprep.subr.bf16.mxu0 0
        %1376 = vmatpush1.bf16.msra.mxu0 0
        %1377 = vmatprep.subr.bf16.mxu0 0
        %1378 = vmatpush1.bf16.msra.mxu0 0
        %1379 = vmatprep.mubr.bf16.mxu0 0
        %1380 = vmatmul.mubr.bf16.gmra.mrb[0].mxu0 %v1345
        %v1381 = vpop.f32.mrb[0].mxu0
        %v1382 = vadd.f32 %v1331, %v1381
        %v1383 = vpop.f32.mrb[0].mxu0
        %v1384 = vpop.f32.mrb[0].mxu0
        %v1385 = vpop.f32.mrb[0].mxu0
        %1386 = vdwg.mxu0
        %1388 = vrot.lane.b32.xlu0 %v1382, 120
        %v1389 = vpop.permute.xlu0 %1388
        %1391 = vrot.lane.b32.xlu0 %v1382, 112
        %v1392 = vpop.permute.xlu0 %1391
        %1394 = vrot.lane.b32.xlu0 %v1382, 104
        %v1395 = vpop.permute.xlu0 %1394
        %v1397 = vpack.c.bf16 %v1382, %v1382
        %v1398 = vpack.c.bf16 %v1389, %v1389
        %v1399 = vpack.c.bf16 %v1392, %v1392
        %v1400 = vpack.c.bf16 %v1395, %v1395
        %1402 = vrot.lane.b32.xlu0 %v1397, 96
        %v1403 = vpop.permute.xlu0 %1402
        %v1405 = vsel %vm204, %v1397, 0
        %v1408 = vsel %vm204, %v1403, 0
        %1410 = vmatprep.subr.bf16.mxu0 0
        %1411 = vmatpush1.bf16.xpose.msra.mxu0 %v1408
        %1412 = vmatprep.subr.bf16.mxu0 0
        %1413 = vmatpush1.bf16.xpose.msra.mxu0 0
        %1414 = vmatprep.subr.bf16.mxu0 0
        %1415 = vmatpush1.bf16.xpose.msra.mxu0 0
        %1416 = vmatprep.subr.bf16.mxu0 0
        %1417 = vmatpush1.bf16.xpose.msra.mxu0 0
        %1418 = vmatprep.subr.bf16.mxu0 0
        %1419 = vmatpush1.bf16.xpose.msra.mxu0 0
        %1420 = vmatprep.subr.bf16.mxu0 0
        %1421 = vmatpush1.bf16.xpose.msra.mxu0 0
        %1422 = vmatprep.subr.bf16.mxu0 0
        %1423 = vmatpush1.bf16.xpose.msra.mxu0 0
        %1424 = vmatprep.subr.bf16.mxu0 0
        %1425 = vmatpush1.bf16.xpose.msra.mxu0 0
        %1426 = vmatprep.subr.bf16.mxu0 0
        %1427 = vmatpush1.bf16.xpose.msra.mxu0 0
        %1428 = vmatprep.subr.bf16.mxu0 0
        %1429 = vmatpush1.bf16.xpose.msra.mxu0 0
        %1430 = vmatprep.subr.bf16.mxu0 0
        %1431 = vmatpush1.bf16.xpose.msra.mxu0 0
        %1432 = vmatprep.subr.bf16.mxu0 0
        %1433 = vmatpush1.bf16.xpose.msra.mxu0 0
        %1434 = vmatprep.subr.bf16.mxu0 0
        %1435 = vmatpush1.bf16.xpose.msra.mxu0 0
        %1436 = vmatprep.subr.bf16.mxu0 0
        %1437 = vmatpush1.bf16.xpose.msra.mxu0 0
        %1438 = vmatprep.subr.bf16.mxu0 0
        %1439 = vmatpush1.bf16.xpose.msra.mxu0 0
        %1440 = vmatprep.subr.bf16.mxu0 0
        %1441 = vmatpush1.bf16.xpose.msra.mxu0 0
        %1442 = vmatprep.mubr.bf16.mxu0 0
        %1443 = vmatmul.mubr.bf16.gmra.mrb[0].mxu0 %v1405
        %v1444 = vpop.f32.mrb[0].mxu0
        %v1445 = vadd.f32 0.0, %v1444
        %v1446 = vpop.f32.mrb[0].mxu0
        %v1447 = vpop.f32.mrb[0].mxu0
        %v1448 = vpop.f32.mrb[0].mxu0
        %1449 = vdwg.mxu0
        %1451 = vrot.lane.b32.xlu0 %v1398, 96
        %v1452 = vpop.permute.xlu0 %1451
        %v1454 = vsel %vm204, %v1398, 0
        %v1457 = vsel %vm204, %v1452, 0
        %1459 = vmatprep.subr.bf16.mxu0 0
        %1460 = vmatpush1.bf16.xpose.msra.mxu0 %v1457
        %1461 = vmatprep.subr.bf16.mxu0 0
        %1462 = vmatpush1.bf16.xpose.msra.mxu0 0
        %1463 = vmatprep.subr.bf16.mxu0 0
        %1464 = vmatpush1.bf16.xpose.msra.mxu0 0
        %1465 = vmatprep.subr.bf16.mxu0 0
        %1466 = vmatpush1.bf16.xpose.msra.mxu0 0
        %1467 = vmatprep.subr.bf16.mxu0 0
        %1468 = vmatpush1.bf16.xpose.msra.mxu0 0
        %1469 = vmatprep.subr.bf16.mxu0 0
        %1470 = vmatpush1.bf16.xpose.msra.mxu0 0
        %1471 = vmatprep.subr.bf16.mxu0 0
        %1472 = vmatpush1.bf16.xpose.msra.mxu0 0
        %1473 = vmatprep.subr.bf16.mxu0 0
        %1474 = vmatpush1.bf16.xpose.msra.mxu0 0
        %1475 = vmatprep.subr.bf16.mxu0 0
        %1476 = vmatpush1.bf16.xpose.msra.mxu0 0
        %1477 = vmatprep.subr.bf16.mxu0 0
        %1478 = vmatpush1.bf16.xpose.msra.mxu0 0
        %1479 = vmatprep.subr.bf16.mxu0 0
        %1480 = vmatpush1.bf16.xpose.msra.mxu0 0
        %1481 = vmatprep.subr.bf16.mxu0 0
        %1482 = vmatpush1.bf16.xpose.msra.mxu0 0
        %1483 = vmatprep.subr.bf16.mxu0 0
        %1484 = vmatpush1.bf16.xpose.msra.mxu0 0
        %1485 = vmatprep.subr.bf16.mxu0 0
        %1486 = vmatpush1.bf16.xpose.msra.mxu0 0
        %1487 = vmatprep.subr.bf16.mxu0 0
        %1488 = vmatpush1.bf16.xpose.msra.mxu0 0
        %1489 = vmatprep.subr.bf16.mxu0 0
        %1490 = vmatpush1.bf16.xpose.msra.mxu0 0
        %1491 = vmatprep.mubr.bf16.mxu0 0
        %1492 = vmatmul.mubr.bf16.gmra.mrb[0].mxu0 %v1454
        %v1493 = vpop.f32.mrb[0].mxu0
        %v1494 = vadd.f32 0.0, %v1493
        %v1495 = vpop.f32.mrb[0].mxu0
        %v1496 = vpop.f32.mrb[0].mxu0
        %v1497 = vpop.f32.mrb[0].mxu0
        %1498 = vdwg.mxu0
        %1500 = vrot.lane.b32.xlu0 %v1399, 96
        %v1501 = vpop.permute.xlu0 %1500
        %v1503 = vsel %vm204, %v1399, 0
        %v1506 = vsel %vm204, %v1501, 0
        %1508 = vmatprep.subr.bf16.mxu0 0
        %1509 = vmatpush1.bf16.xpose.msra.mxu0 %v1506
        %1510 = vmatprep.subr.bf16.mxu0 0
        %1511 = vmatpush1.bf16.xpose.msra.mxu0 0
        %1512 = vmatprep.subr.bf16.mxu0 0
        %1513 = vmatpush1.bf16.xpose.msra.mxu0 0
        %1514 = vmatprep.subr.bf16.mxu0 0
        %1515 = vmatpush1.bf16.xpose.msra.mxu0 0
        %1516 = vmatprep.subr.bf16.mxu0 0
        %1517 = vmatpush1.bf16.xpose.msra.mxu0 0
        %1518 = vmatprep.subr.bf16.mxu0 0
        %1519 = vmatpush1.bf16.xpose.msra.mxu0 0
        %1520 = vmatprep.subr.bf16.mxu0 0
        %1521 = vmatpush1.bf16.xpose.msra.mxu0 0
        %1522 = vmatprep.subr.bf16.mxu0 0
        %1523 = vmatpush1.bf16.xpose.msra.mxu0 0
        %1524 = vmatprep.subr.bf16.mxu0 0
        %1525 = vmatpush1.bf16.xpose.msra.mxu0 0
        %1526 = vmatprep.subr.bf16.mxu0 0
        %1527 = vmatpush1.bf16.xpose.msra.mxu0 0
        %1528 = vmatprep.subr.bf16.mxu0 0
        %1529 = vmatpush1.bf16.xpose.msra.mxu0 0
        %1530 = vmatprep.subr.bf16.mxu0 0
        %1531 = vmatpush1.bf16.xpose.msra.mxu0 0
        %1532 = vmatprep.subr.bf16.mxu0 0
        %1533 = vmatpush1.bf16.xpose.msra.mxu0 0
        %1534 = vmatprep.subr.bf16.mxu0 0
        %1535 = vmatpush1.bf16.xpose.msra.mxu0 0
        %1536 = vmatprep.subr.bf16.mxu0 0
        %1537 = vmatpush1.bf16.xpose.msra.mxu0 0
        %1538 = vmatprep.subr.bf16.mxu0 0
        %1539 = vmatpush1.bf16.xpose.msra.mxu0 0
        %1540 = vmatprep.mubr.bf16.mxu0 0
        %1541 = vmatmul.mubr.bf16.gmra.mrb[0].mxu0 %v1503
        %v1542 = vpop.f32.mrb[0].mxu0
        %v1543 = vadd.f32 0.0, %v1542
        %v1544 = vpop.f32.mrb[0].mxu0
        %v1545 = vpop.f32.mrb[0].mxu0
        %v1546 = vpop.f32.mrb[0].mxu0
        %1547 = vdwg.mxu0
        %1549 = vrot.lane.b32.xlu0 %v1400, 96
        %v1550 = vpop.permute.xlu0 %1549
        %v1552 = vsel %vm204, %v1400, 0
        %v1555 = vsel %vm204, %v1550, 0
        %1557 = vmatprep.subr.bf16.mxu0 0
        %1558 = vmatpush1.bf16.xpose.msra.mxu0 %v1555
        %1559 = vmatprep.subr.bf16.mxu0 0
        %1560 = vmatpush1.bf16.xpose.msra.mxu0 0
        %1561 = vmatprep.subr.bf16.mxu0 0
        %1562 = vmatpush1.bf16.xpose.msra.mxu0 0
        %1563 = vmatprep.subr.bf16.mxu0 0
        %1564 = vmatpush1.bf16.xpose.msra.mxu0 0
        %1565 = vmatprep.subr.bf16.mxu0 0
        %1566 = vmatpush1.bf16.xpose.msra.mxu0 0
        %1567 = vmatprep.subr.bf16.mxu0 0
        %1568 = vmatpush1.bf16.xpose.msra.mxu0 0
        %1569 = vmatprep.subr.bf16.mxu0 0
        %1570 = vmatpush1.bf16.xpose.msra.mxu0 0
        %1571 = vmatprep.subr.bf16.mxu0 0
        %1572 = vmatpush1.bf16.xpose.msra.mxu0 0
        %1573 = vmatprep.subr.bf16.mxu0 0
        %1574 = vmatpush1.bf16.xpose.msra.mxu0 0
        %1575 = vmatprep.subr.bf16.mxu0 0
        %1576 = vmatpush1.bf16.xpose.msra.mxu0 0
        %1577 = vmatprep.subr.bf16.mxu0 0
        %1578 = vmatpush1.bf16.xpose.msra.mxu0 0
        %1579 = vmatprep.subr.bf16.mxu0 0
        %1580 = vmatpush1.bf16.xpose.msra.mxu0 0
        %1581 = vmatprep.subr.bf16.mxu0 0
        %1582 = vmatpush1.bf16.xpose.msra.mxu0 0
        %1583 = vmatprep.subr.bf16.mxu0 0
        %1584 = vmatpush1.bf16.xpose.msra.mxu0 0
        %1585 = vmatprep.subr.bf16.mxu0 0
        %1586 = vmatpush1.bf16.xpose.msra.mxu0 0
        %1587 = vmatprep.subr.bf16.mxu0 0
        %1588 = vmatpush1.bf16.xpose.msra.mxu0 0
        %1589 = vmatprep.mubr.bf16.mxu0 0
        %1590 = vmatmul.mubr.bf16.gmra.mrb[0].mxu0 %v1552
        %v1591 = vpop.f32.mrb[0].mxu0
        %v1592 = vadd.f32 0.0, %v1591
        %v1593 = vpop.f32.mrb[0].mxu0
        %v1594 = vpop.f32.mrb[0].mxu0
        %v1595 = vpop.f32.mrb[0].mxu0
        %1596 = vdwg.mxu0
        %v1597 = vsel %vm204, %v1445, -inf
        %1598 = vmax.xlane.f32.xlu0 %v1597
        %v1599 = vpop.xlane.xlu0 %1598
        %v1600 = vsel %vm204, %v1494, -inf
        %1601 = vmax.xlane.f32.xlu0 %v1600
        %v1602 = vpop.xlane.xlu0 %1601
        %v1603 = vsel %vm204, %v1543, -inf
        %1604 = vmax.xlane.f32.xlu0 %v1603
        %v1605 = vpop.xlane.xlu0 %1604
        %v1606 = vsel %vm204, %v1592, -inf
        %1607 = vmax.xlane.f32.xlu0 %v1606
        %v1608 = vpop.xlane.xlu0 %1607
        %v1609 = vsub.f32 %v1445, %v1599
        %v1610 = vsub.f32 %v1494, %v1602
        %v1611 = vsub.f32 %v1543, %v1605
        %v1612 = vsub.f32 %v1592, %v1608
        %v1613 = vmul.f32 %v1609, 1.442695
        %v1614 = vpow.pop %v1613
        %v1615 = vmul.f32 %v1610, 1.442695
        %v1616 = vpow.pop %v1615
        %v1617 = vmul.f32 %v1611, 1.442695
        %v1618 = vpow.pop %v1617
        %v1619 = vmul.f32 %v1612, 1.442695
        %v1620 = vpow.pop %v1619
        %v1621 = vsel %vm204, %v1614, 0.0
        %1622 = vadd.xlane.f32.xlu0 %v1621
        %v1623 = vpop.xlane.xlu0 %1622
        %v1624 = vsel %vm204, %v1616, 0.0
        %1625 = vadd.xlane.f32.xlu0 %v1624
        %v1626 = vpop.xlane.xlu0 %1625
        %v1627 = vsel %vm204, %v1618, 0.0
        %1628 = vadd.xlane.f32.xlu0 %v1627
        %v1629 = vpop.xlane.xlu0 %1628
        %v1630 = vsel %vm204, %v1620, 0.0
        %1631 = vadd.xlane.f32.xlu0 %v1630
        %v1632 = vpop.xlane.xlu0 %1631
        %v1633 = vrcp.pop %v1623
        %v1634 = vrcp.pop %v1626
        %v1635 = vrcp.pop %v1629
        %v1636 = vrcp.pop %v1632
        %v1637 = vmul.f32 %v1614, %v1633
        %v1638 = vmul.f32 %v1616, %v1634
        %v1639 = vmul.f32 %v1618, %v1635
        %v1640 = vmul.f32 %v1620, %v1636
        %v1641 = vpack.c.bf16 %v1637, %v1637
        %v1642 = vpack.c.bf16 %v1638, %v1638
        %v1643 = vpack.c.bf16 %v1639, %v1639
        %v1644 = vpack.c.bf16 %v1640, %v1640
        %1645 = vrot.lane.b32.xlu0 %v1397, 64
        %v1646 = vpop.permute.xlu0 %1645
        %v1648 = vsel %vm204, %v1641, 0
        %v1651 = vsel %vm845, %v1646, 0
        %1653 = vmatprep.subr.bf16.mxu0 0
        %1654 = vmatpush1.bf16.msra.mxu0 %v1651
        %1655 = vmatprep.subr.bf16.mxu0 0
        %1656 = vmatpush1.bf16.msra.mxu0 0
        %1657 = vmatprep.subr.bf16.mxu0 0
        %1658 = vmatpush1.bf16.msra.mxu0 0
        %1659 = vmatprep.subr.bf16.mxu0 0
        %1660 = vmatpush1.bf16.msra.mxu0 0
        %1661 = vmatprep.subr.bf16.mxu0 0
        %1662 = vmatpush1.bf16.msra.mxu0 0
        %1663 = vmatprep.subr.bf16.mxu0 0
        %1664 = vmatpush1.bf16.msra.mxu0 0
        %1665 = vmatprep.subr.bf16.mxu0 0
        %1666 = vmatpush1.bf16.msra.mxu0 0
        %1667 = vmatprep.subr.bf16.mxu0 0
        %1668 = vmatpush1.bf16.msra.mxu0 0
        %1669 = vmatprep.subr.bf16.mxu0 0
        %1670 = vmatpush1.bf16.msra.mxu0 0
        %1671 = vmatprep.subr.bf16.mxu0 0
        %1672 = vmatpush1.bf16.msra.mxu0 0
        %1673 = vmatprep.subr.bf16.mxu0 0
        %1674 = vmatpush1.bf16.msra.mxu0 0
        %1675 = vmatprep.subr.bf16.mxu0 0
        %1676 = vmatpush1.bf16.msra.mxu0 0
        %1677 = vmatprep.subr.bf16.mxu0 0
        %1678 = vmatpush1.bf16.msra.mxu0 0
        %1679 = vmatprep.subr.bf16.mxu0 0
        %1680 = vmatpush1.bf16.msra.mxu0 0
        %1681 = vmatprep.subr.bf16.mxu0 0
        %1682 = vmatpush1.bf16.msra.mxu0 0
        %1683 = vmatprep.subr.bf16.mxu0 0
        %1684 = vmatpush1.bf16.msra.mxu0 0
        %1685 = vmatprep.mubr.bf16.mxu0 0
        %1686 = vmatmul.mubr.bf16.gmra.mrb[0].mxu0 %v1648
        %v1687 = vpop.f32.mrb[0].mxu0
        %v1688 = vadd.f32 0.0, %v1687
        %v1689 = vpop.f32.mrb[0].mxu0
        %v1690 = vpop.f32.mrb[0].mxu0
        %v1691 = vpop.f32.mrb[0].mxu0
        %1692 = vdwg.mxu0
        %1693 = vrot.lane.b32.xlu0 %v1398, 64
        %v1694 = vpop.permute.xlu0 %1693
        %v1696 = vsel %vm204, %v1642, 0
        %v1699 = vsel %vm845, %v1694, 0
        %1701 = vmatprep.subr.bf16.mxu0 0
        %1702 = vmatpush1.bf16.msra.mxu0 %v1699
        %1703 = vmatprep.subr.bf16.mxu0 0
        %1704 = vmatpush1.bf16.msra.mxu0 0
        %1705 = vmatprep.subr.bf16.mxu0 0
        %1706 = vmatpush1.bf16.msra.mxu0 0
        %1707 = vmatprep.subr.bf16.mxu0 0
        %1708 = vmatpush1.bf16.msra.mxu0 0
        %1709 = vmatprep.subr.bf16.mxu0 0
        %1710 = vmatpush1.bf16.msra.mxu0 0
        %1711 = vmatprep.subr.bf16.mxu0 0
        %1712 = vmatpush1.bf16.msra.mxu0 0
        %1713 = vmatprep.subr.bf16.mxu0 0
        %1714 = vmatpush1.bf16.msra.mxu0 0
        %1715 = vmatprep.subr.bf16.mxu0 0
        %1716 = vmatpush1.bf16.msra.mxu0 0
        %1717 = vmatprep.subr.bf16.mxu0 0
        %1718 = vmatpush1.bf16.msra.mxu0 0
        %1719 = vmatprep.subr.bf16.mxu0 0
        %1720 = vmatpush1.bf16.msra.mxu0 0
        %1721 = vmatprep.subr.bf16.mxu0 0
        %1722 = vmatpush1.bf16.msra.mxu0 0
        %1723 = vmatprep.subr.bf16.mxu0 0
        %1724 = vmatpush1.bf16.msra.mxu0 0
        %1725 = vmatprep.subr.bf16.mxu0 0
        %1726 = vmatpush1.bf16.msra.mxu0 0
        %1727 = vmatprep.subr.bf16.mxu0 0
        %1728 = vmatpush1.bf16.msra.mxu0 0
        %1729 = vmatprep.subr.bf16.mxu0 0
        %1730 = vmatpush1.bf16.msra.mxu0 0
        %1731 = vmatprep.subr.bf16.mxu0 0
        %1732 = vmatpush1.bf16.msra.mxu0 0
        %1733 = vmatprep.mubr.bf16.mxu0 0
        %1734 = vmatmul.mubr.bf16.gmra.mrb[0].mxu0 %v1696
        %v1735 = vpop.f32.mrb[0].mxu0
        %v1736 = vadd.f32 0.0, %v1735
        %v1737 = vpop.f32.mrb[0].mxu0
        %v1738 = vpop.f32.mrb[0].mxu0
        %v1739 = vpop.f32.mrb[0].mxu0
        %1740 = vdwg.mxu0
        %1741 = vrot.lane.b32.xlu0 %v1399, 64
        %v1742 = vpop.permute.xlu0 %1741
        %v1744 = vsel %vm204, %v1643, 0
        %v1747 = vsel %vm845, %v1742, 0
        %1749 = vmatprep.subr.bf16.mxu0 0
        %1750 = vmatpush1.bf16.msra.mxu0 %v1747
        %1751 = vmatprep.subr.bf16.mxu0 0
        %1752 = vmatpush1.bf16.msra.mxu0 0
        %1753 = vmatprep.subr.bf16.mxu0 0
        %1754 = vmatpush1.bf16.msra.mxu0 0
        %1755 = vmatprep.subr.bf16.mxu0 0
        %1756 = vmatpush1.bf16.msra.mxu0 0
        %1757 = vmatprep.subr.bf16.mxu0 0
        %1758 = vmatpush1.bf16.msra.mxu0 0
        %1759 = vmatprep.subr.bf16.mxu0 0
        %1760 = vmatpush1.bf16.msra.mxu0 0
        %1761 = vmatprep.subr.bf16.mxu0 0
        %1762 = vmatpush1.bf16.msra.mxu0 0
        %1763 = vmatprep.subr.bf16.mxu0 0
        %1764 = vmatpush1.bf16.msra.mxu0 0
        %1765 = vmatprep.subr.bf16.mxu0 0
        %1766 = vmatpush1.bf16.msra.mxu0 0
        %1767 = vmatprep.subr.bf16.mxu0 0
        %1768 = vmatpush1.bf16.msra.mxu0 0
        %1769 = vmatprep.subr.bf16.mxu0 0
        %1770 = vmatpush1.bf16.msra.mxu0 0
        %1771 = vmatprep.subr.bf16.mxu0 0
        %1772 = vmatpush1.bf16.msra.mxu0 0
        %1773 = vmatprep.subr.bf16.mxu0 0
        %1774 = vmatpush1.bf16.msra.mxu0 0
        %1775 = vmatprep.subr.bf16.mxu0 0
        %1776 = vmatpush1.bf16.msra.mxu0 0
        %1777 = vmatprep.subr.bf16.mxu0 0
        %1778 = vmatpush1.bf16.msra.mxu0 0
        %1779 = vmatprep.subr.bf16.mxu0 0
        %1780 = vmatpush1.bf16.msra.mxu0 0
        %1781 = vmatprep.mubr.bf16.mxu0 0
        %1782 = vmatmul.mubr.bf16.gmra.mrb[0].mxu0 %v1744
        %v1783 = vpop.f32.mrb[0].mxu0
        %v1784 = vadd.f32 0.0, %v1783
        %v1785 = vpop.f32.mrb[0].mxu0
        %v1786 = vpop.f32.mrb[0].mxu0
        %v1787 = vpop.f32.mrb[0].mxu0
        %1788 = vdwg.mxu0
        %1789 = vrot.lane.b32.xlu0 %v1400, 64
        %v1790 = vpop.permute.xlu0 %1789
        %v1792 = vsel %vm204, %v1644, 0
        %v1795 = vsel %vm845, %v1790, 0
        %1797 = vmatprep.subr.bf16.mxu0 0
        %1798 = vmatpush1.bf16.msra.mxu0 %v1795
        %1799 = vmatprep.subr.bf16.mxu0 0
        %1800 = vmatpush1.bf16.msra.mxu0 0
        %1801 = vmatprep.subr.bf16.mxu0 0
        %1802 = vmatpush1.bf16.msra.mxu0 0
        %1803 = vmatprep.subr.bf16.mxu0 0
        %1804 = vmatpush1.bf16.msra.mxu0 0
        %1805 = vmatprep.subr.bf16.mxu0 0
        %1806 = vmatpush1.bf16.msra.mxu0 0
        %1807 = vmatprep.subr.bf16.mxu0 0
        %1808 = vmatpush1.bf16.msra.mxu0 0
        %1809 = vmatprep.subr.bf16.mxu0 0
        %1810 = vmatpush1.bf16.msra.mxu0 0
        %1811 = vmatprep.subr.bf16.mxu0 0
        %1812 = vmatpush1.bf16.msra.mxu0 0
        %1813 = vmatprep.subr.bf16.mxu0 0
        %1814 = vmatpush1.bf16.msra.mxu0 0
        %1815 = vmatprep.subr.bf16.mxu0 0
        %1816 = vmatpush1.bf16.msra.mxu0 0
        %1817 = vmatprep.subr.bf16.mxu0 0
        %1818 = vmatpush1.bf16.msra.mxu0 0
        %1819 = vmatprep.subr.bf16.mxu0 0
        %1820 = vmatpush1.bf16.msra.mxu0 0
        %1821 = vmatprep.subr.bf16.mxu0 0
        %1822 = vmatpush1.bf16.msra.mxu0 0
        %1823 = vmatprep.subr.bf16.mxu0 0
        %1824 = vmatpush1.bf16.msra.mxu0 0
        %1825 = vmatprep.subr.bf16.mxu0 0
        %1826 = vmatpush1.bf16.msra.mxu0 0
        %1827 = vmatprep.subr.bf16.mxu0 0
        %1828 = vmatpush1.bf16.msra.mxu0 0
        %1829 = vmatprep.mubr.bf16.mxu0 0
        %1830 = vmatmul.mubr.bf16.gmra.mrb[0].mxu0 %v1792
        %v1831 = vpop.f32.mrb[0].mxu0
        %v1832 = vadd.f32 0.0, %v1831
        %v1833 = vpop.f32.mrb[0].mxu0
        %v1834 = vpop.f32.mrb[0].mxu0
        %v1835 = vpop.f32.mrb[0].mxu0
        %1836 = vdwg.mxu0
        %1838 = vrot.lane.b32.xlu0 %v1736, 8
        %v1839 = vpop.permute.xlu0 %1838
        %1842 = vrot.lane.b32.xlu0 %v1784, 16
        %v1843 = vpop.permute.xlu0 %1842
        %1846 = vrot.lane.b32.xlu0 %v1832, 24
        %v1847 = vpop.permute.xlu0 %1846
        %v1849 = vsel %vm204, %v1688, %v1839
        %v1850 = vsel %vm281, %v1849, %v1843
        %v1851 = vsel %vm1047, %v1850, %v1847
        %v1852 = vld [vmem:[#allocation4 + $0x70] sm:$0xf]
        %v1853 = vld [vmem:[#allocation4 + $0x74] sm:$0xf]
        %v1854 = vld [vmem:[#allocation4 + $0x78] sm:$0xf]
        %v1855 = vld [vmem:[#allocation4 + $0x7c] sm:$0xf]
        %v1856 = vpack.c.bf16 %v1851, %v1851
        %v1857 = vld [vmem:[#allocation2 + $0x31] sm:$0x1]
        %v1858 = vlaneseq
        %v1859 = vshrl.u32 %v1858, 7
        %v1860 = vsub.s32 0, %v1859
        %v1861 = vrot.slane %v1857, %v1860
        %v1866 = vunpack.c.l.b16 %v1852
        %v1867 = vunpack.c.l.b16 %v1853
        %v1868 = vunpack.c.l.b16 %v1854
        %v1869 = vunpack.c.l.b16 %v1855
        %v1870 = vpack.c.b16 %v1867, %v1866
        %v1871 = vpack.c.b16 %v1869, %v1868
        %v1875 = vsel %vm492, %v1856, 0
        %1877 = vmatprep.subr.bf16.mxu0 0
        %1878 = vmatpush1.bf16.msra.mxu0 %v1870
        %1879 = vmatprep.subr.bf16.mxu0 0
        %1880 = vmatpush1.bf16.msra.mxu0 %v1871
        %1881 = vmatprep.subr.bf16.mxu0 0
        %1882 = vmatpush1.bf16.msra.mxu0 0
        %1883 = vmatprep.subr.bf16.mxu0 0
        %1884 = vmatpush1.bf16.msra.mxu0 0
        %1885 = vmatprep.subr.bf16.mxu0 0
        %1886 = vmatpush1.bf16.msra.mxu0 0
        %1887 = vmatprep.subr.bf16.mxu0 0
        %1888 = vmatpush1.bf16.msra.mxu0 0
        %1889 = vmatprep.subr.bf16.mxu0 0
        %1890 = vmatpush1.bf16.msra.mxu0 0
        %1891 = vmatprep.subr.bf16.mxu0 0
        %1892 = vmatpush1.bf16.msra.mxu0 0
        %1893 = vmatprep.subr.bf16.mxu0 0
        %1894 = vmatpush1.bf16.msra.mxu0 0
        %1895 = vmatprep.subr.bf16.mxu0 0
        %1896 = vmatpush1.bf16.msra.mxu0 0
        %1897 = vmatprep.subr.bf16.mxu0 0
        %1898 = vmatpush1.bf16.msra.mxu0 0
        %1899 = vmatprep.subr.bf16.mxu0 0
        %1900 = vmatpush1.bf16.msra.mxu0 0
        %1901 = vmatprep.subr.bf16.mxu0 0
        %1902 = vmatpush1.bf16.msra.mxu0 0
        %1903 = vmatprep.subr.bf16.mxu0 0
        %1904 = vmatpush1.bf16.msra.mxu0 0
        %1905 = vmatprep.subr.bf16.mxu0 0
        %1906 = vmatpush1.bf16.msra.mxu0 0
        %1907 = vmatprep.subr.bf16.mxu0 0
        %1908 = vmatpush1.bf16.msra.mxu0 0
        %1909 = vmatprep.mubr.bf16.mxu0 0
        %1910 = vmatmul.mubr.bf16.gmra.mrb[0].mxu0 %v1875
        %v1911 = vpop.f32.mrb[0].mxu0
        %v1912 = vadd.f32 %v1861, %v1911
        %v1913 = vpop.f32.mrb[0].mxu0
        %v1914 = vpop.f32.mrb[0].mxu0
        %v1915 = vpop.f32.mrb[0].mxu0
        %1916 = vdwg.mxu0
        %v1917 = vadd.f32 %v1321, %v1912
        %v1918 = vld [vmem:[#allocation2 + $0x32] sm:$0x1]
        %v1919 = vld [vmem:[#allocation2 + $0x33] sm:$0x1]
        %v1920 = vsel %vm492, %v1917, 0.0
        %1921 = vadd.xlane.f32.xlu0 %v1920
        %v1922 = vpop.xlane.xlu0 %1921
        %v1923 = vmul.f32 %v1922, %v496
        %v1924 = vsub.f32 %v1917, %v1923
        %v1925 = vmul.f32 %v1924, %v1924
        %v1926 = vsel %vm492, %v1925, 0.0
        %1927 = vadd.xlane.f32.xlu0 %v1926
        %v1928 = vpop.xlane.xlu0 %1927
        %v1929 = vmul.f32 %v1928, %v496
        %v1930 = vadd.f32 %v1929, 1e-12
        %v1931 = vrsqrt.pop %v1930
        %v1932 = vmul.f32 %v1924, %v1931
        %v1933 = vlaneseq
        %v1934 = vshrl.u32 %v1933, 7
        %v1935 = vsub.s32 0, %v1934
        %v1936 = vrot.slane %v1918, %v1935
        %v1937 = vmul.f32 %v1932, %v1936
        %v1938 = vlaneseq
        %v1939 = vshrl.u32 %v1938, 7
        %v1940 = vsub.s32 0, %v1939
        %v1941 = vrot.slane %v1919, %v1940
        %v1942 = vadd.f32 %v1937, %v1941
        %v1943 = vld [vmem:[#allocation4 + $0x90] sm:$0xf]
        %v1944 = vld [vmem:[#allocation4 + $0x94] sm:$0xf]
        %v1945 = vld [vmem:[#allocation4 + $0x98] sm:$0xf]
        %v1946 = vld [vmem:[#allocation4 + $0x9c] sm:$0xf]
        %v1947 = vld [vmem:[#allocation4 + $0xc0] sm:$0xf]
        %v1948 = vld [vmem:[#allocation4 + $0xc4] sm:$0xf]
        %v1949 = vld [vmem:[#allocation4 + $0xc8] sm:$0xf]
        %v1950 = vld [vmem:[#allocation4 + $0xcc] sm:$0xf]
        %v1951 = vld [vmem:[#allocation4 + $0xd0] sm:$0xf]
        %v1952 = vld [vmem:[#allocation4 + $0xd4] sm:$0xf]
        %v1953 = vld [vmem:[#allocation4 + $0xd8] sm:$0xf]
        %v1954 = vld [vmem:[#allocation4 + $0xdc] sm:$0xf]
        %v1955 = vpack.c.bf16 %v1942, %v1942
        %v1956 = vld [vmem:[#allocation2 + $0x36] sm:$0x1]
        %v1957 = vlaneseq
        %v1958 = vshrl.u32 %v1957, 7
        %v1959 = vsub.s32 0, %v1958
        %v1960 = vrot.slane %v1956, %v1959
        %v1965 = vunpack.c.l.b16 %v1943
        %v1966 = vunpack.c.l.b16 %v1944
        %v1967 = vunpack.c.l.b16 %v1945
        %v1968 = vunpack.c.l.b16 %v1946
        %v1969 = vpack.c.b16 %v1966, %v1965
        %v1970 = vpack.c.b16 %v1968, %v1967
        %v1974 = vsel %vm492, %v1955, 0
        %1976 = vmatprep.subr.bf16.mxu0 0
        %1977 = vmatpush1.bf16.msra.mxu0 %v1969
        %1978 = vmatprep.subr.bf16.mxu0 0
        %1979 = vmatpush1.bf16.msra.mxu0 %v1970
        %1980 = vmatprep.subr.bf16.mxu0 0
        %1981 = vmatpush1.bf16.msra.mxu0 0
        %1982 = vmatprep.subr.bf16.mxu0 0
        %1983 = vmatpush1.bf16.msra.mxu0 0
        %1984 = vmatprep.subr.bf16.mxu0 0
        %1985 = vmatpush1.bf16.msra.mxu0 0
        %1986 = vmatprep.subr.bf16.mxu0 0
        %1987 = vmatpush1.bf16.msra.mxu0 0
        %1988 = vmatprep.subr.bf16.mxu0 0
        %1989 = vmatpush1.bf16.msra.mxu0 0
        %1990 = vmatprep.subr.bf16.mxu0 0
        %1991 = vmatpush1.bf16.msra.mxu0 0
        %1992 = vmatprep.subr.bf16.mxu0 0
        %1993 = vmatpush1.bf16.msra.mxu0 0
        %1994 = vmatprep.subr.bf16.mxu0 0
        %1995 = vmatpush1.bf16.msra.mxu0 0
        %1996 = vmatprep.subr.bf16.mxu0 0
        %1997 = vmatpush1.bf16.msra.mxu0 0
        %1998 = vmatprep.subr.bf16.mxu0 0
        %1999 = vmatpush1.bf16.msra.mxu0 0
        %2000 = vmatprep.subr.bf16.mxu0 0
        %2001 = vmatpush1.bf16.msra.mxu0 0
        %2002 = vmatprep.subr.bf16.mxu0 0
        %2003 = vmatpush1.bf16.msra.mxu0 0
        %2004 = vmatprep.subr.bf16.mxu0 0
        %2005 = vmatpush1.bf16.msra.mxu0 0
        %2006 = vmatprep.subr.bf16.mxu0 0
        %2007 = vmatpush1.bf16.msra.mxu0 0
        %2008 = vmatprep.mubr.bf16.mxu0 0
        %2009 = vmatmul.mubr.bf16.gmra.mrb[0].mxu0 %v1974
        %v2010 = vpop.f32.mrb[0].mxu0
        %v2011 = vadd.f32 %v1960, %v2010
        %v2012 = vpop.f32.mrb[0].mxu0
        %v2013 = vpop.f32.mrb[0].mxu0
        %v2014 = vpop.f32.mrb[0].mxu0
        %2015 = vdwg.mxu0
        %v2016 = vmul.f32 %v2011, %v2011
        %v2017 = vmul.f32 %v2011, %v2016
        %v2018 = vmul.f32 %v2017, 0.044715
        %v2019 = vadd.f32 %v2011, %v2018
        %v2020 = vmul.f32 %v2019, 0.7978846
        %v2021 = vtanh.pop %v2020
        %v2022 = vadd.f32 %v2021, 1.0
        %v2023 = vmul.f32 %v2022, 0.5
        %v2024 = vmul.f32 %v2011, %v2023
        %v2025 = vpack.c.bf16 %v2024, %v2024
        %v2026 = vld [vmem:[#allocation2 + $0x37] sm:$0x1]
        %v2027 = vlaneseq
        %v2028 = vshrl.u32 %v2027, 7
        %v2029 = vsub.s32 0, %v2028
        %v2030 = vrot.slane %v2026, %v2029
        %v2039 = vunpack.c.l.b16 %v1947
        %v2040 = vunpack.c.l.b16 %v1948
        %v2041 = vunpack.c.l.b16 %v1949
        %v2042 = vunpack.c.l.b16 %v1950
        %v2043 = vunpack.c.l.b16 %v1951
        %v2044 = vunpack.c.l.b16 %v1952
        %v2045 = vunpack.c.l.b16 %v1953
        %v2046 = vunpack.c.l.b16 %v1954
        %v2047 = vpack.c.b16 %v2040, %v2039
        %v2048 = vpack.c.b16 %v2042, %v2041
        %v2049 = vpack.c.b16 %v2044, %v2043
        %v2050 = vpack.c.b16 %v2046, %v2045
        %v2056 = vsel %vm1252, %v2025, 0
        %2058 = vmatprep.subr.bf16.mxu0 0
        %2059 = vmatpush1.bf16.msra.mxu0 %v2047
        %2060 = vmatprep.subr.bf16.mxu0 0
        %2061 = vmatpush1.bf16.msra.mxu0 %v2048
        %2062 = vmatprep.subr.bf16.mxu0 0
        %2063 = vmatpush1.bf16.msra.mxu0 %v2049
        %2064 = vmatprep.subr.bf16.mxu0 0
        %2065 = vmatpush1.bf16.msra.mxu0 %v2050
        %2066 = vmatprep.subr.bf16.mxu0 0
        %2067 = vmatpush1.bf16.msra.mxu0 0
        %2068 = vmatprep.subr.bf16.mxu0 0
        %2069 = vmatpush1.bf16.msra.mxu0 0
        %2070 = vmatprep.subr.bf16.mxu0 0
        %2071 = vmatpush1.bf16.msra.mxu0 0
        %2072 = vmatprep.subr.bf16.mxu0 0
        %2073 = vmatpush1.bf16.msra.mxu0 0
        %2074 = vmatprep.subr.bf16.mxu0 0
        %2075 = vmatpush1.bf16.msra.mxu0 0
        %2076 = vmatprep.subr.bf16.mxu0 0
        %2077 = vmatpush1.bf16.msra.mxu0 0
        %2078 = vmatprep.subr.bf16.mxu0 0
        %2079 = vmatpush1.bf16.msra.mxu0 0
        %2080 = vmatprep.subr.bf16.mxu0 0
        %2081 = vmatpush1.bf16.msra.mxu0 0
        %2082 = vmatprep.subr.bf16.mxu0 0
        %2083 = vmatpush1.bf16.msra.mxu0 0
        %2084 = vmatprep.subr.bf16.mxu0 0
        %2085 = vmatpush1.bf16.msra.mxu0 0
        %2086 = vmatprep.subr.bf16.mxu0 0
        %2087 = vmatpush1.bf16.msra.mxu0 0
        %2088 = vmatprep.subr.bf16.mxu0 0
        %2089 = vmatpush1.bf16.msra.mxu0 0
        %2090 = vmatprep.mubr.bf16.mxu0 0
        %2091 = vmatmul.mubr.bf16.gmra.mrb[0].mxu0 %v2056
        %v2092 = vpop.f32.mrb[0].mxu0
        %v2093 = vadd.f32 %v2030, %v2092
        %v2094 = vpop.f32.mrb[0].mxu0
        %v2095 = vpop.f32.mrb[0].mxu0
        %v2096 = vpop.f32.mrb[0].mxu0
        %2097 = vdwg.mxu0
        %v2098 = vadd.f32 %v1942, %v2093
        %v2099 = vld [vmem:[#allocation2 + $0x34] sm:$0x1]
        %v2100 = vld [vmem:[#allocation2 + $0x35] sm:$0x1]
        %v2101 = vsel %vm492, %v2098, 0.0
        %2102 = vadd.xlane.f32.xlu0 %v2101
        %v2103 = vpop.xlane.xlu0 %2102
        %v2104 = vmul.f32 %v2103, %v496
        %v2105 = vsub.f32 %v2098, %v2104
        %v2106 = vmul.f32 %v2105, %v2105
        %v2107 = vsel %vm492, %v2106, 0.0
        %2108 = vadd.xlane.f32.xlu0 %v2107
        %v2109 = vpop.xlane.xlu0 %2108
        %v2110 = vmul.f32 %v2109, %v496
        %v2111 = vadd.f32 %v2110, 1e-12
        %v2112 = vrsqrt.pop %v2111
        %v2113 = vmul.f32 %v2105, %v2112
        %v2114 = vlaneseq
        %v2115 = vshrl.u32 %v2114, 7
        %v2116 = vsub.s32 0, %v2115
        %v2117 = vrot.slane %v2099, %v2116
        %v2118 = vmul.f32 %v2113, %v2117
        %v2119 = vlaneseq
        %v2120 = vshrl.u32 %v2119, 7
        %v2121 = vsub.s32 0, %v2120
        %v2122 = vrot.slane %v2100, %v2121
        %v2123 = vadd.f32 %v2118, %v2122
        %v2124 = vmul.f32 %v2123, %v2123
        %v2125 = vmul.f32 %v2123, %v2124
        %v2126 = vmul.f32 %v2125, 0.044715
        %v2127 = vadd.f32 %v2123, %v2126
        %v2128 = vmul.f32 %v2127, 0.7978846
        %v2129 = vtanh.pop %v2128
        %v2130 = vadd.f32 %v2129, 1.0
        %v2131 = vmul.f32 %v2130, 0.5
        %v2132 = vmul.f32 %v2123, %v2131
        %v2133 = vsel %vm492, %v2132, 0.0
        %2134 = vadd.xlane.f32.xlu0 %v2133
        %v2135 = vpop.xlane.xlu0 %2134
        %v2136 = vrot.slane %v2135, 4
        %v2137 = vadd.f32 %v2135, %v2136
        %v2138 = vrot.slane %v2137, 2
        %v2139 = vadd.f32 %v2137, %v2138
        %v2140 = vrot.slane %v2139, 1
        %v2141 = vadd.f32 %v2139, %v2140
        %v2142 = vmul.f32 %v2141, 0.00390625
        %v2143 = vsub.f32 %v2132, %v2142
        %v2144 = vmul.f32 %v2143, %v2143
        %v2145 = vsel %vm492, %v2144, 0.0
        %2146 = vadd.xlane.f32.xlu0 %v2145
        %v2147 = vpop.xlane.xlu0 %2146
        %v2148 = vrot.slane %v2147, 4
        %v2149 = vadd.f32 %v2147, %v2148
        %v2150 = vrot.slane %v2149, 2
        %v2151 = vadd.f32 %v2149, %v2150
        %v2152 = vrot.slane %v2151, 1
        %v2153 = vadd.f32 %v2151, %v2152
        %v2154 = vmul.f32 %v2153, 0.00390625
        %v2155 = vadd.f32 %v2154, 1e-05
        %v2156 = vrsqrt.pop %v2155
        %v2157 = vmul.f32 %v2143, %v2156
        %v2158 = vld [vmem:[#allocation2 + $0x10] sm:$0xff]
        %v2159 = vmul.f32 %v2157, %v2158
        %v2160 = vld [vmem:[#allocation2 + $0x18] sm:$0xff]
        %v2161 = vadd.f32 %v2159, %v2160
        %v2162 = vld [vmem:[#allocation4 + $0xe0] sm:$0xf]
        %v2163 = vld [vmem:[#allocation4 + $0xe4] sm:$0xf]
        %v2164 = vld [vmem:[#allocation4 + $0xe8] sm:$0xf]
        %v2165 = vld [vmem:[#allocation4 + $0xec] sm:$0xf]
        %v2166 = vpack.c.bf16 %v2161, %v2161
        %v2171 = vunpack.c.l.b16 %v2162
        %v2172 = vunpack.c.l.b16 %v2163
        %v2173 = vunpack.c.l.b16 %v2164
        %v2174 = vunpack.c.l.b16 %v2165
        %v2175 = vpack.c.b16 %v2172, %v2171
        %v2176 = vpack.c.b16 %v2174, %v2173
        %v2180 = vsel %vm492, %v2166, 0
        %2182 = vmatprep.subr.bf16.mxu0 0
        %2183 = vmatpush1.bf16.msra.mxu0 %v2175
        %2184 = vmatprep.subr.bf16.mxu0 0
        %2185 = vmatpush1.bf16.msra.mxu0 %v2176
        %2186 = vmatprep.subr.bf16.mxu0 0
        %2187 = vmatpush1.bf16.msra.mxu0 0
        %2188 = vmatprep.subr.bf16.mxu0 0
        %2189 = vmatpush1.bf16.msra.mxu0 0
        %2190 = vmatprep.subr.bf16.mxu0 0
        %2191 = vmatpush1.bf16.msra.mxu0 0
        %2192 = vmatprep.subr.bf16.mxu0 0
        %2193 = vmatpush1.bf16.msra.mxu0 0
        %2194 = vmatprep.subr.bf16.mxu0 0
        %2195 = vmatpush1.bf16.msra.mxu0 0
        %2196 = vmatprep.subr.bf16.mxu0 0
        %2197 = vmatpush1.bf16.msra.mxu0 0
        %2198 = vmatprep.subr.bf16.mxu0 0
        %2199 = vmatpush1.bf16.msra.mxu0 0
        %2200 = vmatprep.subr.bf16.mxu0 0
        %2201 = vmatpush1.bf16.msra.mxu0 0
        %2202 = vmatprep.subr.bf16.mxu0 0
        %2203 = vmatpush1.bf16.msra.mxu0 0
        %2204 = vmatprep.subr.bf16.mxu0 0
        %2205 = vmatpush1.bf16.msra.mxu0 0
        %2206 = vmatprep.subr.bf16.mxu0 0
        %2207 = vmatpush1.bf16.msra.mxu0 0
        %2208 = vmatprep.subr.bf16.mxu0 0
        %2209 = vmatpush1.bf16.msra.mxu0 0
        %2210 = vmatprep.subr.bf16.mxu0 0
        %2211 = vmatpush1.bf16.msra.mxu0 0
        %2212 = vmatprep.subr.bf16.mxu0 0
        %2213 = vmatpush1.bf16.msra.mxu0 0
        %2214 = vmatprep.mubr.bf16.mxu0 0
        %2215 = vmatmul.mubr.bf16.gmra.mrb[0].mxu0 %v2180
        %v2216 = vpop.f32.mrb[0].mxu0
        %v2217 = vadd.f32 0.0, %v2216
        %v2218 = vpop.f32.mrb[0].mxu0
        %v2219 = vpop.f32.mrb[0].mxu0
        %v2220 = vpop.f32.mrb[0].mxu0
        %2221 = vdwg.mxu0
        %v2222 = vld [vmem:[#allocation2 + $0x38] sm:$0xff]
        %v2223 = vld [vmem:[#allocation2 + $0x40] sm:$0xff]
        %v2224 = vld [vmem:[#allocation2 + $0x48] sm:$0xff]
        %v2225 = vld [vmem:[#allocation2 + $0x50] sm:$0xff]
        %v2226 = vld [vmem:[#allocation2 + $0x58] sm:$0xff]
        %v2227 = vld [vmem:[#allocation2 + $0x60] sm:$0xff]
        %v2228 = vld [vmem:[#allocation2 + $0x68] sm:$0xff]
        %v2229 = vmul.f32 %v2217, %v2222
        %vm2230 = vcmask 392192
        %v2232 = vsel %vm2230, %v2229, 0
        %2234 = vmatprep.subr.mxu0 0.0
        %2235 = vmatpush1.msra.mxu0 %v2223
        %2236 = vmatprep.subr.mxu0 0.0
        %2237 = vmatpush1.msra.mxu0 %v2224
        %2238 = vmatprep.subr.mxu0 0.0
        %2239 = vmatpush1.msra.mxu0 %v2225
        %2240 = vmatprep.subr.mxu0 0.0
        %2241 = vmatpush1.msra.mxu0 %v2226
        %2242 = vmatprep.subr.mxu0 0.0
        %2243 = vmatpush1.msra.mxu0 %v2227
        %2244 = vmatprep.subr.mxu0 0.0
        %2245 = vmatpush1.msra.mxu0 %v2228
        %2246 = vmatprep.subr.mxu0 0.0
        %2247 = vmatpush1.msra.mxu0 0.0
        %2248 = vmatprep.subr.mxu0 0.0
        %2249 = vmatpush1.msra.mxu0 0.0
        %2250 = vmatprep.subr.mxu0 0.0
        %2251 = vmatpush1.msra.mxu0 0.0
        %2252 = vmatprep.subr.mxu0 0.0
        %2253 = vmatpush1.msra.mxu0 0.0
        %2254 = vmatprep.subr.mxu0 0.0
        %2255 = vmatpush1.msra.mxu0 0.0
        %2256 = vmatprep.subr.mxu0 0.0
        %2257 = vmatpush1.msra.mxu0 0.0
        %2258 = vmatprep.subr.mxu0 0.0
        %2259 = vmatpush1.msra.mxu0 0.0
        %2260 = vmatprep.subr.mxu0 0.0
        %2261 = vmatpush1.msra.mxu0 0.0
        %2262 = vmatprep.subr.mxu0 0.0
        %2263 = vmatpush1.msra.mxu0 0.0
        %2264 = vmatprep.subr.mxu0 0.0
        %2265 = vmatpush1.msra.mxu0 0.0
        %2266 = vmatprep.subr.mxu0 0.0
        %2267 = vmatpush1.msra.mxu0 0.0
        %2268 = vmatprep.subr.mxu0 0.0
        %2269 = vmatpush1.msra.mxu0 0.0
        %2270 = vmatprep.subr.mxu0 0.0
        %2271 = vmatpush1.msra.mxu0 0.0
        %2272 = vmatprep.subr.mxu0 0.0
        %2273 = vmatpush1.msra.mxu0 0.0
        %2274 = vmatprep.subr.mxu0 0.0
        %2275 = vmatpush1.msra.mxu0 0.0
        %2276 = vmatprep.subr.mxu0 0.0
        %2277 = vmatpush1.msra.mxu0 0.0
        %2278 = vmatprep.subr.mxu0 0.0
        %2279 = vmatpush1.msra.mxu0 0.0
        %2280 = vmatprep.subr.mxu0 0.0
        %2281 = vmatpush1.msra.mxu0 0.0
        %2282 = vmatprep.subr.mxu0 0.0
        %2283 = vmatpush1.msra.mxu0 0.0
        %2284 = vmatprep.subr.mxu0 0.0
        %2285 = vmatpush1.msra.mxu0 0.0
        %2286 = vmatprep.subr.mxu0 0.0
        %2287 = vmatpush1.msra.mxu0 0.0
        %2288 = vmatprep.subr.mxu0 0.0
        %2289 = vmatpush1.msra.mxu0 0.0
        %2290 = vmatprep.subr.mxu0 0.0
        %2291 = vmatpush1.msra.mxu0 0.0
        %2292 = vmatprep.subr.mxu0 0.0
        %2293 = vmatpush1.msra.mxu0 0.0
        %2294 = vmatprep.subr.mxu0 0.0
        %2295 = vmatpush1.msra.mxu0 0.0
        %2296 = vmatprep.subr.mxu0 0.0
        %2297 = vmatpush1.msra.mxu0 0.0
        %2298 = vmatprep.mubr.f32.mxu0 0.0
        %2299 = vmatmul.mubr.f32.gmra.mrb[0].mxu0 %v2232
        %v2300 = vpop.f32.mrb[0].mxu0
        %v2301 = vadd.f32 0.0, %v2300
        %v2302 = vpop.f32.mrb[0].mxu0
        %2303 = vdwg.mxu0
        %vm2304 = vcmask 48128
        %v2305 = vsel %vm2304, %v2301, 0.0
        %v2306 = vrot.slane %v2305, 4
        %v2307 = vadd.f32 %v2305, %v2306
        %v2308 = vrot.slane %v2307, 2
        %v2309 = vadd.f32 %v2307, %v2308
        %v2310 = vrot.slane %v2309, 1
        %v2311 = vadd.f32 %v2309, %v2310
        %v2312 = vld [vmem:[#allocation2 + $0x20] sm:$0x1]
        %v2313 = vadd.f32 %v2311, %v2312
        %v2314 = vlaneseq
        %v2315 = vshrl.u32 %v2314, 7
        %v2316 = vsub.s32 0, %v2315
        %v2317 = vrot.slane %v2313, %v2316
        %2318 = vst.msk [vmem:[%s195] sm:$0xff] %vm2304, %v2317
        %p2319 = scmp.lt.s32.totalorder %s16, 1
        %s2320 = scalar_select %p2319, %s16, 1
        %s2321 = smul.addr %s2320, 8
        %s2322 = scalar_lea.vmem %s3, %s2321
        // Predicated region
        $region41: #{bert4ts_forward.1} parent=31 // pred_check
          %p2323 = pneg %p102
        $region42: #{bert4ts_forward.1} parent=31 // pred_check_branch
          %2325 = sbr.rel (%p2323) target = $region44
        $region43: #{bert4ts_forward.1} parent=31 // pred_region
          _
        $region44: #{bert4ts_forward.1} parent=31 // pred_fallthru
          _
      $region32: #{bert4ts_forward.1} parent=5 // pred_fallthru
        _
      %p2326 = scmp.le.s32.totalorder 2, %s11
      // Predicated region
      $region45: #{bert4ts_forward.1} parent=5 // pred_check
        %p2327 = pneg %p2326
      $region46: #{bert4ts_forward.1} parent=5 // pred_check_branch
        %2329 = sbr.rel (%p2327) target = $region48
      $region47: #{bert4ts_forward.1} parent=5 // pred_region
        %s2330 = ssub.s32 %s11, 2
        // Predicated region
        $region49: #{bert4ts_forward.1} parent=47 // pred_check
          %p2331 = pneg %p108
        $region50: #{bert4ts_forward.1} parent=47 // pred_check_branch
          %2333 = sbr.rel (%p2331) target = $region52
        $region51: #{bert4ts_forward.1} parent=47 // pred_region
          %p2334 = scmp.lt.s32.totalorder %s17, 1
          %s2335 = scalar_select %p2334, %s17, 1
          %s2336 = smul.addr %s2335, 8
          %s2337 = scalar_lea.vmem %s3, %s2336
        $region52: #{bert4ts_forward.1} parent=47 // pred_fallthru
          _
      $region48: #{bert4ts_forward.1} parent=5 // pred_fallthru
        _
    $region6: #{bert4ts_forward.1} parent=1 // loop_footer
      %s15 = sadd.s32 1, %s11
    $region7: #{bert4ts_forward.1} parent=1 // loop_footer_branch
      %10 = sbr.rel target = $region3
    $region8: #{bert4ts_forward.1} parent=1 // loop_exit
      _
    %2338 = vsyncpa [#allocation3], 1
    %s2339 = scalar_lea.sflag [#allocation3], 1
    %2340 = vsyncpa %s2339, 1
    %2341 = vsyncpa [#allocation5], 1

</llo_original>
